<compile_context>
chip_gen: v5e
topology: v5e:2x2
jax: 0.10.0
libtpu: 0.0.40
codegen_flags: <defaults>
</compile_context>

<pallas_src>
import numpy as np

import jax
import jax.numpy as jnp
from jax.experimental import pallas as pl
from jax.experimental.pallas import tpu as pltpu


_NEG_SLOPE = 0.2
_BN_EPS = 1e-5
_TAPS = 16                                   # 4x4 kernels for all three convs
_VMEM = pl.BlockSpec(memory_space=pltpu.MemorySpace.VMEM)


# ----------------------------------------------------------------------------
# In-kernel helpers (pure jnp on VMEM-resident values)
# ----------------------------------------------------------------------------
def _lrelu(y):
    # LeakyReLU(0.2) as a single max (valid because slope < 1).
    return jnp.maximum(y, _NEG_SLOPE * y)


def _bn(y, gamma, beta):
    # Train-mode BatchNorm2d: per-channel batch stats over all N*H*W rows,
    # two-pass (centered) variance, biased, eps=1e-5.
    mean = jnp.mean(y, axis=0, keepdims=True)
    var = jnp.mean(jnp.square(y - mean), axis=0, keepdims=True)
    return (y - mean) * jax.lax.rsqrt(var + _BN_EPS) * gamma + beta


def _make_kernel(batch, conv_dims):
    """conv_dims: ((rin, rout, cin) per conv layer), spatial row counts per image."""
    (rin1, rout1, cin1), (rin2, rout2, cin2), (rin3, rout3, cin3) = conv_dims

    def gather_to_patches(s_ref, get_image, patch_scr, rout, cin):
        # One stacked gather matmul per image (rows tap-major: k*rout + p),
        # then the 16 per-tap slabs are laid side-by-side along the lane axis
        # -> patch_scr becomes the im2col matrix (batch*rout, 16*cin).
        for nb in range(batch):
            g = jnp.dot(s_ref[...], get_image(nb),
                        preferred_element_type=jnp.float32)       # (16*rout, cin)
            for k in range(_TAPS):
                patch_scr[nb * rout:(nb + 1) * rout,
                          k * cin:(k + 1) * cin] = g[k * rout:(k + 1) * rout, :]

    def kernel(x_ref, s1_ref, w1_ref, b1_ref,
               s2_ref, w2_ref, bn2_ref,
               s3_ref, w3_ref, bn3_ref,
               wc_ref, pool_ref, bc_ref,
               o_ref, p1_scr, p2_scr, p3_scr):
        # --- conv1 (3->32, k4 s2 p1) + LeakyReLU -----------------------------
        gather_to_patches(s1_ref,
                          lambda nb: x_ref[nb * rin1:(nb + 1) * rin1, :],
                          p1_scr, rout1, cin1)
        y1 = jnp.dot(p1_scr[...], w1_ref[...],
                     preferred_element_type=jnp.float32) + b1_ref[...]
        x1 = _lrelu(y1)                                          # (N*64, 32)

        # --- conv2 (32->64) + BN + LeakyReLU (conv bias absorbed by BN) ------
        gather_to_patches(s2_ref,
                          lambda nb: x1[nb * rin2:(nb + 1) * rin2, :],
                          p2_scr, rout2, cin2)
        y2 = jnp.dot(p2_scr[...], w2_ref[...], preferred_element_type=jnp.float32)
        x2 = _lrelu(_bn(y2, bn2_ref[0:1, :], bn2_ref[1:2, :]))   # (N*16, 64)

        # --- conv3 (64->128) + BN + LeakyReLU --------------------------------
        gather_to_patches(s3_ref,
                          lambda nb: x2[nb * rin3:(nb + 1) * rin3, :],
                          p3_scr, rout3, cin3)
        y3 = jnp.dot(p3_scr[...], w3_ref[...], preferred_element_type=jnp.float32)
        x3 = _lrelu(_bn(y3, bn3_ref[0:1, :], bn3_ref[1:2, :]))   # (N*4, 128)

        # --- classifier Conv2d(128,1,3,p=1) + AdaptiveAvgPool2d(1), folded ---
        # wc_ref is the batch-tiled per-position effective weight (includes the
        # 1/(h3*w3) pooling factor); pool_ref sums each image's row block.
        prod = x3 * wc_ref[...]                                  # (N*4, 128)
        pooled = jnp.dot(pool_ref[...], prod,
                         preferred_element_type=jnp.float32)     # (N, 128)
        o_ref[...] = jnp.sum(pooled, axis=1, keepdims=True) + bc_ref[...]

    return kernel


# ----------------------------------------------------------------------------
# Host-side, one-time parameter preparation (outside jit)
# ----------------------------------------------------------------------------
def gather_matrix(h, w, kh, kw, stride, pad):
    """Per-image stacked 0/1 row-selection matrix (kh*kw*ho*wo, h*w).

    Row k*ho*wo + (oh*wo + ow) selects input row (stride*oh+i-pad)*w +
    (stride*ow+j-pad) for tap k = i*kw + j; out-of-range taps are all-zero
    rows (the conv's zero padding).  Batch-independent: O(1) in N.
    """
    ho = (h + 2 * pad - kh) // stride + 1
    wo = (w + 2 * pad - kw) // stride + 1
    rout = ho * wo
    s = np.zeros((kh * kw * rout, h * w), np.float32)
    for i in range(kh):
        for j in range(kw):
            k = i * kw + j
            for oh in range(ho):
                for ow in range(wo):
                    ih = stride * oh + i - pad
                    iw = stride * ow + j - pad
                    if 0 <= ih < h and 0 <= iw < w:
                        s[k * rout + oh * wo + ow, ih * w + iw] = 1.0
    return jnp.asarray(s)


def torch_weight_to_mat(wt):
    """(Cout, Cin, KH, KW) -> (KH*KW*Cin, Cout); row = (i*KW + j)*Cin + c."""
    return jnp.transpose(wt, (2, 3, 1, 0)).reshape(-1, wt.shape[0])


def classifier_eff_weight(wc, h3, w3):
    """Fold Conv2d(C,1,3,p=1) + AdaptiveAvgPool2d(1) into one (h3*w3, C) weight.

    out_n = sum_{p,c} x3_n[p, c] * weff[p, c] + bc   (exact, both ops linear).
    """
    wc_np = np.asarray(wc)                       # (1, C, 3, 3)
    c = wc_np.shape[1]
    weff = np.zeros((h3 * w3, c), np.float32)
    for ph in range(h3):
        for pw in range(w3):
            for i in range(3):
                for j in range(3):
                    oh, ow = ph - (i - 1), pw - (j - 1)
                    if 0 <= oh < h3 and 0 <= ow < w3:
                        weff[ph * w3 + pw, :] += wc_np[0, :, i, j]
    return weff / float(h3 * w3)


def init_params(key):
    ks = jax.random.split(key, 12)

    def w(k, shape, s=0.05):
        return jax.random.normal(k, shape, jnp.float32) * s

    return {
        "w1": w(ks[0], (32, 3, 4, 4)),     "b1": w(ks[1], (32,), 0.01),
        "w2": w(ks[2], (64, 32, 4, 4)),    "b2": w(ks[3], (64,), 0.01),
        "g2": 1.0 + w(ks[4], (64,), 0.1),  "be2": w(ks[5], (64,), 0.05),
        "w3": w(ks[6], (128, 64, 4, 4)),   "b3": w(ks[7], (128,), 0.01),
        "g3": 1.0 + w(ks[8], (128,), 0.1), "be3": w(ks[9], (128,), 0.05),
        "wc": w(ks[10], (1, 128, 3, 3)),   "bc": w(ks[11], (1,), 0.01),
    }


def prepare_params(params, n, h, w):
    """Weight re-layout, BN packing, gather / pooled-classifier matrices.

    Only `wc` (tiled effective classifier weight) and `pool` depend on the
    batch size (both O(N)); the gather matrices are batch-independent.
    """
    h1, w1 = h // 2, w // 2            # after conv1 (k4 s2 p1, even H/W)
    h2, w2 = h1 // 2, w1 // 2          # after conv2
    h3, w3 = h2 // 2, w2 // 2          # after conv3

    weff = classifier_eff_weight(params["wc"], h3, w3)       # (h3*w3, 128)
    pool = np.zeros((n, n * h3 * w3), np.float32)
    for b in range(n):
        pool[b, b * h3 * w3:(b + 1) * h3 * w3] = 1.0

    return {
        "s1": gather_matrix(h, w, 4, 4, 2, 1),               # (16*h1*w1, h*w)
        "w1": torch_weight_to_mat(params["w1"]),             # (48, 32)
        "b1": params["b1"].reshape(1, -1),
        "s2": gather_matrix(h1, w1, 4, 4, 2, 1),             # (16*h2*w2, h1*w1)
        "w2": torch_weight_to_mat(params["w2"]),             # (512, 64)
        "bn2": jnp.stack([params["g2"], params["be2"]]),     # (2, 64)
        "s3": gather_matrix(h2, w2, 4, 4, 2, 1),             # (16*h3*w3, h2*w2)
        "w3": torch_weight_to_mat(params["w3"]),             # (1024, 128)
        "bn3": jnp.stack([params["g3"], params["be3"]]),     # (2, 128)
        "wc": jnp.asarray(np.tile(weff, (n, 1))),            # (n*h3*w3, 128)
        "pool": jnp.asarray(pool),                           # (n, n*h3*w3)
        "bc": params["bc"].reshape(1, 1),
    }


@jax.jit
def st_discriminator_forward(x_nchw, prep):
    n, c, h, w = x_nchw.shape
    # prep is baked for a specific batch size / spatial size (trace-time check).
    assert prep["s1"].shape[1] == h * w, "prep built for a different input size"
    assert prep["pool"].shape[0] == n, "prep built for a different batch size"

    h1, w1 = h // 2, w // 2
    h2, w2 = h1 // 2, w1 // 2
    h3, w3 = h2 // 2, w2 // 2

    # Single tiny wrapper op: NCHW -> row-major (n, h, w) rows, channels minor.
    x_rows = jnp.transpose(x_nchw, (0, 2, 3, 1)).astype(jnp.float32)
    x_rows = x_rows.reshape(n * h * w, c)

    conv_dims = ((h * w, h1 * w1, c),
                 (h1 * w1, h2 * w2, 32),
                 (h2 * w2, h3 * w3, 64))
    kernel = _make_kernel(n, conv_dims)

    return pl.pallas_call(
        kernel,
        out_shape=jax.ShapeDtypeStruct((n, 1), jnp.float32),
        in_specs=[_VMEM] * 13,
        out_specs=_VMEM,
        scratch_shapes=[
            pltpu.VMEM((n * h1 * w1, _TAPS * c), jnp.float32),    # conv1 patches
            pltpu.VMEM((n * h2 * w2, _TAPS * 32), jnp.float32),   # conv2 patches
            pltpu.VMEM((n * h3 * w3, _TAPS * 64), jnp.float32),   # conv3 patches
        ],
    )(x_rows, prep["s1"], prep["w1"], prep["b1"],
      prep["s2"], prep["w2"], prep["bn2"],
      prep["s3"], prep["w3"], prep["bn3"],
      prep["wc"], prep["pool"], prep["bc"])


# ----------------------------------------------------------------------------
# Plain-JAX reference (independent path via lax.conv) for a correctness check
# ----------------------------------------------------------------------------
def _reference_forward(x_nchw, params):
    hi = jax.lax.Precision.HIGHEST

    def conv(x, w, b, stride, pad):
        y = jax.lax.conv_general_dilated(
            x, w, (stride, stride), ((pad, pad), (pad, pad)),
            dimension_numbers=("NCHW", "OIHW", "NCHW"), precision=hi)
        return y + b.reshape(1, -1, 1, 1)

    def bn(y, g, be):
        mean = jnp.mean(y, axis=(0, 2, 3), keepdims=True)
        var = jnp.mean(jnp.square(y - mean), axis=(0, 2, 3), keepdims=True)
        yhat = (y - mean) * jax.lax.rsqrt(var + _BN_EPS)
        return yhat * g.reshape(1, -1, 1, 1) + be.reshape(1, -1, 1, 1)

    lrelu = lambda t: jnp.where(t >= 0, t, _NEG_SLOPE * t)

    h = lrelu(conv(x_nchw, params["w1"], params["b1"], 2, 1))
    h = lrelu(bn(conv(h, params["w2"], params["b2"], 2, 1),
                 params["g2"], params["be2"]))
    h = lrelu(bn(conv(h, params["w3"], params["b3"], 2, 1),
                 params["g3"], params["be3"]))
    h = conv(h, params["wc"], params["bc"], 1, 1)
    return jnp.mean(h, axis=(2, 3)).reshape(-1, 1)


if __name__ == "__main__":
    key = jax.random.PRNGKey(0)
    k_x, k_p = jax.random.split(key)
    # small shape consistent with the module: NCHW, 3 channels, 16x16 spatial
    x = jax.random.normal(k_x, (2, 3, 16, 16), jnp.float32)
    params = init_params(k_p)
    prep = prepare_params(params, n=2, h=16, w=16)

    out = jax.block_until_ready(st_discriminator_forward(x, prep))
    assert out.shape == (2, 1), out.shape
    assert bool(jnp.all(jnp.isfinite(out)))

    ref = jax.block_until_ready(jax.jit(_reference_forward)(x, params))
    err = float(jnp.max(jnp.abs(out - ref)))
    assert err < 2e-2, f"kernel vs reference mismatch: max |diff| = {err}"

    print("KERNEL_OK")
</pallas_src>

<mosaic_0001>
module attributes {stable_mosaic.version = 11 : i64} {
  func.func @kernel(%arg0: memref<512x3xf32, #tpu.memory_space<vmem>>, %arg1: memref<1024x256xf32, #tpu.memory_space<vmem>>, %arg2: memref<48x32xf32, #tpu.memory_space<vmem>>, %arg3: memref<1x32xf32, #tpu.memory_space<vmem>>, %arg4: memref<256x64xf32, #tpu.memory_space<vmem>>, %arg5: memref<512x64xf32, #tpu.memory_space<vmem>>, %arg6: memref<2x64xf32, #tpu.memory_space<vmem>>, %arg7: memref<64x16xf32, #tpu.memory_space<vmem>>, %arg8: memref<1024x128xf32, #tpu.memory_space<vmem>>, %arg9: memref<2x128xf32, #tpu.memory_space<vmem>>, %arg10: memref<8x128xf32, #tpu.memory_space<vmem>>, %arg11: memref<2x8xf32, #tpu.memory_space<vmem>>, %arg12: memref<1x1xf32, #tpu.memory_space<vmem>>, %arg13: memref<2x1xf32, #tpu.memory_space<vmem>>, %arg14: memref<128x48xf32, #tpu.memory_space<vmem>>, %arg15: memref<32x512xf32, #tpu.memory_space<vmem>>, %arg16: memref<8x1024xf32, #tpu.memory_space<vmem>>) attributes {dimension_semantics = [], scalar_prefetch = 0 : i64, scratch_operands = 3 : i64, tpu.core_type = #tpu.core_type<tc>} {
    %c0 = arith.constant 0 : index
    %c0_0 = arith.constant 0 : index
    %0 = vector.load %arg1[%c0, %c0_0] : memref<1024x256xf32, #tpu.memory_space<vmem>>, vector<1024x256xf32>
    %c0_1 = arith.constant 0 : index
    %c0_2 = arith.constant 0 : index
    %1 = vector.load %arg0[%c0_1, %c0_2] : memref<512x3xf32, #tpu.memory_space<vmem>>, vector<256x3xf32>
    %cst = arith.constant dense<0.000000e+00> : vector<1024x3xf32>
    %2 = tpu.matmul %0, %1, %cst {dimension_numbers = #tpu.dot_dimension_numbers<[1], [0], [0], [1], [0, 0, 1, 1], [], []>} : vector<1024x256xf32>, vector<256x3xf32>, vector<1024x3xf32> -> vector<1024x3xf32>
    %3 = vector.extract_strided_slice %2 {offsets = [0, 0], sizes = [64, 3], strides = [1, 1]} : vector<1024x3xf32> to vector<64x3xf32>
    %c0_3 = arith.constant 0 : index
    %c0_4 = arith.constant 0 : index
    %4 = vector.load %arg14[%c0_3, %c0_4] : memref<128x48xf32, #tpu.memory_space<vmem>>, vector<64x3xf32>
    tpu.vector_store %arg14[%c0_3, %c0_4], %3 {strides = array<i32>} : memref<128x48xf32, #tpu.memory_space<vmem>>, vector<64x3xf32>,
    %5 = vector.extract_strided_slice %2 {offsets = [64, 0], sizes = [64, 3], strides = [1, 1]} : vector<1024x3xf32> to vector<64x3xf32>
    %c0_5 = arith.constant 0 : index
    %c3 = arith.constant 3 : index
    %6 = vector.load %arg14[%c0_5, %c3] : memref<128x48xf32, #tpu.memory_space<vmem>>, vector<64x3xf32>
    tpu.vector_store %arg14[%c0_5, %c3], %5 {strides = array<i32>} : memref<128x48xf32, #tpu.memory_space<vmem>>, vector<64x3xf32>,
    %7 = vector.extract_strided_slice %2 {offsets = [128, 0], sizes = [64, 3], strides = [1, 1]} : vector<1024x3xf32> to vector<64x3xf32>
    %c0_6 = arith.constant 0 : index
    %c6 = arith.constant 6 : index
    %8 = vector.load %arg14[%c0_6, %c6] : memref<128x48xf32, #tpu.memory_space<vmem>>, vector<64x3xf32>
    tpu.vector_store %arg14[%c0_6, %c6], %7 {strides = array<i32>} : memref<128x48xf32, #tpu.memory_space<vmem>>, vector<64x3xf32>,
    %9 = vector.extract_strided_slice %2 {offsets = [192, 0], sizes = [64, 3], strides = [1, 1]} : vector<1024x3xf32> to vector<64x3xf32>
    %c0_7 = arith.constant 0 : index
    %c9 = arith.constant 9 : index
    %10 = vector.load %arg14[%c0_7, %c9] : memref<128x48xf32, #tpu.memory_space<vmem>>, vector<64x3xf32>
    tpu.vector_store %arg14[%c0_7, %c9], %9 {strides = array<i32>} : memref<128x48xf32, #tpu.memory_space<vmem>>, vector<64x3xf32>,
    %11 = vector.extract_strided_slice %2 {offsets = [256, 0], sizes = [64, 3], strides = [1, 1]} : vector<1024x3xf32> to vector<64x3xf32>
    %c0_8 = arith.constant 0 : index
    %c12 = arith.constant 12 : index
    %12 = vector.load %arg14[%c0_8, %c12] : memref<128x48xf32, #tpu.memory_space<vmem>>, vector<64x3xf32>
    tpu.vector_store %arg14[%c0_8, %c12], %11 {strides = array<i32>} : memref<128x48xf32, #tpu.memory_space<vmem>>, vector<64x3xf32>,
    %13 = vector.extract_strided_slice %2 {offsets = [320, 0], sizes = [64, 3], strides = [1, 1]} : vector<1024x3xf32> to vector<64x3xf32>
    %c0_9 = arith.constant 0 : index
    %c15 = arith.constant 15 : index
    %14 = vector.load %arg14[%c0_9, %c15] : memref<128x48xf32, #tpu.memory_space<vmem>>, vector<64x3xf32>
    tpu.vector_store %arg14[%c0_9, %c15], %13 {strides = array<i32>} : memref<128x48xf32, #tpu.memory_space<vmem>>, vector<64x3xf32>,
    %15 = vector.extract_strided_slice %2 {offsets = [384, 0], sizes = [64, 3], strides = [1, 1]} : vector<1024x3xf32> to vector<64x3xf32>
    %c0_10 = arith.constant 0 : index
    %c18 = arith.constant 18 : index
    %16 = vector.load %arg14[%c0_10, %c18] : memref<128x48xf32, #tpu.memory_space<vmem>>, vector<64x3xf32>
    tpu.vector_store %arg14[%c0_10, %c18], %15 {strides = array<i32>} : memref<128x48xf32, #tpu.memory_space<vmem>>, vector<64x3xf32>,
    %17 = vector.extract_strided_slice %2 {offsets = [448, 0], sizes = [64, 3], strides = [1, 1]} : vector<1024x3xf32> to vector<64x3xf32>
    %c0_11 = arith.constant 0 : index
    %c21 = arith.constant 21 : index
    %18 = vector.load %arg14[%c0_11, %c21] : memref<128x48xf32, #tpu.memory_space<vmem>>, vector<64x3xf32>
    tpu.vector_store %arg14[%c0_11, %c21], %17 {strides = array<i32>} : memref<128x48xf32, #tpu.memory_space<vmem>>, vector<64x3xf32>,
    %19 = vector.extract_strided_slice %2 {offsets = [512, 0], sizes = [64, 3], strides = [1, 1]} : vector<1024x3xf32> to vector<64x3xf32>
    %c0_12 = arith.constant 0 : index
    %c24 = arith.constant 24 : index
    %20 = vector.load %arg14[%c0_12, %c24] : memref<128x48xf32, #tpu.memory_space<vmem>>, vector<64x3xf32>
    tpu.vector_store %arg14[%c0_12, %c24], %19 {strides = array<i32>} : memref<128x48xf32, #tpu.memory_space<vmem>>, vector<64x3xf32>,
    %21 = vector.extract_strided_slice %2 {offsets = [576, 0], sizes = [64, 3], strides = [1, 1]} : vector<1024x3xf32> to vector<64x3xf32>
    %c0_13 = arith.constant 0 : index
    %c27 = arith.constant 27 : index
    %22 = vector.load %arg14[%c0_13, %c27] : memref<128x48xf32, #tpu.memory_space<vmem>>, vector<64x3xf32>
    tpu.vector_store %arg14[%c0_13, %c27], %21 {strides = array<i32>} : memref<128x48xf32, #tpu.memory_space<vmem>>, vector<64x3xf32>,
    %23 = vector.extract_strided_slice %2 {offsets = [640, 0], sizes = [64, 3], strides = [1, 1]} : vector<1024x3xf32> to vector<64x3xf32>
    %c0_14 = arith.constant 0 : index
    %c30 = arith.constant 30 : index
    %24 = vector.load %arg14[%c0_14, %c30] : memref<128x48xf32, #tpu.memory_space<vmem>>, vector<64x3xf32>
    tpu.vector_store %arg14[%c0_14, %c30], %23 {strides = array<i32>} : memref<128x48xf32, #tpu.memory_space<vmem>>, vector<64x3xf32>,
    %25 = vector.extract_strided_slice %2 {offsets = [704, 0], sizes = [64, 3], strides = [1, 1]} : vector<1024x3xf32> to vector<64x3xf32>
    %c0_15 = arith.constant 0 : index
    %c33 = arith.constant 33 : index
    %26 = vector.load %arg14[%c0_15, %c33] : memref<128x48xf32, #tpu.memory_space<vmem>>, vector<64x3xf32>
    tpu.vector_store %arg14[%c0_15, %c33], %25 {strides = array<i32>} : memref<128x48xf32, #tpu.memory_space<vmem>>, vector<64x3xf32>,
    %27 = vector.extract_strided_slice %2 {offsets = [768, 0], sizes = [64, 3], strides = [1, 1]} : vector<1024x3xf32> to vector<64x3xf32>
    %c0_16 = arith.constant 0 : index
    %c36 = arith.constant 36 : index
    %28 = vector.load %arg14[%c0_16, %c36] : memref<128x48xf32, #tpu.memory_space<vmem>>, vector<64x3xf32>
    tpu.vector_store %arg14[%c0_16, %c36], %27 {strides = array<i32>} : memref<128x48xf32, #tpu.memory_space<vmem>>, vector<64x3xf32>,
    %29 = vector.extract_strided_slice %2 {offsets = [832, 0], sizes = [64, 3], strides = [1, 1]} : vector<1024x3xf32> to vector<64x3xf32>
    %c0_17 = arith.constant 0 : index
    %c39 = arith.constant 39 : index
    %30 = vector.load %arg14[%c0_17, %c39] : memref<128x48xf32, #tpu.memory_space<vmem>>, vector<64x3xf32>
    tpu.vector_store %arg14[%c0_17, %c39], %29 {strides = array<i32>} : memref<128x48xf32, #tpu.memory_space<vmem>>, vector<64x3xf32>,
    %31 = vector.extract_strided_slice %2 {offsets = [896, 0], sizes = [64, 3], strides = [1, 1]} : vector<1024x3xf32> to vector<64x3xf32>
    %c0_18 = arith.constant 0 : index
    %c42 = arith.constant 42 : index
    %32 = vector.load %arg14[%c0_18, %c42] : memref<128x48xf32, #tpu.memory_space<vmem>>, vector<64x3xf32>
    tpu.vector_store %arg14[%c0_18, %c42], %31 {strides = array<i32>} : memref<128x48xf32, #tpu.memory_space<vmem>>, vector<64x3xf32>,
    %33 = vector.extract_strided_slice %2 {offsets = [960, 0], sizes = [64, 3], strides = [1, 1]} : vector<1024x3xf32> to vector<64x3xf32>
    %c0_19 = arith.constant 0 : index
    %c45 = arith.constant 45 : index
    %34 = vector.load %arg14[%c0_19, %c45] : memref<128x48xf32, #tpu.memory_space<vmem>>, vector<64x3xf32>
    tpu.vector_store %arg14[%c0_19, %c45], %33 {strides = array<i32>} : memref<128x48xf32, #tpu.memory_space<vmem>>, vector<64x3xf32>,
    %c0_20 = arith.constant 0 : index
    %c0_21 = arith.constant 0 : index
    %35 = vector.load %arg1[%c0_20, %c0_21] : memref<1024x256xf32, #tpu.memory_space<vmem>>, vector<1024x256xf32>
    %c256 = arith.constant 256 : index
    %c0_22 = arith.constant 0 : index
    %36 = vector.load %arg0[%c256, %c0_22] : memref<512x3xf32, #tpu.memory_space<vmem>>, vector<256x3xf32>
    %cst_23 = arith.constant dense<0.000000e+00> : vector<1024x3xf32>
    %37 = tpu.matmul %35, %36, %cst_23 {dimension_numbers = #tpu.dot_dimension_numbers<[1], [0], [0], [1], [0, 0, 1, 1], [], []>} : vector<1024x256xf32>, vector<256x3xf32>, vector<1024x3xf32> -> vector<1024x3xf32>
    %38 = vector.extract_strided_slice %37 {offsets = [0, 0], sizes = [64, 3], strides = [1, 1]} : vector<1024x3xf32> to vector<64x3xf32>
    %c64 = arith.constant 64 : index
    %c0_24 = arith.constant 0 : index
    %39 = vector.load %arg14[%c64, %c0_24] : memref<128x48xf32, #tpu.memory_space<vmem>>, vector<64x3xf32>
    tpu.vector_store %arg14[%c64, %c0_24], %38 {strides = array<i32>} : memref<128x48xf32, #tpu.memory_space<vmem>>, vector<64x3xf32>,
    %40 = vector.extract_strided_slice %37 {offsets = [64, 0], sizes = [64, 3], strides = [1, 1]} : vector<1024x3xf32> to vector<64x3xf32>
    %c64_25 = arith.constant 64 : index
    %c3_26 = arith.constant 3 : index
    %41 = vector.load %arg14[%c64_25, %c3_26] : memref<128x48xf32, #tpu.memory_space<vmem>>, vector<64x3xf32>
    tpu.vector_store %arg14[%c64_25, %c3_26], %40 {strides = array<i32>} : memref<128x48xf32, #tpu.memory_space<vmem>>, vector<64x3xf32>,
    %42 = vector.extract_strided_slice %37 {offsets = [128, 0], sizes = [64, 3], strides = [1, 1]} : vector<1024x3xf32> to vector<64x3xf32>
    %c64_27 = arith.constant 64 : index
    %c6_28 = arith.constant 6 : index
    %43 = vector.load %arg14[%c64_27, %c6_28] : memref<128x48xf32, #tpu.memory_space<vmem>>, vector<64x3xf32>
    tpu.vector_store %arg14[%c64_27, %c6_28], %42 {strides = array<i32>} : memref<128x48xf32, #tpu.memory_space<vmem>>, vector<64x3xf32>,
    %44 = vector.extract_strided_slice %37 {offsets = [192, 0], sizes = [64, 3], strides = [1, 1]} : vector<1024x3xf32> to vector<64x3xf32>
    %c64_29 = arith.constant 64 : index
    %c9_30 = arith.constant 9 : index
    %45 = vector.load %arg14[%c64_29, %c9_30] : memref<128x48xf32, #tpu.memory_space<vmem>>, vector<64x3xf32>
    tpu.vector_store %arg14[%c64_29, %c9_30], %44 {strides = array<i32>} : memref<128x48xf32, #tpu.memory_space<vmem>>, vector<64x3xf32>,
    %46 = vector.extract_strided_slice %37 {offsets = [256, 0], sizes = [64, 3], strides = [1, 1]} : vector<1024x3xf32> to vector<64x3xf32>
    %c64_31 = arith.constant 64 : index
    %c12_32 = arith.constant 12 : index
    %47 = vector.load %arg14[%c64_31, %c12_32] : memref<128x48xf32, #tpu.memory_space<vmem>>, vector<64x3xf32>
    tpu.vector_store %arg14[%c64_31, %c12_32], %46 {strides = array<i32>} : memref<128x48xf32, #tpu.memory_space<vmem>>, vector<64x3xf32>,
    %48 = vector.extract_strided_slice %37 {offsets = [320, 0], sizes = [64, 3], strides = [1, 1]} : vector<1024x3xf32> to vector<64x3xf32>
    %c64_33 = arith.constant 64 : index
    %c15_34 = arith.constant 15 : index
    %49 = vector.load %arg14[%c64_33, %c15_34] : memref<128x48xf32, #tpu.memory_space<vmem>>, vector<64x3xf32>
    tpu.vector_store %arg14[%c64_33, %c15_34], %48 {strides = array<i32>} : memref<128x48xf32, #tpu.memory_space<vmem>>, vector<64x3xf32>,
    %50 = vector.extract_strided_slice %37 {offsets = [384, 0], sizes = [64, 3], strides = [1, 1]} : vector<1024x3xf32> to vector<64x3xf32>
    %c64_35 = arith.constant 64 : index
    %c18_36 = arith.constant 18 : index
    %51 = vector.load %arg14[%c64_35, %c18_36] : memref<128x48xf32, #tpu.memory_space<vmem>>, vector<64x3xf32>
    tpu.vector_store %arg14[%c64_35, %c18_36], %50 {strides = array<i32>} : memref<128x48xf32, #tpu.memory_space<vmem>>, vector<64x3xf32>,
    %52 = vector.extract_strided_slice %37 {offsets = [448, 0], sizes = [64, 3], strides = [1, 1]} : vector<1024x3xf32> to vector<64x3xf32>
    %c64_37 = arith.constant 64 : index
    %c21_38 = arith.constant 21 : index
    %53 = vector.load %arg14[%c64_37, %c21_38] : memref<128x48xf32, #tpu.memory_space<vmem>>, vector<64x3xf32>
    tpu.vector_store %arg14[%c64_37, %c21_38], %52 {strides = array<i32>} : memref<128x48xf32, #tpu.memory_space<vmem>>, vector<64x3xf32>,
    %54 = vector.extract_strided_slice %37 {offsets = [512, 0], sizes = [64, 3], strides = [1, 1]} : vector<1024x3xf32> to vector<64x3xf32>
    %c64_39 = arith.constant 64 : index
    %c24_40 = arith.constant 24 : index
    %55 = vector.load %arg14[%c64_39, %c24_40] : memref<128x48xf32, #tpu.memory_space<vmem>>, vector<64x3xf32>
    tpu.vector_store %arg14[%c64_39, %c24_40], %54 {strides = array<i32>} : memref<128x48xf32, #tpu.memory_space<vmem>>, vector<64x3xf32>,
    %56 = vector.extract_strided_slice %37 {offsets = [576, 0], sizes = [64, 3], strides = [1, 1]} : vector<1024x3xf32> to vector<64x3xf32>
    %c64_41 = arith.constant 64 : index
    %c27_42 = arith.constant 27 : index
    %57 = vector.load %arg14[%c64_41, %c27_42] : memref<128x48xf32, #tpu.memory_space<vmem>>, vector<64x3xf32>
    tpu.vector_store %arg14[%c64_41, %c27_42], %56 {strides = array<i32>} : memref<128x48xf32, #tpu.memory_space<vmem>>, vector<64x3xf32>,
    %58 = vector.extract_strided_slice %37 {offsets = [640, 0], sizes = [64, 3], strides = [1, 1]} : vector<1024x3xf32> to vector<64x3xf32>
    %c64_43 = arith.constant 64 : index
    %c30_44 = arith.constant 30 : index
    %59 = vector.load %arg14[%c64_43, %c30_44] : memref<128x48xf32, #tpu.memory_space<vmem>>, vector<64x3xf32>
    tpu.vector_store %arg14[%c64_43, %c30_44], %58 {strides = array<i32>} : memref<128x48xf32, #tpu.memory_space<vmem>>, vector<64x3xf32>,
    %60 = vector.extract_strided_slice %37 {offsets = [704, 0], sizes = [64, 3], strides = [1, 1]} : vector<1024x3xf32> to vector<64x3xf32>
    %c64_45 = arith.constant 64 : index
    %c33_46 = arith.constant 33 : index
    %61 = vector.load %arg14[%c64_45, %c33_46] : memref<128x48xf32, #tpu.memory_space<vmem>>, vector<64x3xf32>
    tpu.vector_store %arg14[%c64_45, %c33_46], %60 {strides = array<i32>} : memref<128x48xf32, #tpu.memory_space<vmem>>, vector<64x3xf32>,
    %62 = vector.extract_strided_slice %37 {offsets = [768, 0], sizes = [64, 3], strides = [1, 1]} : vector<1024x3xf32> to vector<64x3xf32>
    %c64_47 = arith.constant 64 : index
    %c36_48 = arith.constant 36 : index
    %63 = vector.load %arg14[%c64_47, %c36_48] : memref<128x48xf32, #tpu.memory_space<vmem>>, vector<64x3xf32>
    tpu.vector_store %arg14[%c64_47, %c36_48], %62 {strides = array<i32>} : memref<128x48xf32, #tpu.memory_space<vmem>>, vector<64x3xf32>,
    %64 = vector.extract_strided_slice %37 {offsets = [832, 0], sizes = [64, 3], strides = [1, 1]} : vector<1024x3xf32> to vector<64x3xf32>
    %c64_49 = arith.constant 64 : index
    %c39_50 = arith.constant 39 : index
    %65 = vector.load %arg14[%c64_49, %c39_50] : memref<128x48xf32, #tpu.memory_space<vmem>>, vector<64x3xf32>
    tpu.vector_store %arg14[%c64_49, %c39_50], %64 {strides = array<i32>} : memref<128x48xf32, #tpu.memory_space<vmem>>, vector<64x3xf32>,
    %66 = vector.extract_strided_slice %37 {offsets = [896, 0], sizes = [64, 3], strides = [1, 1]} : vector<1024x3xf32> to vector<64x3xf32>
    %c64_51 = arith.constant 64 : index
    %c42_52 = arith.constant 42 : index
    %67 = vector.load %arg14[%c64_51, %c42_52] : memref<128x48xf32, #tpu.memory_space<vmem>>, vector<64x3xf32>
    tpu.vector_store %arg14[%c64_51, %c42_52], %66 {strides = array<i32>} : memref<128x48xf32, #tpu.memory_space<vmem>>, vector<64x3xf32>,
    %68 = vector.extract_strided_slice %37 {offsets = [960, 0], sizes = [64, 3], strides = [1, 1]} : vector<1024x3xf32> to vector<64x3xf32>
    %c64_53 = arith.constant 64 : index
    %c45_54 = arith.constant 45 : index
    %69 = vector.load %arg14[%c64_53, %c45_54] : memref<128x48xf32, #tpu.memory_space<vmem>>, vector<64x3xf32>
    tpu.vector_store %arg14[%c64_53, %c45_54], %68 {strides = array<i32>} : memref<128x48xf32, #tpu.memory_space<vmem>>, vector<64x3xf32>,
    %c0_55 = arith.constant 0 : index
    %c0_56 = arith.constant 0 : index
    %70 = vector.load %arg14[%c0_55, %c0_56] : memref<128x48xf32, #tpu.memory_space<vmem>>, vector<128x48xf32>
    %c0_57 = arith.constant 0 : index
    %c0_58 = arith.constant 0 : index
    %71 = vector.load %arg2[%c0_57, %c0_58] : memref<48x32xf32, #tpu.memory_space<vmem>>, vector<48x32xf32>
    %cst_59 = arith.constant dense<0.000000e+00> : vector<128x32xf32>
    %72 = tpu.matmul %70, %71, %cst_59 {dimension_numbers = #tpu.dot_dimension_numbers<[1], [0], [0], [1], [0, 0, 1, 1], [], []>} : vector<128x48xf32>, vector<48x32xf32>, vector<128x32xf32> -> vector<128x32xf32>
    %c0_60 = arith.constant 0 : index
    %c0_61 = arith.constant 0 : index
    %73 = vector.load %arg3[%c0_60, %c0_61] : memref<1x32xf32, #tpu.memory_space<vmem>>, vector<1x32xf32>
    %74 = vector.broadcast %73 : vector<1x32xf32> to vector<128x32xf32>
    %75 = arith.addf %72, %74 : vector<128x32xf32>
    %cst_62 = arith.constant 2.000000e-01 : f32
    %76 = vector.broadcast %cst_62 : f32 to vector<128x32xf32>
    %77 = arith.mulf %76, %75 : vector<128x32xf32>
    %78 = arith.maximumf %75, %77 : vector<128x32xf32>
    %c0_63 = arith.constant 0 : index
    %c0_64 = arith.constant 0 : index
    %79 = vector.load %arg4[%c0_63, %c0_64] : memref<256x64xf32, #tpu.memory_space<vmem>>, vector<256x64xf32>
    %80 = vector.extract_strided_slice %78 {offsets = [0, 0], sizes = [64, 32], strides = [1, 1]} : vector<128x32xf32> to vector<64x32xf32>
    %cst_65 = arith.constant dense<0.000000e+00> : vector<256x32xf32>
    %81 = tpu.matmul %79, %80, %cst_65 {dimension_numbers = #tpu.dot_dimension_numbers<[1], [0], [0], [1], [0, 0, 1, 1], [], []>} : vector<256x64xf32>, vector<64x32xf32>, vector<256x32xf32> -> vector<256x32xf32>
    %82 = vector.extract_strided_slice %81 {offsets = [0, 0], sizes = [16, 32], strides = [1, 1]} : vector<256x32xf32> to vector<16x32xf32>
    %c0_66 = arith.constant 0 : index
    %c0_67 = arith.constant 0 : index
    %83 = vector.load %arg15[%c0_66, %c0_67] : memref<32x512xf32, #tpu.memory_space<vmem>>, vector<16x32xf32>
    tpu.vector_store %arg15[%c0_66, %c0_67], %82 {strides = array<i32>} : memref<32x512xf32, #tpu.memory_space<vmem>>, vector<16x32xf32>,
    %84 = vector.extract_strided_slice %81 {offsets = [16, 0], sizes = [16, 32], strides = [1, 1]} : vector<256x32xf32> to vector<16x32xf32>
    %c0_68 = arith.constant 0 : index
    %c32 = arith.constant 32 : index
    %85 = vector.load %arg15[%c0_68, %c32] : memref<32x512xf32, #tpu.memory_space<vmem>>, vector<16x32xf32>
    tpu.vector_store %arg15[%c0_68, %c32], %84 {strides = array<i32>} : memref<32x512xf32, #tpu.memory_space<vmem>>, vector<16x32xf32>,
    %86 = vector.extract_strided_slice %81 {offsets = [32, 0], sizes = [16, 32], strides = [1, 1]} : vector<256x32xf32> to vector<16x32xf32>
    %c0_69 = arith.constant 0 : index
    %c64_70 = arith.constant 64 : index
    %87 = vector.load %arg15[%c0_69, %c64_70] : memref<32x512xf32, #tpu.memory_space<vmem>>, vector<16x32xf32>
    tpu.vector_store %arg15[%c0_69, %c64_70], %86 {strides = array<i32>} : memref<32x512xf32, #tpu.memory_space<vmem>>, vector<16x32xf32>,
    %88 = vector.extract_strided_slice %81 {offsets = [48, 0], sizes = [16, 32], strides = [1, 1]} : vector<256x32xf32> to vector<16x32xf32>
    %c0_71 = arith.constant 0 : index
    %c96 = arith.constant 96 : index
    %89 = vector.load %arg15[%c0_71, %c96] : memref<32x512xf32, #tpu.memory_space<vmem>>, vector<16x32xf32>
    tpu.vector_store %arg15[%c0_71, %c96], %88 {strides = array<i32>} : memref<32x512xf32, #tpu.memory_space<vmem>>, vector<16x32xf32>,
    %90 = vector.extract_strided_slice %81 {offsets = [64, 0], sizes = [16, 32], strides = [1, 1]} : vector<256x32xf32> to vector<16x32xf32>
    %c0_72 = arith.constant 0 : index
    %c128 = arith.constant 128 : index
    %91 = vector.load %arg15[%c0_72, %c128] : memref<32x512xf32, #tpu.memory_space<vmem>>, vector<16x32xf32>
    tpu.vector_store %arg15[%c0_72, %c128], %90 {strides = array<i32>} : memref<32x512xf32, #tpu.memory_space<vmem>>, vector<16x32xf32>,
    %92 = vector.extract_strided_slice %81 {offsets = [80, 0], sizes = [16, 32], strides = [1, 1]} : vector<256x32xf32> to vector<16x32xf32>
    %c0_73 = arith.constant 0 : index
    %c160 = arith.constant 160 : index
    %93 = vector.load %arg15[%c0_73, %c160] : memref<32x512xf32, #tpu.memory_space<vmem>>, vector<16x32xf32>
    tpu.vector_store %arg15[%c0_73, %c160], %92 {strides = array<i32>} : memref<32x512xf32, #tpu.memory_space<vmem>>, vector<16x32xf32>,
    %94 = vector.extract_strided_slice %81 {offsets = [96, 0], sizes = [16, 32], strides = [1, 1]} : vector<256x32xf32> to vector<16x32xf32>
    %c0_74 = arith.constant 0 : index
    %c192 = arith.constant 192 : index
    %95 = vector.load %arg15[%c0_74, %c192] : memref<32x512xf32, #tpu.memory_space<vmem>>, vector<16x32xf32>
    tpu.vector_store %arg15[%c0_74, %c192], %94 {strides = array<i32>} : memref<32x512xf32, #tpu.memory_space<vmem>>, vector<16x32xf32>,
    %96 = vector.extract_strided_slice %81 {offsets = [112, 0], sizes = [16, 32], strides = [1, 1]} : vector<256x32xf32> to vector<16x32xf32>
    %c0_75 = arith.constant 0 : index
    %c224 = arith.constant 224 : index
    %97 = vector.load %arg15[%c0_75, %c224] : memref<32x512xf32, #tpu.memory_space<vmem>>, vector<16x32xf32>
    tpu.vector_store %arg15[%c0_75, %c224], %96 {strides = array<i32>} : memref<32x512xf32, #tpu.memory_space<vmem>>, vector<16x32xf32>,
    %98 = vector.extract_strided_slice %81 {offsets = [128, 0], sizes = [16, 32], strides = [1, 1]} : vector<256x32xf32> to vector<16x32xf32>
    %c0_76 = arith.constant 0 : index
    %c256_77 = arith.constant 256 : index
    %99 = vector.load %arg15[%c0_76, %c256_77] : memref<32x512xf32, #tpu.memory_space<vmem>>, vector<16x32xf32>
    tpu.vector_store %arg15[%c0_76, %c256_77], %98 {strides = array<i32>} : memref<32x512xf32, #tpu.memory_space<vmem>>, vector<16x32xf32>,
    %100 = vector.extract_strided_slice %81 {offsets = [144, 0], sizes = [16, 32], strides = [1, 1]} : vector<256x32xf32> to vector<16x32xf32>
    %c0_78 = arith.constant 0 : index
    %c288 = arith.constant 288 : index
    %101 = vector.load %arg15[%c0_78, %c288] : memref<32x512xf32, #tpu.memory_space<vmem>>, vector<16x32xf32>
    tpu.vector_store %arg15[%c0_78, %c288], %100 {strides = array<i32>} : memref<32x512xf32, #tpu.memory_space<vmem>>, vector<16x32xf32>,
    %102 = vector.extract_strided_slice %81 {offsets = [160, 0], sizes = [16, 32], strides = [1, 1]} : vector<256x32xf32> to vector<16x32xf32>
    %c0_79 = arith.constant 0 : index
    %c320 = arith.constant 320 : index
    %103 = vector.load %arg15[%c0_79, %c320] : memref<32x512xf32, #tpu.memory_space<vmem>>, vector<16x32xf32>
    tpu.vector_store %arg15[%c0_79, %c320], %102 {strides = array<i32>} : memref<32x512xf32, #tpu.memory_space<vmem>>, vector<16x32xf32>,
    %104 = vector.extract_strided_slice %81 {offsets = [176, 0], sizes = [16, 32], strides = [1, 1]} : vector<256x32xf32> to vector<16x32xf32>
    %c0_80 = arith.constant 0 : index
    %c352 = arith.constant 352 : index
    %105 = vector.load %arg15[%c0_80, %c352] : memref<32x512xf32, #tpu.memory_space<vmem>>, vector<16x32xf32>
    tpu.vector_store %arg15[%c0_80, %c352], %104 {strides = array<i32>} : memref<32x512xf32, #tpu.memory_space<vmem>>, vector<16x32xf32>,
    %106 = vector.extract_strided_slice %81 {offsets = [192, 0], sizes = [16, 32], strides = [1, 1]} : vector<256x32xf32> to vector<16x32xf32>
    %c0_81 = arith.constant 0 : index
    %c384 = arith.constant 384 : index
    %107 = vector.load %arg15[%c0_81, %c384] : memref<32x512xf32, #tpu.memory_space<vmem>>, vector<16x32xf32>
    tpu.vector_store %arg15[%c0_81, %c384], %106 {strides = array<i32>} : memref<32x512xf32, #tpu.memory_space<vmem>>, vector<16x32xf32>,
    %108 = vector.extract_strided_slice %81 {offsets = [208, 0], sizes = [16, 32], strides = [1, 1]} : vector<256x32xf32> to vector<16x32xf32>
    %c0_82 = arith.constant 0 : index
    %c416 = arith.constant 416 : index
    %109 = vector.load %arg15[%c0_82, %c416] : memref<32x512xf32, #tpu.memory_space<vmem>>, vector<16x32xf32>
    tpu.vector_store %arg15[%c0_82, %c416], %108 {strides = array<i32>} : memref<32x512xf32, #tpu.memory_space<vmem>>, vector<16x32xf32>,
    %110 = vector.extract_strided_slice %81 {offsets = [224, 0], sizes = [16, 32], strides = [1, 1]} : vector<256x32xf32> to vector<16x32xf32>
    %c0_83 = arith.constant 0 : index
    %c448 = arith.constant 448 : index
    %111 = vector.load %arg15[%c0_83, %c448] : memref<32x512xf32, #tpu.memory_space<vmem>>, vector<16x32xf32>
    tpu.vector_store %arg15[%c0_83, %c448], %110 {strides = array<i32>} : memref<32x512xf32, #tpu.memory_space<vmem>>, vector<16x32xf32>,
    %112 = vector.extract_strided_slice %81 {offsets = [240, 0], sizes = [16, 32], strides = [1, 1]} : vector<256x32xf32> to vector<16x32xf32>
    %c0_84 = arith.constant 0 : index
    %c480 = arith.constant 480 : index
    %113 = vector.load %arg15[%c0_84, %c480] : memref<32x512xf32, #tpu.memory_space<vmem>>, vector<16x32xf32>
    tpu.vector_store %arg15[%c0_84, %c480], %112 {strides = array<i32>} : memref<32x512xf32, #tpu.memory_space<vmem>>, vector<16x32xf32>,
    %c0_85 = arith.constant 0 : index
    %c0_86 = arith.constant 0 : index
    %114 = vector.load %arg4[%c0_85, %c0_86] : memref<256x64xf32, #tpu.memory_space<vmem>>, vector<256x64xf32>
    %115 = vector.extract_strided_slice %78 {offsets = [64, 0], sizes = [64, 32], strides = [1, 1]} : vector<128x32xf32> to vector<64x32xf32>
    %cst_87 = arith.constant dense<0.000000e+00> : vector<256x32xf32>
    %116 = tpu.matmul %114, %115, %cst_87 {dimension_numbers = #tpu.dot_dimension_numbers<[1], [0], [0], [1], [0, 0, 1, 1], [], []>} : vector<256x64xf32>, vector<64x32xf32>, vector<256x32xf32> -> vector<256x32xf32>
    %117 = vector.extract_strided_slice %116 {offsets = [0, 0], sizes = [16, 32], strides = [1, 1]} : vector<256x32xf32> to vector<16x32xf32>
    %c16 = arith.constant 16 : index
    %c0_88 = arith.constant 0 : index
    %118 = vector.load %arg15[%c16, %c0_88] : memref<32x512xf32, #tpu.memory_space<vmem>>, vector<16x32xf32>
    tpu.vector_store %arg15[%c16, %c0_88], %117 {strides = array<i32>} : memref<32x512xf32, #tpu.memory_space<vmem>>, vector<16x32xf32>,
    %119 = vector.extract_strided_slice %116 {offsets = [16, 0], sizes = [16, 32], strides = [1, 1]} : vector<256x32xf32> to vector<16x32xf32>
    %c16_89 = arith.constant 16 : index
    %c32_90 = arith.constant 32 : index
    %120 = vector.load %arg15[%c16_89, %c32_90] : memref<32x512xf32, #tpu.memory_space<vmem>>, vector<16x32xf32>
    tpu.vector_store %arg15[%c16_89, %c32_90], %119 {strides = array<i32>} : memref<32x512xf32, #tpu.memory_space<vmem>>, vector<16x32xf32>,
    %121 = vector.extract_strided_slice %116 {offsets = [32, 0], sizes = [16, 32], strides = [1, 1]} : vector<256x32xf32> to vector<16x32xf32>
    %c16_91 = arith.constant 16 : index
    %c64_92 = arith.constant 64 : index
    %122 = vector.load %arg15[%c16_91, %c64_92] : memref<32x512xf32, #tpu.memory_space<vmem>>, vector<16x32xf32>
    tpu.vector_store %arg15[%c16_91, %c64_92], %121 {strides = array<i32>} : memref<32x512xf32, #tpu.memory_space<vmem>>, vector<16x32xf32>,
    %123 = vector.extract_strided_slice %116 {offsets = [48, 0], sizes = [16, 32], strides = [1, 1]} : vector<256x32xf32> to vector<16x32xf32>
    %c16_93 = arith.constant 16 : index
    %c96_94 = arith.constant 96 : index
    %124 = vector.load %arg15[%c16_93, %c96_94] : memref<32x512xf32, #tpu.memory_space<vmem>>, vector<16x32xf32>
    tpu.vector_store %arg15[%c16_93, %c96_94], %123 {strides = array<i32>} : memref<32x512xf32, #tpu.memory_space<vmem>>, vector<16x32xf32>,
    %125 = vector.extract_strided_slice %116 {offsets = [64, 0], sizes = [16, 32], strides = [1, 1]} : vector<256x32xf32> to vector<16x32xf32>
    %c16_95 = arith.constant 16 : index
    %c128_96 = arith.constant 128 : index
    %126 = vector.load %arg15[%c16_95, %c128_96] : memref<32x512xf32, #tpu.memory_space<vmem>>, vector<16x32xf32>
    tpu.vector_store %arg15[%c16_95, %c128_96], %125 {strides = array<i32>} : memref<32x512xf32, #tpu.memory_space<vmem>>, vector<16x32xf32>,
    %127 = vector.extract_strided_slice %116 {offsets = [80, 0], sizes = [16, 32], strides = [1, 1]} : vector<256x32xf32> to vector<16x32xf32>
    %c16_97 = arith.constant 16 : index
    %c160_98 = arith.constant 160 : index
    %128 = vector.load %arg15[%c16_97, %c160_98] : memref<32x512xf32, #tpu.memory_space<vmem>>, vector<16x32xf32>
    tpu.vector_store %arg15[%c16_97, %c160_98], %127 {strides = array<i32>} : memref<32x512xf32, #tpu.memory_space<vmem>>, vector<16x32xf32>,
    %129 = vector.extract_strided_slice %116 {offsets = [96, 0], sizes = [16, 32], strides = [1, 1]} : vector<256x32xf32> to vector<16x32xf32>
    %c16_99 = arith.constant 16 : index
    %c192_100 = arith.constant 192 : index
    %130 = vector.load %arg15[%c16_99, %c192_100] : memref<32x512xf32, #tpu.memory_space<vmem>>, vector<16x32xf32>
    tpu.vector_store %arg15[%c16_99, %c192_100], %129 {strides = array<i32>} : memref<32x512xf32, #tpu.memory_space<vmem>>, vector<16x32xf32>,
    %131 = vector.extract_strided_slice %116 {offsets = [112, 0], sizes = [16, 32], strides = [1, 1]} : vector<256x32xf32> to vector<16x32xf32>
    %c16_101 = arith.constant 16 : index
    %c224_102 = arith.constant 224 : index
    %132 = vector.load %arg15[%c16_101, %c224_102] : memref<32x512xf32, #tpu.memory_space<vmem>>, vector<16x32xf32>
    tpu.vector_store %arg15[%c16_101, %c224_102], %131 {strides = array<i32>} : memref<32x512xf32, #tpu.memory_space<vmem>>, vector<16x32xf32>,
    %133 = vector.extract_strided_slice %116 {offsets = [128, 0], sizes = [16, 32], strides = [1, 1]} : vector<256x32xf32> to vector<16x32xf32>
    %c16_103 = arith.constant 16 : index
    %c256_104 = arith.constant 256 : index
    %134 = vector.load %arg15[%c16_103, %c256_104] : memref<32x512xf32, #tpu.memory_space<vmem>>, vector<16x32xf32>
    tpu.vector_store %arg15[%c16_103, %c256_104], %133 {strides = array<i32>} : memref<32x512xf32, #tpu.memory_space<vmem>>, vector<16x32xf32>,
    %135 = vector.extract_strided_slice %116 {offsets = [144, 0], sizes = [16, 32], strides = [1, 1]} : vector<256x32xf32> to vector<16x32xf32>
    %c16_105 = arith.constant 16 : index
    %c288_106 = arith.constant 288 : index
    %136 = vector.load %arg15[%c16_105, %c288_106] : memref<32x512xf32, #tpu.memory_space<vmem>>, vector<16x32xf32>
    tpu.vector_store %arg15[%c16_105, %c288_106], %135 {strides = array<i32>} : memref<32x512xf32, #tpu.memory_space<vmem>>, vector<16x32xf32>,
    %137 = vector.extract_strided_slice %116 {offsets = [160, 0], sizes = [16, 32], strides = [1, 1]} : vector<256x32xf32> to vector<16x32xf32>
    %c16_107 = arith.constant 16 : index
    %c320_108 = arith.constant 320 : index
    %138 = vector.load %arg15[%c16_107, %c320_108] : memref<32x512xf32, #tpu.memory_space<vmem>>, vector<16x32xf32>
    tpu.vector_store %arg15[%c16_107, %c320_108], %137 {strides = array<i32>} : memref<32x512xf32, #tpu.memory_space<vmem>>, vector<16x32xf32>,
    %139 = vector.extract_strided_slice %116 {offsets = [176, 0], sizes = [16, 32], strides = [1, 1]} : vector<256x32xf32> to vector<16x32xf32>
    %c16_109 = arith.constant 16 : index
    %c352_110 = arith.constant 352 : index
    %140 = vector.load %arg15[%c16_109, %c352_110] : memref<32x512xf32, #tpu.memory_space<vmem>>, vector<16x32xf32>
    tpu.vector_store %arg15[%c16_109, %c352_110], %139 {strides = array<i32>} : memref<32x512xf32, #tpu.memory_space<vmem>>, vector<16x32xf32>,
    %141 = vector.extract_strided_slice %116 {offsets = [192, 0], sizes = [16, 32], strides = [1, 1]} : vector<256x32xf32> to vector<16x32xf32>
    %c16_111 = arith.constant 16 : index
    %c384_112 = arith.constant 384 : index
    %142 = vector.load %arg15[%c16_111, %c384_112] : memref<32x512xf32, #tpu.memory_space<vmem>>, vector<16x32xf32>
    tpu.vector_store %arg15[%c16_111, %c384_112], %141 {strides = array<i32>} : memref<32x512xf32, #tpu.memory_space<vmem>>, vector<16x32xf32>,
    %143 = vector.extract_strided_slice %116 {offsets = [208, 0], sizes = [16, 32], strides = [1, 1]} : vector<256x32xf32> to vector<16x32xf32>
    %c16_113 = arith.constant 16 : index
    %c416_114 = arith.constant 416 : index
    %144 = vector.load %arg15[%c16_113, %c416_114] : memref<32x512xf32, #tpu.memory_space<vmem>>, vector<16x32xf32>
    tpu.vector_store %arg15[%c16_113, %c416_114], %143 {strides = array<i32>} : memref<32x512xf32, #tpu.memory_space<vmem>>, vector<16x32xf32>,
    %145 = vector.extract_strided_slice %116 {offsets = [224, 0], sizes = [16, 32], strides = [1, 1]} : vector<256x32xf32> to vector<16x32xf32>
    %c16_115 = arith.constant 16 : index
    %c448_116 = arith.constant 448 : index
    %146 = vector.load %arg15[%c16_115, %c448_116] : memref<32x512xf32, #tpu.memory_space<vmem>>, vector<16x32xf32>
    tpu.vector_store %arg15[%c16_115, %c448_116], %145 {strides = array<i32>} : memref<32x512xf32, #tpu.memory_space<vmem>>, vector<16x32xf32>,
    %147 = vector.extract_strided_slice %116 {offsets = [240, 0], sizes = [16, 32], strides = [1, 1]} : vector<256x32xf32> to vector<16x32xf32>
    %c16_117 = arith.constant 16 : index
    %c480_118 = arith.constant 480 : index
    %148 = vector.load %arg15[%c16_117, %c480_118] : memref<32x512xf32, #tpu.memory_space<vmem>>, vector<16x32xf32>
    tpu.vector_store %arg15[%c16_117, %c480_118], %147 {strides = array<i32>} : memref<32x512xf32, #tpu.memory_space<vmem>>, vector<16x32xf32>,
    %c0_119 = arith.constant 0 : index
    %c0_120 = arith.constant 0 : index
    %149 = vector.load %arg15[%c0_119, %c0_120] : memref<32x512xf32, #tpu.memory_space<vmem>>, vector<32x512xf32>
    %c0_121 = arith.constant 0 : index
    %c0_122 = arith.constant 0 : index
    %150 = vector.load %arg5[%c0_121, %c0_122] : memref<512x64xf32, #tpu.memory_space<vmem>>, vector<512x64xf32>
    %cst_123 = arith.constant dense<0.000000e+00> : vector<32x64xf32>
    %151 = tpu.matmul %149, %150, %cst_123 {dimension_numbers = #tpu.dot_dimension_numbers<[1], [0], [0], [1], [0, 0, 1, 1], [], []>} : vector<32x512xf32>, vector<512x64xf32>, vector<32x64xf32> -> vector<32x64xf32>
    %c0_124 = arith.constant 0 : index
    %c0_125 = arith.constant 0 : index
    %152 = vector.load %arg6[%c0_124, %c0_125] : memref<2x64xf32, #tpu.memory_space<vmem>>, vector<1x64xf32>
    %c1 = arith.constant 1 : index
    %c0_126 = arith.constant 0 : index
    %153 = vector.load %arg6[%c1, %c0_126] : memref<2x64xf32, #tpu.memory_space<vmem>>, vector<1x64xf32>
    %cst_127 = arith.constant dense<0.000000e+00> : vector<64xf32>
    %154 = vector.multi_reduction <add>, %151, %cst_127 [0] : vector<32x64xf32> to vector<64xf32>
    %155 = vector.shape_cast %154 : vector<64xf32> to vector<1x64xf32>
    %cst_128 = arith.constant 3.200000e+01 : f32
    %156 = vector.broadcast %cst_128 : f32 to vector<1x64xf32>
    %157 = arith.divf %155, %156 : vector<1x64xf32>
    %158 = vector.broadcast %157 : vector<1x64xf32> to vector<32x64xf32>
    %159 = arith.subf %151, %158 : vector<32x64xf32>
    %160 = arith.mulf %159, %159 : vector<32x64xf32>
    %cst_129 = arith.constant dense<0.000000e+00> : vector<64xf32>
    %161 = vector.multi_reduction <add>, %160, %cst_129 [0] : vector<32x64xf32> to vector<64xf32>
    %162 = vector.shape_cast %161 : vector<64xf32> to vector<1x64xf32>
    %cst_130 = arith.constant 3.200000e+01 : f32
    %163 = vector.broadcast %cst_130 : f32 to vector<1x64xf32>
    %164 = arith.divf %162, %163 : vector<1x64xf32>
    %165 = vector.broadcast %157 : vector<1x64xf32> to vector<32x64xf32>
    %166 = arith.subf %151, %165 : vector<32x64xf32>
    %cst_131 = arith.constant 9.99999974E-6 : f32
    %167 = vector.broadcast %cst_131 : f32 to vector<1x64xf32>
    %168 = arith.addf %164, %167 : vector<1x64xf32>
    %169 = math.rsqrt %168 : vector<1x64xf32>
    %170 = vector.broadcast %169 : vector<1x64xf32> to vector<32x64xf32>
    %171 = arith.mulf %166, %170 : vector<32x64xf32>
    %172 = vector.broadcast %152 : vector<1x64xf32> to vector<32x64xf32>
    %173 = arith.mulf %171, %172 : vector<32x64xf32>
    %174 = vector.broadcast %153 : vector<1x64xf32> to vector<32x64xf32>
    %175 = arith.addf %173, %174 : vector<32x64xf32>
    %cst_132 = arith.constant 2.000000e-01 : f32
    %176 = vector.broadcast %cst_132 : f32 to vector<32x64xf32>
    %177 = arith.mulf %176, %175 : vector<32x64xf32>
    %178 = arith.maximumf %175, %177 : vector<32x64xf32>
    %c0_133 = arith.constant 0 : index
    %c0_134 = arith.constant 0 : index
    %179 = vector.load %arg7[%c0_133, %c0_134] : memref<64x16xf32, #tpu.memory_space<vmem>>, vector<64x16xf32>
    %180 = vector.extract_strided_slice %178 {offsets = [0, 0], sizes = [16, 64], strides = [1, 1]} : vector<32x64xf32> to vector<16x64xf32>
    %cst_135 = arith.constant dense<0.000000e+00> : vector<64x64xf32>
    %181 = tpu.matmul %179, %180, %cst_135 {dimension_numbers = #tpu.dot_dimension_numbers<[1], [0], [0], [1], [0, 0, 1, 1], [], []>} : vector<64x16xf32>, vector<16x64xf32>, vector<64x64xf32> -> vector<64x64xf32>
    %182 = vector.extract_strided_slice %181 {offsets = [0, 0], sizes = [4, 64], strides = [1, 1]} : vector<64x64xf32> to vector<4x64xf32>
    %c0_136 = arith.constant 0 : index
    %c0_137 = arith.constant 0 : index
    %183 = vector.load %arg16[%c0_136, %c0_137] : memref<8x1024xf32, #tpu.memory_space<vmem>>, vector<4x64xf32>
    tpu.vector_store %arg16[%c0_136, %c0_137], %182 {strides = array<i32>} : memref<8x1024xf32, #tpu.memory_space<vmem>>, vector<4x64xf32>,
    %184 = vector.extract_strided_slice %181 {offsets = [4, 0], sizes = [4, 64], strides = [1, 1]} : vector<64x64xf32> to vector<4x64xf32>
    %c0_138 = arith.constant 0 : index
    %c64_139 = arith.constant 64 : index
    %185 = vector.load %arg16[%c0_138, %c64_139] : memref<8x1024xf32, #tpu.memory_space<vmem>>, vector<4x64xf32>
    tpu.vector_store %arg16[%c0_138, %c64_139], %184 {strides = array<i32>} : memref<8x1024xf32, #tpu.memory_space<vmem>>, vector<4x64xf32>,
    %186 = vector.extract_strided_slice %181 {offsets = [8, 0], sizes = [4, 64], strides = [1, 1]} : vector<64x64xf32> to vector<4x64xf32>
    %c0_140 = arith.constant 0 : index
    %c128_141 = arith.constant 128 : index
    %187 = vector.load %arg16[%c0_140, %c128_141] : memref<8x1024xf32, #tpu.memory_space<vmem>>, vector<4x64xf32>
    tpu.vector_store %arg16[%c0_140, %c128_141], %186 {strides = array<i32>} : memref<8x1024xf32, #tpu.memory_space<vmem>>, vector<4x64xf32>,
    %188 = vector.extract_strided_slice %181 {offsets = [12, 0], sizes = [4, 64], strides = [1, 1]} : vector<64x64xf32> to vector<4x64xf32>
    %c0_142 = arith.constant 0 : index
    %c192_143 = arith.constant 192 : index
    %189 = vector.load %arg16[%c0_142, %c192_143] : memref<8x1024xf32, #tpu.memory_space<vmem>>, vector<4x64xf32>
    tpu.vector_store %arg16[%c0_142, %c192_143], %188 {strides = array<i32>} : memref<8x1024xf32, #tpu.memory_space<vmem>>, vector<4x64xf32>,
    %190 = vector.extract_strided_slice %181 {offsets = [16, 0], sizes = [4, 64], strides = [1, 1]} : vector<64x64xf32> to vector<4x64xf32>
    %c0_144 = arith.constant 0 : index
    %c256_145 = arith.constant 256 : index
    %191 = vector.load %arg16[%c0_144, %c256_145] : memref<8x1024xf32, #tpu.memory_space<vmem>>, vector<4x64xf32>
    tpu.vector_store %arg16[%c0_144, %c256_145], %190 {strides = array<i32>} : memref<8x1024xf32, #tpu.memory_space<vmem>>, vector<4x64xf32>,
    %192 = vector.extract_strided_slice %181 {offsets = [20, 0], sizes = [4, 64], strides = [1, 1]} : vector<64x64xf32> to vector<4x64xf32>
    %c0_146 = arith.constant 0 : index
    %c320_147 = arith.constant 320 : index
    %193 = vector.load %arg16[%c0_146, %c320_147] : memref<8x1024xf32, #tpu.memory_space<vmem>>, vector<4x64xf32>
    tpu.vector_store %arg16[%c0_146, %c320_147], %192 {strides = array<i32>} : memref<8x1024xf32, #tpu.memory_space<vmem>>, vector<4x64xf32>,
    %194 = vector.extract_strided_slice %181 {offsets = [24, 0], sizes = [4, 64], strides = [1, 1]} : vector<64x64xf32> to vector<4x64xf32>
    %c0_148 = arith.constant 0 : index
    %c384_149 = arith.constant 384 : index
    %195 = vector.load %arg16[%c0_148, %c384_149] : memref<8x1024xf32, #tpu.memory_space<vmem>>, vector<4x64xf32>
    tpu.vector_store %arg16[%c0_148, %c384_149], %194 {strides = array<i32>} : memref<8x1024xf32, #tpu.memory_space<vmem>>, vector<4x64xf32>,
    %196 = vector.extract_strided_slice %181 {offsets = [28, 0], sizes = [4, 64], strides = [1, 1]} : vector<64x64xf32> to vector<4x64xf32>
    %c0_150 = arith.constant 0 : index
    %c448_151 = arith.constant 448 : index
    %197 = vector.load %arg16[%c0_150, %c448_151] : memref<8x1024xf32, #tpu.memory_space<vmem>>, vector<4x64xf32>
    tpu.vector_store %arg16[%c0_150, %c448_151], %196 {strides = array<i32>} : memref<8x1024xf32, #tpu.memory_space<vmem>>, vector<4x64xf32>,
    %198 = vector.extract_strided_slice %181 {offsets = [32, 0], sizes = [4, 64], strides = [1, 1]} : vector<64x64xf32> to vector<4x64xf32>
    %c0_152 = arith.constant 0 : index
    %c512 = arith.constant 512 : index
    %199 = vector.load %arg16[%c0_152, %c512] : memref<8x1024xf32, #tpu.memory_space<vmem>>, vector<4x64xf32>
    tpu.vector_store %arg16[%c0_152, %c512], %198 {strides = array<i32>} : memref<8x1024xf32, #tpu.memory_space<vmem>>, vector<4x64xf32>,
    %200 = vector.extract_strided_slice %181 {offsets = [36, 0], sizes = [4, 64], strides = [1, 1]} : vector<64x64xf32> to vector<4x64xf32>
    %c0_153 = arith.constant 0 : index
    %c576 = arith.constant 576 : index
    %201 = vector.load %arg16[%c0_153, %c576] : memref<8x1024xf32, #tpu.memory_space<vmem>>, vector<4x64xf32>
    tpu.vector_store %arg16[%c0_153, %c576], %200 {strides = array<i32>} : memref<8x1024xf32, #tpu.memory_space<vmem>>, vector<4x64xf32>,
    %202 = vector.extract_strided_slice %181 {offsets = [40, 0], sizes = [4, 64], strides = [1, 1]} : vector<64x64xf32> to vector<4x64xf32>
    %c0_154 = arith.constant 0 : index
    %c640 = arith.constant 640 : index
    %203 = vector.load %arg16[%c0_154, %c640] : memref<8x1024xf32, #tpu.memory_space<vmem>>, vector<4x64xf32>
    tpu.vector_store %arg16[%c0_154, %c640], %202 {strides = array<i32>} : memref<8x1024xf32, #tpu.memory_space<vmem>>, vector<4x64xf32>,
    %204 = vector.extract_strided_slice %181 {offsets = [44, 0], sizes = [4, 64], strides = [1, 1]} : vector<64x64xf32> to vector<4x64xf32>
    %c0_155 = arith.constant 0 : index
    %c704 = arith.constant 704 : index
    %205 = vector.load %arg16[%c0_155, %c704] : memref<8x1024xf32, #tpu.memory_space<vmem>>, vector<4x64xf32>
    tpu.vector_store %arg16[%c0_155, %c704], %204 {strides = array<i32>} : memref<8x1024xf32, #tpu.memory_space<vmem>>, vector<4x64xf32>,
    %206 = vector.extract_strided_slice %181 {offsets = [48, 0], sizes = [4, 64], strides = [1, 1]} : vector<64x64xf32> to vector<4x64xf32>
    %c0_156 = arith.constant 0 : index
    %c768 = arith.constant 768 : index
    %207 = vector.load %arg16[%c0_156, %c768] : memref<8x1024xf32, #tpu.memory_space<vmem>>, vector<4x64xf32>
    tpu.vector_store %arg16[%c0_156, %c768], %206 {strides = array<i32>} : memref<8x1024xf32, #tpu.memory_space<vmem>>, vector<4x64xf32>,
    %208 = vector.extract_strided_slice %181 {offsets = [52, 0], sizes = [4, 64], strides = [1, 1]} : vector<64x64xf32> to vector<4x64xf32>
    %c0_157 = arith.constant 0 : index
    %c832 = arith.constant 832 : index
    %209 = vector.load %arg16[%c0_157, %c832] : memref<8x1024xf32, #tpu.memory_space<vmem>>, vector<4x64xf32>
    tpu.vector_store %arg16[%c0_157, %c832], %208 {strides = array<i32>} : memref<8x1024xf32, #tpu.memory_space<vmem>>, vector<4x64xf32>,
    %210 = vector.extract_strided_slice %181 {offsets = [56, 0], sizes = [4, 64], strides = [1, 1]} : vector<64x64xf32> to vector<4x64xf32>
    %c0_158 = arith.constant 0 : index
    %c896 = arith.constant 896 : index
    %211 = vector.load %arg16[%c0_158, %c896] : memref<8x1024xf32, #tpu.memory_space<vmem>>, vector<4x64xf32>
    tpu.vector_store %arg16[%c0_158, %c896], %210 {strides = array<i32>} : memref<8x1024xf32, #tpu.memory_space<vmem>>, vector<4x64xf32>,
    %212 = vector.extract_strided_slice %181 {offsets = [60, 0], sizes = [4, 64], strides = [1, 1]} : vector<64x64xf32> to vector<4x64xf32>
    %c0_159 = arith.constant 0 : index
    %c960 = arith.constant 960 : index
    %213 = vector.load %arg16[%c0_159, %c960] : memref<8x1024xf32, #tpu.memory_space<vmem>>, vector<4x64xf32>
    tpu.vector_store %arg16[%c0_159, %c960], %212 {strides = array<i32>} : memref<8x1024xf32, #tpu.memory_space<vmem>>, vector<4x64xf32>,
    %c0_160 = arith.constant 0 : index
    %c0_161 = arith.constant 0 : index
    %214 = vector.load %arg7[%c0_160, %c0_161] : memref<64x16xf32, #tpu.memory_space<vmem>>, vector<64x16xf32>
    %215 = vector.extract_strided_slice %178 {offsets = [16, 0], sizes = [16, 64], strides = [1, 1]} : vector<32x64xf32> to vector<16x64xf32>
    %cst_162 = arith.constant dense<0.000000e+00> : vector<64x64xf32>
    %216 = tpu.matmul %214, %215, %cst_162 {dimension_numbers = #tpu.dot_dimension_numbers<[1], [0], [0], [1], [0, 0, 1, 1], [], []>} : vector<64x16xf32>, vector<16x64xf32>, vector<64x64xf32> -> vector<64x64xf32>
    %217 = vector.extract_strided_slice %216 {offsets = [0, 0], sizes = [4, 64], strides = [1, 1]} : vector<64x64xf32> to vector<4x64xf32>
    %c4 = arith.constant 4 : index
    %c0_163 = arith.constant 0 : index
    %218 = vector.load %arg16[%c4, %c0_163] : memref<8x1024xf32, #tpu.memory_space<vmem>>, vector<4x64xf32>
    tpu.vector_store %arg16[%c4, %c0_163], %217 {strides = array<i32>} : memref<8x1024xf32, #tpu.memory_space<vmem>>, vector<4x64xf32>,
    %219 = vector.extract_strided_slice %216 {offsets = [4, 0], sizes = [4, 64], strides = [1, 1]} : vector<64x64xf32> to vector<4x64xf32>
    %c4_164 = arith.constant 4 : index
    %c64_165 = arith.constant 64 : index
    %220 = vector.load %arg16[%c4_164, %c64_165] : memref<8x1024xf32, #tpu.memory_space<vmem>>, vector<4x64xf32>
    tpu.vector_store %arg16[%c4_164, %c64_165], %219 {strides = array<i32>} : memref<8x1024xf32, #tpu.memory_space<vmem>>, vector<4x64xf32>,
    %221 = vector.extract_strided_slice %216 {offsets = [8, 0], sizes = [4, 64], strides = [1, 1]} : vector<64x64xf32> to vector<4x64xf32>
    %c4_166 = arith.constant 4 : index
    %c128_167 = arith.constant 128 : index
    %222 = vector.load %arg16[%c4_166, %c128_167] : memref<8x1024xf32, #tpu.memory_space<vmem>>, vector<4x64xf32>
    tpu.vector_store %arg16[%c4_166, %c128_167], %221 {strides = array<i32>} : memref<8x1024xf32, #tpu.memory_space<vmem>>, vector<4x64xf32>,
    %223 = vector.extract_strided_slice %216 {offsets = [12, 0], sizes = [4, 64], strides = [1, 1]} : vector<64x64xf32> to vector<4x64xf32>
    %c4_168 = arith.constant 4 : index
    %c192_169 = arith.constant 192 : index
    %224 = vector.load %arg16[%c4_168, %c192_169] : memref<8x1024xf32, #tpu.memory_space<vmem>>, vector<4x64xf32>
    tpu.vector_store %arg16[%c4_168, %c192_169], %223 {strides = array<i32>} : memref<8x1024xf32, #tpu.memory_space<vmem>>, vector<4x64xf32>,
    %225 = vector.extract_strided_slice %216 {offsets = [16, 0], sizes = [4, 64], strides = [1, 1]} : vector<64x64xf32> to vector<4x64xf32>
    %c4_170 = arith.constant 4 : index
    %c256_171 = arith.constant 256 : index
    %226 = vector.load %arg16[%c4_170, %c256_171] : memref<8x1024xf32, #tpu.memory_space<vmem>>, vector<4x64xf32>
    tpu.vector_store %arg16[%c4_170, %c256_171], %225 {strides = array<i32>} : memref<8x1024xf32, #tpu.memory_space<vmem>>, vector<4x64xf32>,
    %227 = vector.extract_strided_slice %216 {offsets = [20, 0], sizes = [4, 64], strides = [1, 1]} : vector<64x64xf32> to vector<4x64xf32>
    %c4_172 = arith.constant 4 : index
    %c320_173 = arith.constant 320 : index
    %228 = vector.load %arg16[%c4_172, %c320_173] : memref<8x1024xf32, #tpu.memory_space<vmem>>, vector<4x64xf32>
    tpu.vector_store %arg16[%c4_172, %c320_173], %227 {strides = array<i32>} : memref<8x1024xf32, #tpu.memory_space<vmem>>, vector<4x64xf32>,
    %229 = vector.extract_strided_slice %216 {offsets = [24, 0], sizes = [4, 64], strides = [1, 1]} : vector<64x64xf32> to vector<4x64xf32>
    %c4_174 = arith.constant 4 : index
    %c384_175 = arith.constant 384 : index
    %230 = vector.load %arg16[%c4_174, %c384_175] : memref<8x1024xf32, #tpu.memory_space<vmem>>, vector<4x64xf32>
    tpu.vector_store %arg16[%c4_174, %c384_175], %229 {strides = array<i32>} : memref<8x1024xf32, #tpu.memory_space<vmem>>, vector<4x64xf32>,
    %231 = vector.extract_strided_slice %216 {offsets = [28, 0], sizes = [4, 64], strides = [1, 1]} : vector<64x64xf32> to vector<4x64xf32>
    %c4_176 = arith.constant 4 : index
    %c448_177 = arith.constant 448 : index
    %232 = vector.load %arg16[%c4_176, %c448_177] : memref<8x1024xf32, #tpu.memory_space<vmem>>, vector<4x64xf32>
    tpu.vector_store %arg16[%c4_176, %c448_177], %231 {strides = array<i32>} : memref<8x1024xf32, #tpu.memory_space<vmem>>, vector<4x64xf32>,
    %233 = vector.extract_strided_slice %216 {offsets = [32, 0], sizes = [4, 64], strides = [1, 1]} : vector<64x64xf32> to vector<4x64xf32>
    %c4_178 = arith.constant 4 : index
    %c512_179 = arith.constant 512 : index
    %234 = vector.load %arg16[%c4_178, %c512_179] : memref<8x1024xf32, #tpu.memory_space<vmem>>, vector<4x64xf32>
    tpu.vector_store %arg16[%c4_178, %c512_179], %233 {strides = array<i32>} : memref<8x1024xf32, #tpu.memory_space<vmem>>, vector<4x64xf32>,
    %235 = vector.extract_strided_slice %216 {offsets = [36, 0], sizes = [4, 64], strides = [1, 1]} : vector<64x64xf32> to vector<4x64xf32>
    %c4_180 = arith.constant 4 : index
    %c576_181 = arith.constant 576 : index
    %236 = vector.load %arg16[%c4_180, %c576_181] : memref<8x1024xf32, #tpu.memory_space<vmem>>, vector<4x64xf32>
    tpu.vector_store %arg16[%c4_180, %c576_181], %235 {strides = array<i32>} : memref<8x1024xf32, #tpu.memory_space<vmem>>, vector<4x64xf32>,
    %237 = vector.extract_strided_slice %216 {offsets = [40, 0], sizes = [4, 64], strides = [1, 1]} : vector<64x64xf32> to vector<4x64xf32>
    %c4_182 = arith.constant 4 : index
    %c640_183 = arith.constant 640 : index
    %238 = vector.load %arg16[%c4_182, %c640_183] : memref<8x1024xf32, #tpu.memory_space<vmem>>, vector<4x64xf32>
    tpu.vector_store %arg16[%c4_182, %c640_183], %237 {strides = array<i32>} : memref<8x1024xf32, #tpu.memory_space<vmem>>, vector<4x64xf32>,
    %239 = vector.extract_strided_slice %216 {offsets = [44, 0], sizes = [4, 64], strides = [1, 1]} : vector<64x64xf32> to vector<4x64xf32>
    %c4_184 = arith.constant 4 : index
    %c704_185 = arith.constant 704 : index
    %240 = vector.load %arg16[%c4_184, %c704_185] : memref<8x1024xf32, #tpu.memory_space<vmem>>, vector<4x64xf32>
    tpu.vector_store %arg16[%c4_184, %c704_185], %239 {strides = array<i32>} : memref<8x1024xf32, #tpu.memory_space<vmem>>, vector<4x64xf32>,
    %241 = vector.extract_strided_slice %216 {offsets = [48, 0], sizes = [4, 64], strides = [1, 1]} : vector<64x64xf32> to vector<4x64xf32>
    %c4_186 = arith.constant 4 : index
    %c768_187 = arith.constant 768 : index
    %242 = vector.load %arg16[%c4_186, %c768_187] : memref<8x1024xf32, #tpu.memory_space<vmem>>, vector<4x64xf32>
    tpu.vector_store %arg16[%c4_186, %c768_187], %241 {strides = array<i32>} : memref<8x1024xf32, #tpu.memory_space<vmem>>, vector<4x64xf32>,
    %243 = vector.extract_strided_slice %216 {offsets = [52, 0], sizes = [4, 64], strides = [1, 1]} : vector<64x64xf32> to vector<4x64xf32>
    %c4_188 = arith.constant 4 : index
    %c832_189 = arith.constant 832 : index
    %244 = vector.load %arg16[%c4_188, %c832_189] : memref<8x1024xf32, #tpu.memory_space<vmem>>, vector<4x64xf32>
    tpu.vector_store %arg16[%c4_188, %c832_189], %243 {strides = array<i32>} : memref<8x1024xf32, #tpu.memory_space<vmem>>, vector<4x64xf32>,
    %245 = vector.extract_strided_slice %216 {offsets = [56, 0], sizes = [4, 64], strides = [1, 1]} : vector<64x64xf32> to vector<4x64xf32>
    %c4_190 = arith.constant 4 : index
    %c896_191 = arith.constant 896 : index
    %246 = vector.load %arg16[%c4_190, %c896_191] : memref<8x1024xf32, #tpu.memory_space<vmem>>, vector<4x64xf32>
    tpu.vector_store %arg16[%c4_190, %c896_191], %245 {strides = array<i32>} : memref<8x1024xf32, #tpu.memory_space<vmem>>, vector<4x64xf32>,
    %247 = vector.extract_strided_slice %216 {offsets = [60, 0], sizes = [4, 64], strides = [1, 1]} : vector<64x64xf32> to vector<4x64xf32>
    %c4_192 = arith.constant 4 : index
    %c960_193 = arith.constant 960 : index
    %248 = vector.load %arg16[%c4_192, %c960_193] : memref<8x1024xf32, #tpu.memory_space<vmem>>, vector<4x64xf32>
    tpu.vector_store %arg16[%c4_192, %c960_193], %247 {strides = array<i32>} : memref<8x1024xf32, #tpu.memory_space<vmem>>, vector<4x64xf32>,
    %c0_194 = arith.constant 0 : index
    %c0_195 = arith.constant 0 : index
    %249 = vector.load %arg16[%c0_194, %c0_195] : memref<8x1024xf32, #tpu.memory_space<vmem>>, vector<8x1024xf32>
    %c0_196 = arith.constant 0 : index
    %c0_197 = arith.constant 0 : index
    %250 = vector.load %arg8[%c0_196, %c0_197] : memref<1024x128xf32, #tpu.memory_space<vmem>>, vector<1024x128xf32>
    %cst_198 = arith.constant dense<0.000000e+00> : vector<8x128xf32>
    %251 = tpu.matmul %249, %250, %cst_198 {dimension_numbers = #tpu.dot_dimension_numbers<[1], [0], [0], [1], [0, 0, 1, 1], [], []>} : vector<8x1024xf32>, vector<1024x128xf32>, vector<8x128xf32> -> vector<8x128xf32>
    %c0_199 = arith.constant 0 : index
    %c0_200 = arith.constant 0 : index
    %252 = vector.load %arg9[%c0_199, %c0_200] : memref<2x128xf32, #tpu.memory_space<vmem>>, vector<1x128xf32>
    %c1_201 = arith.constant 1 : index
    %c0_202 = arith.constant 0 : index
    %253 = vector.load %arg9[%c1_201, %c0_202] : memref<2x128xf32, #tpu.memory_space<vmem>>, vector<1x128xf32>
    %cst_203 = arith.constant dense<0.000000e+00> : vector<128xf32>
    %254 = vector.multi_reduction <add>, %251, %cst_203 [0] : vector<8x128xf32> to vector<128xf32>
    %255 = vector.shape_cast %254 : vector<128xf32> to vector<1x128xf32>
    %cst_204 = arith.constant 8.000000e+00 : f32
    %256 = vector.broadcast %cst_204 : f32 to vector<1x128xf32>
    %257 = arith.divf %255, %256 : vector<1x128xf32>
    %258 = vector.broadcast %257 : vector<1x128xf32> to vector<8x128xf32>
    %259 = arith.subf %251, %258 : vector<8x128xf32>
    %260 = arith.mulf %259, %259 : vector<8x128xf32>
    %cst_205 = arith.constant dense<0.000000e+00> : vector<128xf32>
    %261 = vector.multi_reduction <add>, %260, %cst_205 [0] : vector<8x128xf32> to vector<128xf32>
    %262 = vector.shape_cast %261 : vector<128xf32> to vector<1x128xf32>
    %cst_206 = arith.constant 8.000000e+00 : f32
    %263 = vector.broadcast %cst_206 : f32 to vector<1x128xf32>
    %264 = arith.divf %262, %263 : vector<1x128xf32>
    %265 = vector.broadcast %257 : vector<1x128xf32> to vector<8x128xf32>
    %266 = arith.subf %251, %265 : vector<8x128xf32>
    %cst_207 = arith.constant 9.99999974E-6 : f32
    %267 = vector.broadcast %cst_207 : f32 to vector<1x128xf32>
    %268 = arith.addf %264, %267 : vector<1x128xf32>
    %269 = math.rsqrt %268 : vector<1x128xf32>
    %270 = vector.broadcast %269 : vector<1x128xf32> to vector<8x128xf32>
    %271 = arith.mulf %266, %270 : vector<8x128xf32>
    %272 = vector.broadcast %252 : vector<1x128xf32> to vector<8x128xf32>
    %273 = arith.mulf %271, %272 : vector<8x128xf32>
    %274 = vector.broadcast %253 : vector<1x128xf32> to vector<8x128xf32>
    %275 = arith.addf %273, %274 : vector<8x128xf32>
    %cst_208 = arith.constant 2.000000e-01 : f32
    %276 = vector.broadcast %cst_208 : f32 to vector<8x128xf32>
    %277 = arith.mulf %276, %275 : vector<8x128xf32>
    %278 = arith.maximumf %275, %277 : vector<8x128xf32>
    %c0_209 = arith.constant 0 : index
    %c0_210 = arith.constant 0 : index
    %279 = vector.load %arg10[%c0_209, %c0_210] : memref<8x128xf32, #tpu.memory_space<vmem>>, vector<8x128xf32>
    %280 = arith.mulf %278, %279 : vector<8x128xf32>
    %c0_211 = arith.constant 0 : index
    %c0_212 = arith.constant 0 : index
    %281 = vector.load %arg11[%c0_211, %c0_212] : memref<2x8xf32, #tpu.memory_space<vmem>>, vector<2x8xf32>
    %cst_213 = arith.constant dense<0.000000e+00> : vector<2x128xf32>
    %282 = tpu.matmul %281, %280, %cst_213 {dimension_numbers = #tpu.dot_dimension_numbers<[1], [0], [0], [1], [0, 0, 1, 1], [], []>} : vector<2x8xf32>, vector<8x128xf32>, vector<2x128xf32> -> vector<2x128xf32>
    %cst_214 = arith.constant dense<0.000000e+00> : vector<2xf32>
    %283 = vector.multi_reduction <add>, %282, %cst_214 [1] : vector<2x128xf32> to vector<2xf32>
    %284 = vector.shape_cast %283 : vector<2xf32> to vector<2x1xf32>
    %c0_215 = arith.constant 0 : index
    %c0_216 = arith.constant 0 : index
    %285 = vector.load %arg12[%c0_215, %c0_216] : memref<1x1xf32, #tpu.memory_space<vmem>>, vector<1x1xf32>
    %286 = vector.broadcast %285 : vector<1x1xf32> to vector<2x1xf32>
    %287 = arith.addf %284, %286 : vector<2x1xf32>
    %c0_217 = arith.constant 0 : index
    %c0_218 = arith.constant 0 : index
    %288 = vector.load %arg13[%c0_217, %c0_218] : memref<2x1xf32, #tpu.memory_space<vmem>>, vector<2x1xf32>
    tpu.vector_store %arg13[%c0_217, %c0_218], %287 {strides = array<i32>} : memref<2x1xf32, #tpu.memory_space<vmem>>, vector<2x1xf32>,
    return
  }
}

</mosaic_0001>

<llo_original>
// kernel: st_discriminator_forward.1
$region0: #{st_discriminator_forward.1}
  #allocation0 [shape = 'u32[]', space=smem, size = 0x4, offset = 0x4, fixed_abs, tag = 'smem constant byte address 0x4 - core index']
  #allocation1 [shape = 'u32[72,128]{1,0:T(1,128)}', space=vmem, size = 0x9000, scoped, tag = 'internal scratch']
  #allocation2 [shape = 'f32[128,48]{1,0:T(8,128)}', space=vmem, size = 0x10000, scoped, tag = 'scratch operand']
  #allocation3 [shape = 'f32[32,512]{1,0:T(8,128)}', space=vmem, size = 0x10000, scoped, tag = 'scratch operand']
  #allocation4 [shape = 'f32[8,1024]{1,0:T(8,128)}', space=vmem, size = 0x8000, scoped, tag = 'scratch operand']
  #allocation5 [shape = 'f32[1,1]{1,0:T(1,128)S(1)}', space=vmem, size = 0x200, scoped, tag = 'scoped memory for st_discriminator_forward.1']
  %s0 = inlined_call_operand.vmem [shape: f32[512,3], index: 0, kind: input, shape index: {}]
  %s1 = inlined_call_operand.hbm [shape: f32[1024,256], index: 1, kind: input, shape index: {}]
  %s2 = inlined_call_operand.vmem [shape: f32[48,32], index: 2, kind: input, shape index: {}]
  %s3 = inlined_call_operand.vmem [shape: f32[1,32], index: 3, kind: input, shape index: {}]
  %s4 = inlined_call_operand.vmem [shape: f32[256,64], index: 4, kind: input, shape index: {}]
  %s5 = inlined_call_operand.vmem [shape: f32[512,64], index: 5, kind: input, shape index: {}]
  %s6 = inlined_call_operand.vmem [shape: f32[2,64], index: 6, kind: input, shape index: {}]
  %s7 = inlined_call_operand.vmem [shape: f32[64,16], index: 7, kind: input, shape index: {}]
  %s8 = inlined_call_operand.vmem [shape: f32[1024,128], index: 8, kind: input, shape index: {}]
  %s9 = inlined_call_operand.vmem [shape: f32[2,128], index: 9, kind: input, shape index: {}]
  %s10 = inlined_call_operand.vmem [shape: f32[8,128], index: 10, kind: input, shape index: {}]
  %s11 = inlined_call_operand.vmem [shape: f32[2,8], index: 11, kind: input, shape index: {}]
  %s12 = inlined_call_operand.<no memory space> [shape: f32[1,1], index: 12, kind: input, shape index: {}]
  %s13 = inlined_call_operand.vmem [shape: f32[2,1], index: 13, kind: output, shape index: {}]
  %s14 = sld [smem:[#allocation0]]
  $region66: #{st_discriminator_forward.1} parent=0
    _
  %s16 = ssub.s32 1, %s14
  %s17 = scalar_select 0, %s16, %s14
  %v18 = vstv %s12
  %19 = vst [vmem:[#allocation5] sm:$0x1] %v18
  $region1: #{st_discriminator_forward.1} parent=0
    #allocation6 [shape = 'u8[1048576]{0}', space=vmem, size = 0x100000, scoped, tag = 'input window, operand 1, single buffered']
    #allocation7 [shape = 's32[1]{0}', space=sflag, size = 0x4, scoped, tag = 'scoped memory for st_discriminator_forward.1']
    %20 = vsyncpa [#allocation7], 0
    // Predicated region
    $region2: #{st_discriminator_forward.1} parent=1 // pred_check
      _
    $region3: #{st_discriminator_forward.1} parent=1 // pred_check_branch
      %22 = sbr.rel (0) target = $region5
    $region4: #{st_discriminator_forward.1} parent=1 // pred_region
      _
    $region5: #{st_discriminator_forward.1} parent=1 // pred_fallthru
      _
    // Predicated region
    $region6: #{st_discriminator_forward.1} parent=1 // pred_check
      _
    $region7: #{st_discriminator_forward.1} parent=1 // pred_check_branch
      %24 = sbr.rel (0) target = $region9
    $region8: #{st_discriminator_forward.1} parent=1 // pred_region
      %26 = vsyncadd [#allocation7], 0
      %s27 = sshll.u32 %s1, 4
      %s28 = int_to_ptr.hbm [resolvable:$true] %s27
      %s29 = sshll.u32 [#allocation6], 4
      %s30 = int_to_ptr.vmem [resolvable:$true] %s29
      %35 = dma.hbm_to_vmem [thread:$0]  %s28, 32768, %s30, [#allocation7], 256, 256, 16
    $region9: #{st_discriminator_forward.1} parent=1 // pred_fallthru
      _
    // Predicated region
    $region10: #{st_discriminator_forward.1} parent=1 // pred_check
      _
    $region11: #{st_discriminator_forward.1} parent=1 // pred_check_branch
      %37 = sbr.rel (0) target = $region13
    $region12: #{st_discriminator_forward.1} parent=1 // pred_region
      _
    $region13: #{st_discriminator_forward.1} parent=1 // pred_fallthru
      _
    // Predicated region
    $region14: #{st_discriminator_forward.1} parent=1 // pred_check
      _
    $region15: #{st_discriminator_forward.1} parent=1 // pred_check_branch
      %39 = sbr.rel (0) target = $region17
    $region16: #{st_discriminator_forward.1} parent=1 // pred_region
      _
    $region17: #{st_discriminator_forward.1} parent=1 // pred_fallthru
      _
    // Predicated region
    $region18: #{st_discriminator_forward.1} parent=1 // pred_check
      _
    $region19: #{st_discriminator_forward.1} parent=1 // pred_check_branch
      %41 = sbr.rel (0) target = $region21
    $region20: #{st_discriminator_forward.1} parent=1 // pred_region
      _
    $region21: #{st_discriminator_forward.1} parent=1 // pred_fallthru
      _
    // Predicated region
    $region22: #{st_discriminator_forward.1} parent=1 // pred_check
      _
    $region23: #{st_discriminator_forward.1} parent=1 // pred_check_branch
      %43 = sbr.rel (0) target = $region25
    $region24: #{st_discriminator_forward.1} parent=1 // pred_region
      _
    $region25: #{st_discriminator_forward.1} parent=1 // pred_fallthru
      _
    // Predicated region
    $region26: #{st_discriminator_forward.1} parent=1 // pred_check
      _
    $region27: #{st_discriminator_forward.1} parent=1 // pred_check_branch
      %45 = sbr.rel (0) target = $region29
    $region28: #{st_discriminator_forward.1} parent=1 // pred_region
      _
    $region29: #{st_discriminator_forward.1} parent=1 // pred_fallthru
      _
    // Predicated region
    $region30: #{st_discriminator_forward.1} parent=1 // pred_check
      _
    $region31: #{st_discriminator_forward.1} parent=1 // pred_check_branch
      %47 = sbr.rel (0) target = $region33
    $region32: #{st_discriminator_forward.1} parent=1 // pred_region
      _
    $region33: #{st_discriminator_forward.1} parent=1 // pred_fallthru
      _
    // Predicated region
    $region34: #{st_discriminator_forward.1} parent=1 // pred_check
      _
    $region35: #{st_discriminator_forward.1} parent=1 // pred_check_branch
      %49 = sbr.rel (0) target = $region37
    $region36: #{st_discriminator_forward.1} parent=1 // pred_region
      _
    $region37: #{st_discriminator_forward.1} parent=1 // pred_fallthru
      _
    // Predicated region
    $region38: #{st_discriminator_forward.1} parent=1 // pred_check
      _
    $region39: #{st_discriminator_forward.1} parent=1 // pred_check_branch
      %51 = sbr.rel (0) target = $region41
    $region40: #{st_discriminator_forward.1} parent=1 // pred_region
      _
    $region41: #{st_discriminator_forward.1} parent=1 // pred_fallthru
      _
    // Predicated region
    $region42: #{st_discriminator_forward.1} parent=1 // pred_check
      _
    $region43: #{st_discriminator_forward.1} parent=1 // pred_check_branch
      %53 = sbr.rel (0) target = $region45
    $region44: #{st_discriminator_forward.1} parent=1 // pred_region
      _
    $region45: #{st_discriminator_forward.1} parent=1 // pred_fallthru
      _
    // Predicated region
    $region46: #{st_discriminator_forward.1} parent=1 // pred_check
      _
    $region47: #{st_discriminator_forward.1} parent=1 // pred_check_branch
      %55 = sbr.rel (0) target = $region49
    $region48: #{st_discriminator_forward.1} parent=1 // pred_region
      _
    $region49: #{st_discriminator_forward.1} parent=1 // pred_fallthru
      _
    // Predicated region
    $region50: #{st_discriminator_forward.1} parent=1 // pred_check
      _
    $region51: #{st_discriminator_forward.1} parent=1 // pred_check_branch
      %57 = sbr.rel (0) target = $region53
    $region52: #{st_discriminator_forward.1} parent=1 // pred_region
      _
    $region53: #{st_discriminator_forward.1} parent=1 // pred_fallthru
      _
    // Predicated region
    $region54: #{st_discriminator_forward.1} parent=1 // pred_check
      _
    $region55: #{st_discriminator_forward.1} parent=1 // pred_check_branch
      %59 = sbr.rel (0) target = $region57
    $region56: #{st_discriminator_forward.1} parent=1 // pred_region
      %61 = dma.done [#allocation7], 32768
    $region57: #{st_discriminator_forward.1} parent=1 // pred_fallthru
      _
    %v62 = vld [vmem:[#allocation6] sm:$0xff]
    %v63 = vld [vmem:[#allocation6 + $0x8] sm:$0xff]
    %v64 = vld [vmem:[#allocation6 + $0x10] sm:$0xff]
    %v65 = vld [vmem:[#allocation6 + $0x18] sm:$0xff]
    %v66 = vld [vmem:[#allocation6 + $0x20] sm:$0xff]
    %v67 = vld [vmem:[#allocation6 + $0x28] sm:$0xff]
    %v68 = vld [vmem:[#allocation6 + $0x30] sm:$0xff]
    %v69 = vld [vmem:[#allocation6 + $0x38] sm:$0xff]
    %v70 = vld [vmem:[#allocation6 + $0x40] sm:$0xff]
    %v71 = vld [vmem:[#allocation6 + $0x48] sm:$0xff]
    %v72 = vld [vmem:[#allocation6 + $0x50] sm:$0xff]
    %v73 = vld [vmem:[#allocation6 + $0x58] sm:$0xff]
    %v74 = vld [vmem:[#allocation6 + $0x60] sm:$0xff]
    %v75 = vld [vmem:[#allocation6 + $0x68] sm:$0xff]
    %v76 = vld [vmem:[#allocation6 + $0x70] sm:$0xff]
    %v77 = vld [vmem:[#allocation6 + $0x78] sm:$0xff]
    %v78 = vld [vmem:[#allocation6 + $0x80] sm:$0xff]
    %v79 = vld [vmem:[#allocation6 + $0x88] sm:$0xff]
    %v80 = vld [vmem:[#allocation6 + $0x90] sm:$0xff]
    %v81 = vld [vmem:[#allocation6 + $0x98] sm:$0xff]
    %v82 = vld [vmem:[#allocation6 + $0xa0] sm:$0xff]
    %v83 = vld [vmem:[#allocation6 + $0xa8] sm:$0xff]
    %v84 = vld [vmem:[#allocation6 + $0xb0] sm:$0xff]
    %v85 = vld [vmem:[#allocation6 + $0xb8] sm:$0xff]
    %v86 = vld [vmem:[#allocation6 + $0xc0] sm:$0xff]
    %v87 = vld [vmem:[#allocation6 + $0xc8] sm:$0xff]
    %v88 = vld [vmem:[#allocation6 + $0xd0] sm:$0xff]
    %v89 = vld [vmem:[#allocation6 + $0xd8] sm:$0xff]
    %v90 = vld [vmem:[#allocation6 + $0xe0] sm:$0xff]
    %v91 = vld [vmem:[#allocation6 + $0xe8] sm:$0xff]
    %v92 = vld [vmem:[#allocation6 + $0xf0] sm:$0xff]
    %v93 = vld [vmem:[#allocation6 + $0xf8] sm:$0xff]
    %v94 = vld [vmem:[#allocation6 + $0x100] sm:$0xff]
    %v95 = vld [vmem:[#allocation6 + $0x108] sm:$0xff]
    %v96 = vld [vmem:[#allocation6 + $0x110] sm:$0xff]
    %v97 = vld [vmem:[#allocation6 + $0x118] sm:$0xff]
    %v98 = vld [vmem:[#allocation6 + $0x120] sm:$0xff]
    %v99 = vld [vmem:[#allocation6 + $0x128] sm:$0xff]
    %v100 = vld [vmem:[#allocation6 + $0x130] sm:$0xff]
    %v101 = vld [vmem:[#allocation6 + $0x138] sm:$0xff]
    %v102 = vld [vmem:[#allocation6 + $0x140] sm:$0xff]
    %v103 = vld [vmem:[#allocation6 + $0x148] sm:$0xff]
    %v104 = vld [vmem:[#allocation6 + $0x150] sm:$0xff]
    %v105 = vld [vmem:[#allocation6 + $0x158] sm:$0xff]
    %v106 = vld [vmem:[#allocation6 + $0x160] sm:$0xff]
    %v107 = vld [vmem:[#allocation6 + $0x168] sm:$0xff]
    %v108 = vld [vmem:[#allocation6 + $0x170] sm:$0xff]
    %v109 = vld [vmem:[#allocation6 + $0x178] sm:$0xff]
    %v110 = vld [vmem:[#allocation6 + $0x180] sm:$0xff]
    %v111 = vld [vmem:[#allocation6 + $0x188] sm:$0xff]
    %v112 = vld [vmem:[#allocation6 + $0x190] sm:$0xff]
    %v113 = vld [vmem:[#allocation6 + $0x198] sm:$0xff]
    %v114 = vld [vmem:[#allocation6 + $0x1a0] sm:$0xff]
    %v115 = vld [vmem:[#allocation6 + $0x1a8] sm:$0xff]
    %v116 = vld [vmem:[#allocation6 + $0x1b0] sm:$0xff]
    %v117 = vld [vmem:[#allocation6 + $0x1b8] sm:$0xff]
    %v118 = vld [vmem:[#allocation6 + $0x1c0] sm:$0xff]
    %v119 = vld [vmem:[#allocation6 + $0x1c8] sm:$0xff]
    %v120 = vld [vmem:[#allocation6 + $0x1d0] sm:$0xff]
    %v121 = vld [vmem:[#allocation6 + $0x1d8] sm:$0xff]
    %v122 = vld [vmem:[#allocation6 + $0x1e0] sm:$0xff]
    %v123 = vld [vmem:[#allocation6 + $0x1e8] sm:$0xff]
    %v124 = vld [vmem:[#allocation6 + $0x1f0] sm:$0xff]
    %v125 = vld [vmem:[#allocation6 + $0x1f8] sm:$0xff]
    %v126 = vld [vmem:[#allocation6 + $0x200] sm:$0xff]
    %v127 = vld [vmem:[#allocation6 + $0x208] sm:$0xff]
    %v128 = vld [vmem:[#allocation6 + $0x210] sm:$0xff]
    %v129 = vld [vmem:[#allocation6 + $0x218] sm:$0xff]
    %v130 = vld [vmem:[#allocation6 + $0x220] sm:$0xff]
    %v131 = vld [vmem:[#allocation6 + $0x228] sm:$0xff]
    %v132 = vld [vmem:[#allocation6 + $0x230] sm:$0xff]
    %v133 = vld [vmem:[#allocation6 + $0x238] sm:$0xff]
    %v134 = vld [vmem:[#allocation6 + $0x240] sm:$0xff]
    %v135 = vld [vmem:[#allocation6 + $0x248] sm:$0xff]
    %v136 = vld [vmem:[#allocation6 + $0x250] sm:$0xff]
    %v137 = vld [vmem:[#allocation6 + $0x258] sm:$0xff]
    %v138 = vld [vmem:[#allocation6 + $0x260] sm:$0xff]
    %v139 = vld [vmem:[#allocation6 + $0x268] sm:$0xff]
    %v140 = vld [vmem:[#allocation6 + $0x270] sm:$0xff]
    %v141 = vld [vmem:[#allocation6 + $0x278] sm:$0xff]
    %v142 = vld [vmem:[#allocation6 + $0x280] sm:$0xff]
    %v143 = vld [vmem:[#allocation6 + $0x288] sm:$0xff]
    %v144 = vld [vmem:[#allocation6 + $0x290] sm:$0xff]
    %v145 = vld [vmem:[#allocation6 + $0x298] sm:$0xff]
    %v146 = vld [vmem:[#allocation6 + $0x2a0] sm:$0xff]
    %v147 = vld [vmem:[#allocation6 + $0x2a8] sm:$0xff]
    %v148 = vld [vmem:[#allocation6 + $0x2b0] sm:$0xff]
    %v149 = vld [vmem:[#allocation6 + $0x2b8] sm:$0xff]
    %v150 = vld [vmem:[#allocation6 + $0x2c0] sm:$0xff]
    %v151 = vld [vmem:[#allocation6 + $0x2c8] sm:$0xff]
    %v152 = vld [vmem:[#allocation6 + $0x2d0] sm:$0xff]
    %v153 = vld [vmem:[#allocation6 + $0x2d8] sm:$0xff]
    %v154 = vld [vmem:[#allocation6 + $0x2e0] sm:$0xff]
    %v155 = vld [vmem:[#allocation6 + $0x2e8] sm:$0xff]
    %v156 = vld [vmem:[#allocation6 + $0x2f0] sm:$0xff]
    %v157 = vld [vmem:[#allocation6 + $0x2f8] sm:$0xff]
    %v158 = vld [vmem:[#allocation6 + $0x300] sm:$0xff]
    %v159 = vld [vmem:[#allocation6 + $0x308] sm:$0xff]
    %v160 = vld [vmem:[#allocation6 + $0x310] sm:$0xff]
    %v161 = vld [vmem:[#allocation6 + $0x318] sm:$0xff]
    %v162 = vld [vmem:[#allocation6 + $0x320] sm:$0xff]
    %v163 = vld [vmem:[#allocation6 + $0x328] sm:$0xff]
    %v164 = vld [vmem:[#allocation6 + $0x330] sm:$0xff]
    %v165 = vld [vmem:[#allocation6 + $0x338] sm:$0xff]
    %v166 = vld [vmem:[#allocation6 + $0x340] sm:$0xff]
    %v167 = vld [vmem:[#allocation6 + $0x348] sm:$0xff]
    %v168 = vld [vmem:[#allocation6 + $0x350] sm:$0xff]
    %v169 = vld [vmem:[#allocation6 + $0x358] sm:$0xff]
    %v170 = vld [vmem:[#allocation6 + $0x360] sm:$0xff]
    %v171 = vld [vmem:[#allocation6 + $0x368] sm:$0xff]
    %v172 = vld [vmem:[#allocation6 + $0x370] sm:$0xff]
    %v173 = vld [vmem:[#allocation6 + $0x378] sm:$0xff]
    %v174 = vld [vmem:[#allocation6 + $0x380] sm:$0xff]
    %v175 = vld [vmem:[#allocation6 + $0x388] sm:$0xff]
    %v176 = vld [vmem:[#allocation6 + $0x390] sm:$0xff]
    %v177 = vld [vmem:[#allocation6 + $0x398] sm:$0xff]
    %v178 = vld [vmem:[#allocation6 + $0x3a0] sm:$0xff]
    %v179 = vld [vmem:[#allocation6 + $0x3a8] sm:$0xff]
    %v180 = vld [vmem:[#allocation6 + $0x3b0] sm:$0xff]
    %v181 = vld [vmem:[#allocation6 + $0x3b8] sm:$0xff]
    %v182 = vld [vmem:[#allocation6 + $0x3c0] sm:$0xff]
    %v183 = vld [vmem:[#allocation6 + $0x3c8] sm:$0xff]
    %v184 = vld [vmem:[#allocation6 + $0x3d0] sm:$0xff]
    %v185 = vld [vmem:[#allocation6 + $0x3d8] sm:$0xff]
    %v186 = vld [vmem:[#allocation6 + $0x3e0] sm:$0xff]
    %v187 = vld [vmem:[#allocation6 + $0x3e8] sm:$0xff]
    %v188 = vld [vmem:[#allocation6 + $0x3f0] sm:$0xff]
    %v189 = vld [vmem:[#allocation6 + $0x3f8] sm:$0xff]
    %v190 = vld [vmem:[#allocation6 + $0x400] sm:$0xff]
    %v191 = vld [vmem:[#allocation6 + $0x408] sm:$0xff]
    %v192 = vld [vmem:[#allocation6 + $0x410] sm:$0xff]
    %v193 = vld [vmem:[#allocation6 + $0x418] sm:$0xff]
    %v194 = vld [vmem:[#allocation6 + $0x420] sm:$0xff]
    %v195 = vld [vmem:[#allocation6 + $0x428] sm:$0xff]
    %v196 = vld [vmem:[#allocation6 + $0x430] sm:$0xff]
    %v197 = vld [vmem:[#allocation6 + $0x438] sm:$0xff]
    %v198 = vld [vmem:[#allocation6 + $0x440] sm:$0xff]
    %v199 = vld [vmem:[#allocation6 + $0x448] sm:$0xff]
    %v200 = vld [vmem:[#allocation6 + $0x450] sm:$0xff]
    %v201 = vld [vmem:[#allocation6 + $0x458] sm:$0xff]
    %v202 = vld [vmem:[#allocation6 + $0x460] sm:$0xff]
    %v203 = vld [vmem:[#allocation6 + $0x468] sm:$0xff]
    %v204 = vld [vmem:[#allocation6 + $0x470] sm:$0xff]
    %v205 = vld [vmem:[#allocation6 + $0x478] sm:$0xff]
    %v206 = vld [vmem:[#allocation6 + $0x480] sm:$0xff]
    %v207 = vld [vmem:[#allocation6 + $0x488] sm:$0xff]
    %v208 = vld [vmem:[#allocation6 + $0x490] sm:$0xff]
    %v209 = vld [vmem:[#allocation6 + $0x498] sm:$0xff]
    %v210 = vld [vmem:[#allocation6 + $0x4a0] sm:$0xff]
    %v211 = vld [vmem:[#allocation6 + $0x4a8] sm:$0xff]
    %v212 = vld [vmem:[#allocation6 + $0x4b0] sm:$0xff]
    %v213 = vld [vmem:[#allocation6 + $0x4b8] sm:$0xff]
    %v214 = vld [vmem:[#allocation6 + $0x4c0] sm:$0xff]
    %v215 = vld [vmem:[#allocation6 + $0x4c8] sm:$0xff]
    %v216 = vld [vmem:[#allocation6 + $0x4d0] sm:$0xff]
    %v217 = vld [vmem:[#allocation6 + $0x4d8] sm:$0xff]
    %v218 = vld [vmem:[#allocation6 + $0x4e0] sm:$0xff]
    %v219 = vld [vmem:[#allocation6 + $0x4e8] sm:$0xff]
    %v220 = vld [vmem:[#allocation6 + $0x4f0] sm:$0xff]
    %v221 = vld [vmem:[#allocation6 + $0x4f8] sm:$0xff]
    %v222 = vld [vmem:[#allocation6 + $0x500] sm:$0xff]
    %v223 = vld [vmem:[#allocation6 + $0x508] sm:$0xff]
    %v224 = vld [vmem:[#allocation6 + $0x510] sm:$0xff]
    %v225 = vld [vmem:[#allocation6 + $0x518] sm:$0xff]
    %v226 = vld [vmem:[#allocation6 + $0x520] sm:$0xff]
    %v227 = vld [vmem:[#allocation6 + $0x528] sm:$0xff]
    %v228 = vld [vmem:[#allocation6 + $0x530] sm:$0xff]
    %v229 = vld [vmem:[#allocation6 + $0x538] sm:$0xff]
    %v230 = vld [vmem:[#allocation6 + $0x540] sm:$0xff]
    %v231 = vld [vmem:[#allocation6 + $0x548] sm:$0xff]
    %v232 = vld [vmem:[#allocation6 + $0x550] sm:$0xff]
    %v233 = vld [vmem:[#allocation6 + $0x558] sm:$0xff]
    %v234 = vld [vmem:[#allocation6 + $0x560] sm:$0xff]
    %v235 = vld [vmem:[#allocation6 + $0x568] sm:$0xff]
    %v236 = vld [vmem:[#allocation6 + $0x570] sm:$0xff]
    %v237 = vld [vmem:[#allocation6 + $0x578] sm:$0xff]
    %v238 = vld [vmem:[#allocation6 + $0x580] sm:$0xff]
    %v239 = vld [vmem:[#allocation6 + $0x588] sm:$0xff]
    %v240 = vld [vmem:[#allocation6 + $0x590] sm:$0xff]
    %v241 = vld [vmem:[#allocation6 + $0x598] sm:$0xff]
    %v242 = vld [vmem:[#allocation6 + $0x5a0] sm:$0xff]
    %v243 = vld [vmem:[#allocation6 + $0x5a8] sm:$0xff]
    %v244 = vld [vmem:[#allocation6 + $0x5b0] sm:$0xff]
    %v245 = vld [vmem:[#allocation6 + $0x5b8] sm:$0xff]
    %v246 = vld [vmem:[#allocation6 + $0x5c0] sm:$0xff]
    %v247 = vld [vmem:[#allocation6 + $0x5c8] sm:$0xff]
    %v248 = vld [vmem:[#allocation6 + $0x5d0] sm:$0xff]
    %v249 = vld [vmem:[#allocation6 + $0x5d8] sm:$0xff]
    %v250 = vld [vmem:[#allocation6 + $0x5e0] sm:$0xff]
    %v251 = vld [vmem:[#allocation6 + $0x5e8] sm:$0xff]
    %v252 = vld [vmem:[#allocation6 + $0x5f0] sm:$0xff]
    %v253 = vld [vmem:[#allocation6 + $0x5f8] sm:$0xff]
    %v254 = vld [vmem:[#allocation6 + $0x600] sm:$0xff]
    %v255 = vld [vmem:[#allocation6 + $0x608] sm:$0xff]
    %v256 = vld [vmem:[#allocation6 + $0x610] sm:$0xff]
    %v257 = vld [vmem:[#allocation6 + $0x618] sm:$0xff]
    %v258 = vld [vmem:[#allocation6 + $0x620] sm:$0xff]
    %v259 = vld [vmem:[#allocation6 + $0x628] sm:$0xff]
    %v260 = vld [vmem:[#allocation6 + $0x630] sm:$0xff]
    %v261 = vld [vmem:[#allocation6 + $0x638] sm:$0xff]
    %v262 = vld [vmem:[#allocation6 + $0x640] sm:$0xff]
    %v263 = vld [vmem:[#allocation6 + $0x648] sm:$0xff]
    %v264 = vld [vmem:[#allocation6 + $0x650] sm:$0xff]
    %v265 = vld [vmem:[#allocation6 + $0x658] sm:$0xff]
    %v266 = vld [vmem:[#allocation6 + $0x660] sm:$0xff]
    %v267 = vld [vmem:[#allocation6 + $0x668] sm:$0xff]
    %v268 = vld [vmem:[#allocation6 + $0x670] sm:$0xff]
    %v269 = vld [vmem:[#allocation6 + $0x678] sm:$0xff]
    %v270 = vld [vmem:[#allocation6 + $0x680] sm:$0xff]
    %v271 = vld [vmem:[#allocation6 + $0x688] sm:$0xff]
    %v272 = vld [vmem:[#allocation6 + $0x690] sm:$0xff]
    %v273 = vld [vmem:[#allocation6 + $0x698] sm:$0xff]
    %v274 = vld [vmem:[#allocation6 + $0x6a0] sm:$0xff]
    %v275 = vld [vmem:[#allocation6 + $0x6a8] sm:$0xff]
    %v276 = vld [vmem:[#allocation6 + $0x6b0] sm:$0xff]
    %v277 = vld [vmem:[#allocation6 + $0x6b8] sm:$0xff]
    %v278 = vld [vmem:[#allocation6 + $0x6c0] sm:$0xff]
    %v279 = vld [vmem:[#allocation6 + $0x6c8] sm:$0xff]
    %v280 = vld [vmem:[#allocation6 + $0x6d0] sm:$0xff]
    %v281 = vld [vmem:[#allocation6 + $0x6d8] sm:$0xff]
    %v282 = vld [vmem:[#allocation6 + $0x6e0] sm:$0xff]
    %v283 = vld [vmem:[#allocation6 + $0x6e8] sm:$0xff]
    %v284 = vld [vmem:[#allocation6 + $0x6f0] sm:$0xff]
    %v285 = vld [vmem:[#allocation6 + $0x6f8] sm:$0xff]
    %v286 = vld [vmem:[#allocation6 + $0x700] sm:$0xff]
    %v287 = vld [vmem:[#allocation6 + $0x708] sm:$0xff]
    %v288 = vld [vmem:[#allocation6 + $0x710] sm:$0xff]
    %v289 = vld [vmem:[#allocation6 + $0x718] sm:$0xff]
    %v290 = vld [vmem:[#allocation6 + $0x720] sm:$0xff]
    %v291 = vld [vmem:[#allocation6 + $0x728] sm:$0xff]
    %v292 = vld [vmem:[#allocation6 + $0x730] sm:$0xff]
    %v293 = vld [vmem:[#allocation6 + $0x738] sm:$0xff]
    %v294 = vld [vmem:[#allocation6 + $0x740] sm:$0xff]
    %v295 = vld [vmem:[#allocation6 + $0x748] sm:$0xff]
    %v296 = vld [vmem:[#allocation6 + $0x750] sm:$0xff]
    %v297 = vld [vmem:[#allocation6 + $0x758] sm:$0xff]
    %v298 = vld [vmem:[#allocation6 + $0x760] sm:$0xff]
    %v299 = vld [vmem:[#allocation6 + $0x768] sm:$0xff]
    %v300 = vld [vmem:[#allocation6 + $0x770] sm:$0xff]
    %v301 = vld [vmem:[#allocation6 + $0x778] sm:$0xff]
    %v302 = vld [vmem:[#allocation6 + $0x780] sm:$0xff]
    %v303 = vld [vmem:[#allocation6 + $0x788] sm:$0xff]
    %v304 = vld [vmem:[#allocation6 + $0x790] sm:$0xff]
    %v305 = vld [vmem:[#allocation6 + $0x798] sm:$0xff]
    %v306 = vld [vmem:[#allocation6 + $0x7a0] sm:$0xff]
    %v307 = vld [vmem:[#allocation6 + $0x7a8] sm:$0xff]
    %v308 = vld [vmem:[#allocation6 + $0x7b0] sm:$0xff]
    %v309 = vld [vmem:[#allocation6 + $0x7b8] sm:$0xff]
    %v310 = vld [vmem:[#allocation6 + $0x7c0] sm:$0xff]
    %v311 = vld [vmem:[#allocation6 + $0x7c8] sm:$0xff]
    %v312 = vld [vmem:[#allocation6 + $0x7d0] sm:$0xff]
    %v313 = vld [vmem:[#allocation6 + $0x7d8] sm:$0xff]
    %v314 = vld [vmem:[#allocation6 + $0x7e0] sm:$0xff]
    %v315 = vld [vmem:[#allocation6 + $0x7e8] sm:$0xff]
    %v316 = vld [vmem:[#allocation6 + $0x7f0] sm:$0xff]
    %v317 = vld [vmem:[#allocation6 + $0x7f8] sm:$0xff]
    %v318 = vld [vmem:[%s0] sm:$0xff]
    %v319 = vld [vmem:[%s0 + $0x8] sm:$0xff]
    %v320 = vld [vmem:[%s0 + $0x10] sm:$0xff]
    %v321 = vld [vmem:[%s0 + $0x18] sm:$0xff]
    %v322 = vld [vmem:[%s0 + $0x20] sm:$0xff]
    %v323 = vld [vmem:[%s0 + $0x28] sm:$0xff]
    %v324 = vld [vmem:[%s0 + $0x30] sm:$0xff]
    %v325 = vld [vmem:[%s0 + $0x38] sm:$0xff]
    %v326 = vld [vmem:[%s0 + $0x40] sm:$0xff]
    %v327 = vld [vmem:[%s0 + $0x48] sm:$0xff]
    %v328 = vld [vmem:[%s0 + $0x50] sm:$0xff]
    %v329 = vld [vmem:[%s0 + $0x58] sm:$0xff]
    %v330 = vld [vmem:[%s0 + $0x60] sm:$0xff]
    %v331 = vld [vmem:[%s0 + $0x68] sm:$0xff]
    %v332 = vld [vmem:[%s0 + $0x70] sm:$0xff]
    %v333 = vld [vmem:[%s0 + $0x78] sm:$0xff]
    %v334 = vld [vmem:[%s0 + $0x80] sm:$0xff]
    %v335 = vld [vmem:[%s0 + $0x88] sm:$0xff]
    %v336 = vld [vmem:[%s0 + $0x90] sm:$0xff]
    %v337 = vld [vmem:[%s0 + $0x98] sm:$0xff]
    %v338 = vld [vmem:[%s0 + $0xa0] sm:$0xff]
    %v339 = vld [vmem:[%s0 + $0xa8] sm:$0xff]
    %v340 = vld [vmem:[%s0 + $0xb0] sm:$0xff]
    %v341 = vld [vmem:[%s0 + $0xb8] sm:$0xff]
    %v342 = vld [vmem:[%s0 + $0xc0] sm:$0xff]
    %v343 = vld [vmem:[%s0 + $0xc8] sm:$0xff]
    %v344 = vld [vmem:[%s0 + $0xd0] sm:$0xff]
    %v345 = vld [vmem:[%s0 + $0xd8] sm:$0xff]
    %v346 = vld [vmem:[%s0 + $0xe0] sm:$0xff]
    %v347 = vld [vmem:[%s0 + $0xe8] sm:$0xff]
    %v348 = vld [vmem:[%s0 + $0xf0] sm:$0xff]
    %v349 = vld [vmem:[%s0 + $0xf8] sm:$0xff]
    %350 = vmatpush.msra.mxu0 %v333
    %351 = vmatpush.msra.mxu0 %v332
    %352 = vmatpush.msra.mxu0 %v331
    %353 = vmatpush.msra.mxu0 %v330
    %354 = vmatpush.msra.mxu0 %v329
    %355 = vmatpush.msra.mxu0 %v328
    %356 = vmatpush.msra.mxu0 %v327
    %357 = vmatpush.msra.mxu0 %v326
    %358 = vmatpush.msra.mxu0 %v325
    %359 = vmatpush.msra.mxu0 %v324
    %360 = vmatpush.msra.mxu0 %v323
    %361 = vmatpush.msra.mxu0 %v322
    %362 = vmatpush.msra.mxu0 %v321
    %363 = vmatpush.msra.mxu0 %v320
    %364 = vmatpush.msra.mxu0 %v319
    %365 = vmatpush.msra.mxu0 %v318
    %366 = vmatmul.f32.gmra.mxu0 %v62
    %v367 = vpop.f32.mrf.mxu0
    %v368 = vadd.f32 0.0, %v367
    %369 = vmatmul.f32.gmra.mxu0 %v64
    %v370 = vpop.f32.mrf.mxu0
    %v371 = vadd.f32 0.0, %v370
    %372 = vmatmul.f32.gmra.mxu0 %v66
    %v373 = vpop.f32.mrf.mxu0
    %v374 = vadd.f32 0.0, %v373
    %375 = vmatmul.f32.gmra.mxu0 %v68
    %v376 = vpop.f32.mrf.mxu0
    %v377 = vadd.f32 0.0, %v376
    %378 = vmatmul.f32.gmra.mxu0 %v70
    %v379 = vpop.f32.mrf.mxu0
    %v380 = vadd.f32 0.0, %v379
    %381 = vmatmul.f32.gmra.mxu0 %v72
    %v382 = vpop.f32.mrf.mxu0
    %v383 = vadd.f32 0.0, %v382
    %384 = vmatmul.f32.gmra.mxu0 %v74
    %v385 = vpop.f32.mrf.mxu0
    %v386 = vadd.f32 0.0, %v385
    %387 = vmatmul.f32.gmra.mxu0 %v76
    %v388 = vpop.f32.mrf.mxu0
    %v389 = vadd.f32 0.0, %v388
    %390 = vmatmul.f32.gmra.mxu0 %v78
    %v391 = vpop.f32.mrf.mxu0
    %v392 = vadd.f32 0.0, %v391
    %393 = vmatmul.f32.gmra.mxu0 %v80
    %v394 = vpop.f32.mrf.mxu0
    %v395 = vadd.f32 0.0, %v394
    %396 = vmatmul.f32.gmra.mxu0 %v82
    %v397 = vpop.f32.mrf.mxu0
    %v398 = vadd.f32 0.0, %v397
    %399 = vmatmul.f32.gmra.mxu0 %v84
    %v400 = vpop.f32.mrf.mxu0
    %v401 = vadd.f32 0.0, %v400
    %402 = vmatmul.f32.gmra.mxu0 %v86
    %v403 = vpop.f32.mrf.mxu0
    %v404 = vadd.f32 0.0, %v403
    %405 = vmatmul.f32.gmra.mxu0 %v88
    %v406 = vpop.f32.mrf.mxu0
    %v407 = vadd.f32 0.0, %v406
    %408 = vmatmul.f32.gmra.mxu0 %v90
    %v409 = vpop.f32.mrf.mxu0
    %v410 = vadd.f32 0.0, %v409
    %411 = vmatmul.f32.gmra.mxu0 %v92
    %v412 = vpop.f32.mrf.mxu0
    %v413 = vadd.f32 0.0, %v412
    %414 = vmatmul.f32.gmra.mxu0 %v94
    %v415 = vpop.f32.mrf.mxu0
    %v416 = vadd.f32 0.0, %v415
    %417 = vmatmul.f32.gmra.mxu0 %v96
    %v418 = vpop.f32.mrf.mxu0
    %v419 = vadd.f32 0.0, %v418
    %420 = vmatmul.f32.gmra.mxu0 %v98
    %v421 = vpop.f32.mrf.mxu0
    %v422 = vadd.f32 0.0, %v421
    %423 = vmatmul.f32.gmra.mxu0 %v100
    %v424 = vpop.f32.mrf.mxu0
    %v425 = vadd.f32 0.0, %v424
    %426 = vmatmul.f32.gmra.mxu0 %v102
    %v427 = vpop.f32.mrf.mxu0
    %v428 = vadd.f32 0.0, %v427
    %429 = vmatmul.f32.gmra.mxu0 %v104
    %v430 = vpop.f32.mrf.mxu0
    %v431 = vadd.f32 0.0, %v430
    %432 = vmatmul.f32.gmra.mxu0 %v106
    %v433 = vpop.f32.mrf.mxu0
    %v434 = vadd.f32 0.0, %v433
    %435 = vmatmul.f32.gmra.mxu0 %v108
    %v436 = vpop.f32.mrf.mxu0
    %v437 = vadd.f32 0.0, %v436
    %438 = vmatmul.f32.gmra.mxu0 %v110
    %v439 = vpop.f32.mrf.mxu0
    %v440 = vadd.f32 0.0, %v439
    %441 = vmatmul.f32.gmra.mxu0 %v112
    %v442 = vpop.f32.mrf.mxu0
    %v443 = vadd.f32 0.0, %v442
    %444 = vmatmul.f32.gmra.mxu0 %v114
    %v445 = vpop.f32.mrf.mxu0
    %v446 = vadd.f32 0.0, %v445
    %447 = vmatmul.f32.gmra.mxu0 %v116
    %v448 = vpop.f32.mrf.mxu0
    %v449 = vadd.f32 0.0, %v448
    %450 = vmatmul.f32.gmra.mxu0 %v118
    %v451 = vpop.f32.mrf.mxu0
    %v452 = vadd.f32 0.0, %v451
    %453 = vmatmul.f32.gmra.mxu0 %v120
    %v454 = vpop.f32.mrf.mxu0
    %v455 = vadd.f32 0.0, %v454
    %456 = vmatmul.f32.gmra.mxu0 %v122
    %v457 = vpop.f32.mrf.mxu0
    %v458 = vadd.f32 0.0, %v457
    %459 = vmatmul.f32.gmra.mxu0 %v124
    %v460 = vpop.f32.mrf.mxu0
    %v461 = vadd.f32 0.0, %v460
    %462 = vmatmul.f32.gmra.mxu0 %v126
    %v463 = vpop.f32.mrf.mxu0
    %v464 = vadd.f32 0.0, %v463
    %465 = vmatmul.f32.gmra.mxu0 %v128
    %v466 = vpop.f32.mrf.mxu0
    %v467 = vadd.f32 0.0, %v466
    %468 = vmatmul.f32.gmra.mxu0 %v130
    %v469 = vpop.f32.mrf.mxu0
    %v470 = vadd.f32 0.0, %v469
    %471 = vmatmul.f32.gmra.mxu0 %v132
    %v472 = vpop.f32.mrf.mxu0
    %v473 = vadd.f32 0.0, %v472
    %474 = vmatmul.f32.gmra.mxu0 %v134
    %v475 = vpop.f32.mrf.mxu0
    %v476 = vadd.f32 0.0, %v475
    %477 = vmatmul.f32.gmra.mxu0 %v136
    %v478 = vpop.f32.mrf.mxu0
    %v479 = vadd.f32 0.0, %v478
    %480 = vmatmul.f32.gmra.mxu0 %v138
    %v481 = vpop.f32.mrf.mxu0
    %v482 = vadd.f32 0.0, %v481
    %483 = vmatmul.f32.gmra.mxu0 %v140
    %v484 = vpop.f32.mrf.mxu0
    %v485 = vadd.f32 0.0, %v484
    %486 = vmatmul.f32.gmra.mxu0 %v142
    %v487 = vpop.f32.mrf.mxu0
    %v488 = vadd.f32 0.0, %v487
    %489 = vmatmul.f32.gmra.mxu0 %v144
    %v490 = vpop.f32.mrf.mxu0
    %v491 = vadd.f32 0.0, %v490
    %492 = vmatmul.f32.gmra.mxu0 %v146
    %v493 = vpop.f32.mrf.mxu0
    %v494 = vadd.f32 0.0, %v493
    %495 = vmatmul.f32.gmra.mxu0 %v148
    %v496 = vpop.f32.mrf.mxu0
    %v497 = vadd.f32 0.0, %v496
    %498 = vmatmul.f32.gmra.mxu0 %v150
    %v499 = vpop.f32.mrf.mxu0
    %v500 = vadd.f32 0.0, %v499
    %501 = vmatmul.f32.gmra.mxu0 %v152
    %v502 = vpop.f32.mrf.mxu0
    %v503 = vadd.f32 0.0, %v502
    %504 = vmatmul.f32.gmra.mxu0 %v154
    %v505 = vpop.f32.mrf.mxu0
    %v506 = vadd.f32 0.0, %v505
    %507 = vmatmul.f32.gmra.mxu0 %v156
    %v508 = vpop.f32.mrf.mxu0
    %v509 = vadd.f32 0.0, %v508
    %510 = vmatmul.f32.gmra.mxu0 %v158
    %v511 = vpop.f32.mrf.mxu0
    %v512 = vadd.f32 0.0, %v511
    %513 = vmatmul.f32.gmra.mxu0 %v160
    %v514 = vpop.f32.mrf.mxu0
    %v515 = vadd.f32 0.0, %v514
    %516 = vmatmul.f32.gmra.mxu0 %v162
    %v517 = vpop.f32.mrf.mxu0
    %v518 = vadd.f32 0.0, %v517
    %519 = vmatmul.f32.gmra.mxu0 %v164
    %v520 = vpop.f32.mrf.mxu0
    %v521 = vadd.f32 0.0, %v520
    %522 = vmatmul.f32.gmra.mxu0 %v166
    %v523 = vpop.f32.mrf.mxu0
    %v524 = vadd.f32 0.0, %v523
    %525 = vmatmul.f32.gmra.mxu0 %v168
    %v526 = vpop.f32.mrf.mxu0
    %v527 = vadd.f32 0.0, %v526
    %528 = vmatmul.f32.gmra.mxu0 %v170
    %v529 = vpop.f32.mrf.mxu0
    %v530 = vadd.f32 0.0, %v529
    %531 = vmatmul.f32.gmra.mxu0 %v172
    %v532 = vpop.f32.mrf.mxu0
    %v533 = vadd.f32 0.0, %v532
    %534 = vmatmul.f32.gmra.mxu0 %v174
    %v535 = vpop.f32.mrf.mxu0
    %v536 = vadd.f32 0.0, %v535
    %537 = vmatmul.f32.gmra.mxu0 %v176
    %v538 = vpop.f32.mrf.mxu0
    %v539 = vadd.f32 0.0, %v538
    %540 = vmatmul.f32.gmra.mxu0 %v178
    %v541 = vpop.f32.mrf.mxu0
    %v542 = vadd.f32 0.0, %v541
    %543 = vmatmul.f32.gmra.mxu0 %v180
    %v544 = vpop.f32.mrf.mxu0
    %v545 = vadd.f32 0.0, %v544
    %546 = vmatmul.f32.gmra.mxu0 %v182
    %v547 = vpop.f32.mrf.mxu0
    %v548 = vadd.f32 0.0, %v547
    %549 = vmatmul.f32.gmra.mxu0 %v184
    %v550 = vpop.f32.mrf.mxu0
    %v551 = vadd.f32 0.0, %v550
    %552 = vmatmul.f32.gmra.mxu0 %v186
    %v553 = vpop.f32.mrf.mxu0
    %v554 = vadd.f32 0.0, %v553
    %555 = vmatmul.f32.gmra.mxu0 %v188
    %v556 = vpop.f32.mrf.mxu0
    %v557 = vadd.f32 0.0, %v556
    %558 = vmatmul.f32.gmra.mxu0 %v190
    %v559 = vpop.f32.mrf.mxu0
    %v560 = vadd.f32 0.0, %v559
    %561 = vmatmul.f32.gmra.mxu0 %v192
    %v562 = vpop.f32.mrf.mxu0
    %v563 = vadd.f32 0.0, %v562
    %564 = vmatmul.f32.gmra.mxu0 %v194
    %v565 = vpop.f32.mrf.mxu0
    %v566 = vadd.f32 0.0, %v565
    %567 = vmatmul.f32.gmra.mxu0 %v196
    %v568 = vpop.f32.mrf.mxu0
    %v569 = vadd.f32 0.0, %v568
    %570 = vmatmul.f32.gmra.mxu0 %v198
    %v571 = vpop.f32.mrf.mxu0
    %v572 = vadd.f32 0.0, %v571
    %573 = vmatmul.f32.gmra.mxu0 %v200
    %v574 = vpop.f32.mrf.mxu0
    %v575 = vadd.f32 0.0, %v574
    %576 = vmatmul.f32.gmra.mxu0 %v202
    %v577 = vpop.f32.mrf.mxu0
    %v578 = vadd.f32 0.0, %v577
    %579 = vmatmul.f32.gmra.mxu0 %v204
    %v580 = vpop.f32.mrf.mxu0
    %v581 = vadd.f32 0.0, %v580
    %582 = vmatmul.f32.gmra.mxu0 %v206
    %v583 = vpop.f32.mrf.mxu0
    %v584 = vadd.f32 0.0, %v583
    %585 = vmatmul.f32.gmra.mxu0 %v208
    %v586 = vpop.f32.mrf.mxu0
    %v587 = vadd.f32 0.0, %v586
    %588 = vmatmul.f32.gmra.mxu0 %v210
    %v589 = vpop.f32.mrf.mxu0
    %v590 = vadd.f32 0.0, %v589
    %591 = vmatmul.f32.gmra.mxu0 %v212
    %v592 = vpop.f32.mrf.mxu0
    %v593 = vadd.f32 0.0, %v592
    %594 = vmatmul.f32.gmra.mxu0 %v214
    %v595 = vpop.f32.mrf.mxu0
    %v596 = vadd.f32 0.0, %v595
    %597 = vmatmul.f32.gmra.mxu0 %v216
    %v598 = vpop.f32.mrf.mxu0
    %v599 = vadd.f32 0.0, %v598
    %600 = vmatmul.f32.gmra.mxu0 %v218
    %v601 = vpop.f32.mrf.mxu0
    %v602 = vadd.f32 0.0, %v601
    %603 = vmatmul.f32.gmra.mxu0 %v220
    %v604 = vpop.f32.mrf.mxu0
    %v605 = vadd.f32 0.0, %v604
    %606 = vmatmul.f32.gmra.mxu0 %v222
    %v607 = vpop.f32.mrf.mxu0
    %v608 = vadd.f32 0.0, %v607
    %609 = vmatmul.f32.gmra.mxu0 %v224
    %v610 = vpop.f32.mrf.mxu0
    %v611 = vadd.f32 0.0, %v610
    %612 = vmatmul.f32.gmra.mxu0 %v226
    %v613 = vpop.f32.mrf.mxu0
    %v614 = vadd.f32 0.0, %v613
    %615 = vmatmul.f32.gmra.mxu0 %v228
    %v616 = vpop.f32.mrf.mxu0
    %v617 = vadd.f32 0.0, %v616
    %618 = vmatmul.f32.gmra.mxu0 %v230
    %v619 = vpop.f32.mrf.mxu0
    %v620 = vadd.f32 0.0, %v619
    %621 = vmatmul.f32.gmra.mxu0 %v232
    %v622 = vpop.f32.mrf.mxu0
    %v623 = vadd.f32 0.0, %v622
    %624 = vmatmul.f32.gmra.mxu0 %v234
    %v625 = vpop.f32.mrf.mxu0
    %v626 = vadd.f32 0.0, %v625
    %627 = vmatmul.f32.gmra.mxu0 %v236
    %v628 = vpop.f32.mrf.mxu0
    %v629 = vadd.f32 0.0, %v628
    %630 = vmatmul.f32.gmra.mxu0 %v238
    %v631 = vpop.f32.mrf.mxu0
    %v632 = vadd.f32 0.0, %v631
    %633 = vmatmul.f32.gmra.mxu0 %v240
    %v634 = vpop.f32.mrf.mxu0
    %v635 = vadd.f32 0.0, %v634
    %636 = vmatmul.f32.gmra.mxu0 %v242
    %v637 = vpop.f32.mrf.mxu0
    %v638 = vadd.f32 0.0, %v637
    %639 = vmatmul.f32.gmra.mxu0 %v244
    %v640 = vpop.f32.mrf.mxu0
    %v641 = vadd.f32 0.0, %v640
    %642 = vmatmul.f32.gmra.mxu0 %v246
    %v643 = vpop.f32.mrf.mxu0
    %v644 = vadd.f32 0.0, %v643
    %645 = vmatmul.f32.gmra.mxu0 %v248
    %v646 = vpop.f32.mrf.mxu0
    %v647 = vadd.f32 0.0, %v646
    %648 = vmatmul.f32.gmra.mxu0 %v250
    %v649 = vpop.f32.mrf.mxu0
    %v650 = vadd.f32 0.0, %v649
    %651 = vmatmul.f32.gmra.mxu0 %v252
    %v652 = vpop.f32.mrf.mxu0
    %v653 = vadd.f32 0.0, %v652
    %654 = vmatmul.f32.gmra.mxu0 %v254
    %v655 = vpop.f32.mrf.mxu0
    %v656 = vadd.f32 0.0, %v655
    %657 = vmatmul.f32.gmra.mxu0 %v256
    %v658 = vpop.f32.mrf.mxu0
    %v659 = vadd.f32 0.0, %v658
    %660 = vmatmul.f32.gmra.mxu0 %v258
    %v661 = vpop.f32.mrf.mxu0
    %v662 = vadd.f32 0.0, %v661
    %663 = vmatmul.f32.gmra.mxu0 %v260
    %v664 = vpop.f32.mrf.mxu0
    %v665 = vadd.f32 0.0, %v664
    %666 = vmatmul.f32.gmra.mxu0 %v262
    %v667 = vpop.f32.mrf.mxu0
    %v668 = vadd.f32 0.0, %v667
    %669 = vmatmul.f32.gmra.mxu0 %v264
    %v670 = vpop.f32.mrf.mxu0
    %v671 = vadd.f32 0.0, %v670
    %672 = vmatmul.f32.gmra.mxu0 %v266
    %v673 = vpop.f32.mrf.mxu0
    %v674 = vadd.f32 0.0, %v673
    %675 = vmatmul.f32.gmra.mxu0 %v268
    %v676 = vpop.f32.mrf.mxu0
    %v677 = vadd.f32 0.0, %v676
    %678 = vmatmul.f32.gmra.mxu0 %v270
    %v679 = vpop.f32.mrf.mxu0
    %v680 = vadd.f32 0.0, %v679
    %681 = vmatmul.f32.gmra.mxu0 %v272
    %v682 = vpop.f32.mrf.mxu0
    %v683 = vadd.f32 0.0, %v682
    %684 = vmatmul.f32.gmra.mxu0 %v274
    %v685 = vpop.f32.mrf.mxu0
    %v686 = vadd.f32 0.0, %v685
    %687 = vmatmul.f32.gmra.mxu0 %v276
    %v688 = vpop.f32.mrf.mxu0
    %v689 = vadd.f32 0.0, %v688
    %690 = vmatmul.f32.gmra.mxu0 %v278
    %v691 = vpop.f32.mrf.mxu0
    %v692 = vadd.f32 0.0, %v691
    %693 = vmatmul.f32.gmra.mxu0 %v280
    %v694 = vpop.f32.mrf.mxu0
    %v695 = vadd.f32 0.0, %v694
    %696 = vmatmul.f32.gmra.mxu0 %v282
    %v697 = vpop.f32.mrf.mxu0
    %v698 = vadd.f32 0.0, %v697
    %699 = vmatmul.f32.gmra.mxu0 %v284
    %v700 = vpop.f32.mrf.mxu0
    %v701 = vadd.f32 0.0, %v700
    %702 = vmatmul.f32.gmra.mxu0 %v286
    %v703 = vpop.f32.mrf.mxu0
    %v704 = vadd.f32 0.0, %v703
    %705 = vmatmul.f32.gmra.mxu0 %v288
    %v706 = vpop.f32.mrf.mxu0
    %v707 = vadd.f32 0.0, %v706
    %708 = vmatmul.f32.gmra.mxu0 %v290
    %v709 = vpop.f32.mrf.mxu0
    %v710 = vadd.f32 0.0, %v709
    %711 = vmatmul.f32.gmra.mxu0 %v292
    %v712 = vpop.f32.mrf.mxu0
    %v713 = vadd.f32 0.0, %v712
    %714 = vmatmul.f32.gmra.mxu0 %v294
    %v715 = vpop.f32.mrf.mxu0
    %v716 = vadd.f32 0.0, %v715
    %717 = vmatmul.f32.gmra.mxu0 %v296
    %v718 = vpop.f32.mrf.mxu0
    %v719 = vadd.f32 0.0, %v718
    %720 = vmatmul.f32.gmra.mxu0 %v298
    %v721 = vpop.f32.mrf.mxu0
    %v722 = vadd.f32 0.0, %v721
    %723 = vmatmul.f32.gmra.mxu0 %v300
    %v724 = vpop.f32.mrf.mxu0
    %v725 = vadd.f32 0.0, %v724
    %726 = vmatmul.f32.gmra.mxu0 %v302
    %v727 = vpop.f32.mrf.mxu0
    %v728 = vadd.f32 0.0, %v727
    %729 = vmatmul.f32.gmra.mxu0 %v304
    %v730 = vpop.f32.mrf.mxu0
    %v731 = vadd.f32 0.0, %v730
    %732 = vmatmul.f32.gmra.mxu0 %v306
    %v733 = vpop.f32.mrf.mxu0
    %v734 = vadd.f32 0.0, %v733
    %735 = vmatmul.f32.gmra.mxu0 %v308
    %v736 = vpop.f32.mrf.mxu0
    %v737 = vadd.f32 0.0, %v736
    %738 = vmatmul.f32.gmra.mxu0 %v310
    %v739 = vpop.f32.mrf.mxu0
    %v740 = vadd.f32 0.0, %v739
    %741 = vmatmul.f32.gmra.mxu0 %v312
    %v742 = vpop.f32.mrf.mxu0
    %v743 = vadd.f32 0.0, %v742
    %744 = vmatmul.f32.gmra.mxu0 %v314
    %v745 = vpop.f32.mrf.mxu0
    %v746 = vadd.f32 0.0, %v745
    %747 = vmatmul.f32.gmra.mxu0 %v316
    %v748 = vpop.f32.mrf.mxu0
    %v749 = vadd.f32 0.0, %v748
    %750 = vdwg.mxu0
    %751 = vmatpush.msra.mxu0 %v349
    %752 = vmatpush.msra.mxu0 %v348
    %753 = vmatpush.msra.mxu0 %v347
    %754 = vmatpush.msra.mxu0 %v346
    %755 = vmatpush.msra.mxu0 %v345
    %756 = vmatpush.msra.mxu0 %v344
    %757 = vmatpush.msra.mxu0 %v343
    %758 = vmatpush.msra.mxu0 %v342
    %759 = vmatpush.msra.mxu0 %v341
    %760 = vmatpush.msra.mxu0 %v340
    %761 = vmatpush.msra.mxu0 %v339
    %762 = vmatpush.msra.mxu0 %v338
    %763 = vmatpush.msra.mxu0 %v337
    %764 = vmatpush.msra.mxu0 %v336
    %765 = vmatpush.msra.mxu0 %v335
    %766 = vmatpush.msra.mxu0 %v334
    %767 = vmatmul.f32.gmra.mxu0 %v63
    %v768 = vpop.f32.mrf.mxu0
    %v769 = vadd.f32 %v368, %v768
    %770 = vmatmul.f32.gmra.mxu0 %v65
    %v771 = vpop.f32.mrf.mxu0
    %v772 = vadd.f32 %v371, %v771
    %773 = vmatmul.f32.gmra.mxu0 %v67
    %v774 = vpop.f32.mrf.mxu0
    %v775 = vadd.f32 %v374, %v774
    %776 = vmatmul.f32.gmra.mxu0 %v69
    %v777 = vpop.f32.mrf.mxu0
    %v778 = vadd.f32 %v377, %v777
    %779 = vmatmul.f32.gmra.mxu0 %v71
    %v780 = vpop.f32.mrf.mxu0
    %v781 = vadd.f32 %v380, %v780
    %782 = vmatmul.f32.gmra.mxu0 %v73
    %v783 = vpop.f32.mrf.mxu0
    %v784 = vadd.f32 %v383, %v783
    %785 = vmatmul.f32.gmra.mxu0 %v75
    %v786 = vpop.f32.mrf.mxu0
    %v787 = vadd.f32 %v386, %v786
    %788 = vmatmul.f32.gmra.mxu0 %v77
    %v789 = vpop.f32.mrf.mxu0
    %v790 = vadd.f32 %v389, %v789
    %791 = vmatmul.f32.gmra.mxu0 %v79
    %v792 = vpop.f32.mrf.mxu0
    %v793 = vadd.f32 %v392, %v792
    %794 = vmatmul.f32.gmra.mxu0 %v81
    %v795 = vpop.f32.mrf.mxu0
    %v796 = vadd.f32 %v395, %v795
    %797 = vmatmul.f32.gmra.mxu0 %v83
    %v798 = vpop.f32.mrf.mxu0
    %v799 = vadd.f32 %v398, %v798
    %800 = vmatmul.f32.gmra.mxu0 %v85
    %v801 = vpop.f32.mrf.mxu0
    %v802 = vadd.f32 %v401, %v801
    %803 = vmatmul.f32.gmra.mxu0 %v87
    %v804 = vpop.f32.mrf.mxu0
    %v805 = vadd.f32 %v404, %v804
    %806 = vmatmul.f32.gmra.mxu0 %v89
    %v807 = vpop.f32.mrf.mxu0
    %v808 = vadd.f32 %v407, %v807
    %809 = vmatmul.f32.gmra.mxu0 %v91
    %v810 = vpop.f32.mrf.mxu0
    %v811 = vadd.f32 %v410, %v810
    %812 = vmatmul.f32.gmra.mxu0 %v93
    %v813 = vpop.f32.mrf.mxu0
    %v814 = vadd.f32 %v413, %v813
    %815 = vmatmul.f32.gmra.mxu0 %v95
    %v816 = vpop.f32.mrf.mxu0
    %v817 = vadd.f32 %v416, %v816
    %818 = vmatmul.f32.gmra.mxu0 %v97
    %v819 = vpop.f32.mrf.mxu0
    %v820 = vadd.f32 %v419, %v819
    %821 = vmatmul.f32.gmra.mxu0 %v99
    %v822 = vpop.f32.mrf.mxu0
    %v823 = vadd.f32 %v422, %v822
    %824 = vmatmul.f32.gmra.mxu0 %v101
    %v825 = vpop.f32.mrf.mxu0
    %v826 = vadd.f32 %v425, %v825
    %827 = vmatmul.f32.gmra.mxu0 %v103
    %v828 = vpop.f32.mrf.mxu0
    %v829 = vadd.f32 %v428, %v828
    %830 = vmatmul.f32.gmra.mxu0 %v105
    %v831 = vpop.f32.mrf.mxu0
    %v832 = vadd.f32 %v431, %v831
    %833 = vmatmul.f32.gmra.mxu0 %v107
    %v834 = vpop.f32.mrf.mxu0
    %v835 = vadd.f32 %v434, %v834
    %836 = vmatmul.f32.gmra.mxu0 %v109
    %v837 = vpop.f32.mrf.mxu0
    %v838 = vadd.f32 %v437, %v837
    %839 = vmatmul.f32.gmra.mxu0 %v111
    %v840 = vpop.f32.mrf.mxu0
    %v841 = vadd.f32 %v440, %v840
    %842 = vmatmul.f32.gmra.mxu0 %v113
    %v843 = vpop.f32.mrf.mxu0
    %v844 = vadd.f32 %v443, %v843
    %845 = vmatmul.f32.gmra.mxu0 %v115
    %v846 = vpop.f32.mrf.mxu0
    %v847 = vadd.f32 %v446, %v846
    %848 = vmatmul.f32.gmra.mxu0 %v117
    %v849 = vpop.f32.mrf.mxu0
    %v850 = vadd.f32 %v449, %v849
    %851 = vmatmul.f32.gmra.mxu0 %v119
    %v852 = vpop.f32.mrf.mxu0
    %v853 = vadd.f32 %v452, %v852
    %854 = vmatmul.f32.gmra.mxu0 %v121
    %v855 = vpop.f32.mrf.mxu0
    %v856 = vadd.f32 %v455, %v855
    %857 = vmatmul.f32.gmra.mxu0 %v123
    %v858 = vpop.f32.mrf.mxu0
    %v859 = vadd.f32 %v458, %v858
    %860 = vmatmul.f32.gmra.mxu0 %v125
    %v861 = vpop.f32.mrf.mxu0
    %v862 = vadd.f32 %v461, %v861
    %863 = vmatmul.f32.gmra.mxu0 %v127
    %v864 = vpop.f32.mrf.mxu0
    %v865 = vadd.f32 %v464, %v864
    %866 = vmatmul.f32.gmra.mxu0 %v129
    %v867 = vpop.f32.mrf.mxu0
    %v868 = vadd.f32 %v467, %v867
    %869 = vmatmul.f32.gmra.mxu0 %v131
    %v870 = vpop.f32.mrf.mxu0
    %v871 = vadd.f32 %v470, %v870
    %872 = vmatmul.f32.gmra.mxu0 %v133
    %v873 = vpop.f32.mrf.mxu0
    %v874 = vadd.f32 %v473, %v873
    %875 = vmatmul.f32.gmra.mxu0 %v135
    %v876 = vpop.f32.mrf.mxu0
    %v877 = vadd.f32 %v476, %v876
    %878 = vmatmul.f32.gmra.mxu0 %v137
    %v879 = vpop.f32.mrf.mxu0
    %v880 = vadd.f32 %v479, %v879
    %881 = vmatmul.f32.gmra.mxu0 %v139
    %v882 = vpop.f32.mrf.mxu0
    %v883 = vadd.f32 %v482, %v882
    %884 = vmatmul.f32.gmra.mxu0 %v141
    %v885 = vpop.f32.mrf.mxu0
    %v886 = vadd.f32 %v485, %v885
    %887 = vmatmul.f32.gmra.mxu0 %v143
    %v888 = vpop.f32.mrf.mxu0
    %v889 = vadd.f32 %v488, %v888
    %890 = vmatmul.f32.gmra.mxu0 %v145
    %v891 = vpop.f32.mrf.mxu0
    %v892 = vadd.f32 %v491, %v891
    %893 = vmatmul.f32.gmra.mxu0 %v147
    %v894 = vpop.f32.mrf.mxu0
    %v895 = vadd.f32 %v494, %v894
    %896 = vmatmul.f32.gmra.mxu0 %v149
    %v897 = vpop.f32.mrf.mxu0
    %v898 = vadd.f32 %v497, %v897
    %899 = vmatmul.f32.gmra.mxu0 %v151
    %v900 = vpop.f32.mrf.mxu0
    %v901 = vadd.f32 %v500, %v900
    %902 = vmatmul.f32.gmra.mxu0 %v153
    %v903 = vpop.f32.mrf.mxu0
    %v904 = vadd.f32 %v503, %v903
    %905 = vmatmul.f32.gmra.mxu0 %v155
    %v906 = vpop.f32.mrf.mxu0
    %v907 = vadd.f32 %v506, %v906
    %908 = vmatmul.f32.gmra.mxu0 %v157
    %v909 = vpop.f32.mrf.mxu0
    %v910 = vadd.f32 %v509, %v909
    %911 = vmatmul.f32.gmra.mxu0 %v159
    %v912 = vpop.f32.mrf.mxu0
    %v913 = vadd.f32 %v512, %v912
    %914 = vmatmul.f32.gmra.mxu0 %v161
    %v915 = vpop.f32.mrf.mxu0
    %v916 = vadd.f32 %v515, %v915
    %917 = vmatmul.f32.gmra.mxu0 %v163
    %v918 = vpop.f32.mrf.mxu0
    %v919 = vadd.f32 %v518, %v918
    %920 = vmatmul.f32.gmra.mxu0 %v165
    %v921 = vpop.f32.mrf.mxu0
    %v922 = vadd.f32 %v521, %v921
    %923 = vmatmul.f32.gmra.mxu0 %v167
    %v924 = vpop.f32.mrf.mxu0
    %v925 = vadd.f32 %v524, %v924
    %926 = vmatmul.f32.gmra.mxu0 %v169
    %v927 = vpop.f32.mrf.mxu0
    %v928 = vadd.f32 %v527, %v927
    %929 = vmatmul.f32.gmra.mxu0 %v171
    %v930 = vpop.f32.mrf.mxu0
    %v931 = vadd.f32 %v530, %v930
    %932 = vmatmul.f32.gmra.mxu0 %v173
    %v933 = vpop.f32.mrf.mxu0
    %v934 = vadd.f32 %v533, %v933
    %935 = vmatmul.f32.gmra.mxu0 %v175
    %v936 = vpop.f32.mrf.mxu0
    %v937 = vadd.f32 %v536, %v936
    %938 = vmatmul.f32.gmra.mxu0 %v177
    %v939 = vpop.f32.mrf.mxu0
    %v940 = vadd.f32 %v539, %v939
    %941 = vmatmul.f32.gmra.mxu0 %v179
    %v942 = vpop.f32.mrf.mxu0
    %v943 = vadd.f32 %v542, %v942
    %944 = vmatmul.f32.gmra.mxu0 %v181
    %v945 = vpop.f32.mrf.mxu0
    %v946 = vadd.f32 %v545, %v945
    %947 = vmatmul.f32.gmra.mxu0 %v183
    %v948 = vpop.f32.mrf.mxu0
    %v949 = vadd.f32 %v548, %v948
    %950 = vmatmul.f32.gmra.mxu0 %v185
    %v951 = vpop.f32.mrf.mxu0
    %v952 = vadd.f32 %v551, %v951
    %953 = vmatmul.f32.gmra.mxu0 %v187
    %v954 = vpop.f32.mrf.mxu0
    %v955 = vadd.f32 %v554, %v954
    %956 = vmatmul.f32.gmra.mxu0 %v189
    %v957 = vpop.f32.mrf.mxu0
    %v958 = vadd.f32 %v557, %v957
    %959 = vmatmul.f32.gmra.mxu0 %v191
    %v960 = vpop.f32.mrf.mxu0
    %v961 = vadd.f32 %v560, %v960
    %962 = vmatmul.f32.gmra.mxu0 %v193
    %v963 = vpop.f32.mrf.mxu0
    %v964 = vadd.f32 %v563, %v963
    %965 = vmatmul.f32.gmra.mxu0 %v195
    %v966 = vpop.f32.mrf.mxu0
    %v967 = vadd.f32 %v566, %v966
    %968 = vmatmul.f32.gmra.mxu0 %v197
    %v969 = vpop.f32.mrf.mxu0
    %v970 = vadd.f32 %v569, %v969
    %971 = vmatmul.f32.gmra.mxu0 %v199
    %v972 = vpop.f32.mrf.mxu0
    %v973 = vadd.f32 %v572, %v972
    %974 = vmatmul.f32.gmra.mxu0 %v201
    %v975 = vpop.f32.mrf.mxu0
    %v976 = vadd.f32 %v575, %v975
    %977 = vmatmul.f32.gmra.mxu0 %v203
    %v978 = vpop.f32.mrf.mxu0
    %v979 = vadd.f32 %v578, %v978
    %980 = vmatmul.f32.gmra.mxu0 %v205
    %v981 = vpop.f32.mrf.mxu0
    %v982 = vadd.f32 %v581, %v981
    %983 = vmatmul.f32.gmra.mxu0 %v207
    %v984 = vpop.f32.mrf.mxu0
    %v985 = vadd.f32 %v584, %v984
    %986 = vmatmul.f32.gmra.mxu0 %v209
    %v987 = vpop.f32.mrf.mxu0
    %v988 = vadd.f32 %v587, %v987
    %989 = vmatmul.f32.gmra.mxu0 %v211
    %v990 = vpop.f32.mrf.mxu0
    %v991 = vadd.f32 %v590, %v990
    %992 = vmatmul.f32.gmra.mxu0 %v213
    %v993 = vpop.f32.mrf.mxu0
    %v994 = vadd.f32 %v593, %v993
    %995 = vmatmul.f32.gmra.mxu0 %v215
    %v996 = vpop.f32.mrf.mxu0
    %v997 = vadd.f32 %v596, %v996
    %998 = vmatmul.f32.gmra.mxu0 %v217
    %v999 = vpop.f32.mrf.mxu0
    %v1000 = vadd.f32 %v599, %v999
    %1001 = vmatmul.f32.gmra.mxu0 %v219
    %v1002 = vpop.f32.mrf.mxu0
    %v1003 = vadd.f32 %v602, %v1002
    %1004 = vmatmul.f32.gmra.mxu0 %v221
    %v1005 = vpop.f32.mrf.mxu0
    %v1006 = vadd.f32 %v605, %v1005
    %1007 = vmatmul.f32.gmra.mxu0 %v223
    %v1008 = vpop.f32.mrf.mxu0
    %v1009 = vadd.f32 %v608, %v1008
    %1010 = vmatmul.f32.gmra.mxu0 %v225
    %v1011 = vpop.f32.mrf.mxu0
    %v1012 = vadd.f32 %v611, %v1011
    %1013 = vmatmul.f32.gmra.mxu0 %v227
    %v1014 = vpop.f32.mrf.mxu0
    %v1015 = vadd.f32 %v614, %v1014
    %1016 = vmatmul.f32.gmra.mxu0 %v229
    %v1017 = vpop.f32.mrf.mxu0
    %v1018 = vadd.f32 %v617, %v1017
    %1019 = vmatmul.f32.gmra.mxu0 %v231
    %v1020 = vpop.f32.mrf.mxu0
    %v1021 = vadd.f32 %v620, %v1020
    %1022 = vmatmul.f32.gmra.mxu0 %v233
    %v1023 = vpop.f32.mrf.mxu0
    %v1024 = vadd.f32 %v623, %v1023
    %1025 = vmatmul.f32.gmra.mxu0 %v235
    %v1026 = vpop.f32.mrf.mxu0
    %v1027 = vadd.f32 %v626, %v1026
    %1028 = vmatmul.f32.gmra.mxu0 %v237
    %v1029 = vpop.f32.mrf.mxu0
    %v1030 = vadd.f32 %v629, %v1029
    %1031 = vmatmul.f32.gmra.mxu0 %v239
    %v1032 = vpop.f32.mrf.mxu0
    %v1033 = vadd.f32 %v632, %v1032
    %1034 = vmatmul.f32.gmra.mxu0 %v241
    %v1035 = vpop.f32.mrf.mxu0
    %v1036 = vadd.f32 %v635, %v1035
    %1037 = vmatmul.f32.gmra.mxu0 %v243
    %v1038 = vpop.f32.mrf.mxu0
    %v1039 = vadd.f32 %v638, %v1038
    %1040 = vmatmul.f32.gmra.mxu0 %v245
    %v1041 = vpop.f32.mrf.mxu0
    %v1042 = vadd.f32 %v641, %v1041
    %1043 = vmatmul.f32.gmra.mxu0 %v247
    %v1044 = vpop.f32.mrf.mxu0
    %v1045 = vadd.f32 %v644, %v1044
    %1046 = vmatmul.f32.gmra.mxu0 %v249
    %v1047 = vpop.f32.mrf.mxu0
    %v1048 = vadd.f32 %v647, %v1047
    %1049 = vmatmul.f32.gmra.mxu0 %v251
    %v1050 = vpop.f32.mrf.mxu0
    %v1051 = vadd.f32 %v650, %v1050
    %1052 = vmatmul.f32.gmra.mxu0 %v253
    %v1053 = vpop.f32.mrf.mxu0
    %v1054 = vadd.f32 %v653, %v1053
    %1055 = vmatmul.f32.gmra.mxu0 %v255
    %v1056 = vpop.f32.mrf.mxu0
    %v1057 = vadd.f32 %v656, %v1056
    %1058 = vmatmul.f32.gmra.mxu0 %v257
    %v1059 = vpop.f32.mrf.mxu0
    %v1060 = vadd.f32 %v659, %v1059
    %1061 = vmatmul.f32.gmra.mxu0 %v259
    %v1062 = vpop.f32.mrf.mxu0
    %v1063 = vadd.f32 %v662, %v1062
    %1064 = vmatmul.f32.gmra.mxu0 %v261
    %v1065 = vpop.f32.mrf.mxu0
    %v1066 = vadd.f32 %v665, %v1065
    %1067 = vmatmul.f32.gmra.mxu0 %v263
    %v1068 = vpop.f32.mrf.mxu0
    %v1069 = vadd.f32 %v668, %v1068
    %1070 = vmatmul.f32.gmra.mxu0 %v265
    %v1071 = vpop.f32.mrf.mxu0
    %v1072 = vadd.f32 %v671, %v1071
    %1073 = vmatmul.f32.gmra.mxu0 %v267
    %v1074 = vpop.f32.mrf.mxu0
    %v1075 = vadd.f32 %v674, %v1074
    %1076 = vmatmul.f32.gmra.mxu0 %v269
    %v1077 = vpop.f32.mrf.mxu0
    %v1078 = vadd.f32 %v677, %v1077
    %1079 = vmatmul.f32.gmra.mxu0 %v271
    %v1080 = vpop.f32.mrf.mxu0
    %v1081 = vadd.f32 %v680, %v1080
    %1082 = vmatmul.f32.gmra.mxu0 %v273
    %v1083 = vpop.f32.mrf.mxu0
    %v1084 = vadd.f32 %v683, %v1083
    %1085 = vmatmul.f32.gmra.mxu0 %v275
    %v1086 = vpop.f32.mrf.mxu0
    %v1087 = vadd.f32 %v686, %v1086
    %1088 = vmatmul.f32.gmra.mxu0 %v277
    %v1089 = vpop.f32.mrf.mxu0
    %v1090 = vadd.f32 %v689, %v1089
    %1091 = vmatmul.f32.gmra.mxu0 %v279
    %v1092 = vpop.f32.mrf.mxu0
    %v1093 = vadd.f32 %v692, %v1092
    %1094 = vmatmul.f32.gmra.mxu0 %v281
    %v1095 = vpop.f32.mrf.mxu0
    %v1096 = vadd.f32 %v695, %v1095
    %1097 = vmatmul.f32.gmra.mxu0 %v283
    %v1098 = vpop.f32.mrf.mxu0
    %v1099 = vadd.f32 %v698, %v1098
    %1100 = vmatmul.f32.gmra.mxu0 %v285
    %v1101 = vpop.f32.mrf.mxu0
    %v1102 = vadd.f32 %v701, %v1101
    %1103 = vmatmul.f32.gmra.mxu0 %v287
    %v1104 = vpop.f32.mrf.mxu0
    %v1105 = vadd.f32 %v704, %v1104
    %1106 = vmatmul.f32.gmra.mxu0 %v289
    %v1107 = vpop.f32.mrf.mxu0
    %v1108 = vadd.f32 %v707, %v1107
    %1109 = vmatmul.f32.gmra.mxu0 %v291
    %v1110 = vpop.f32.mrf.mxu0
    %v1111 = vadd.f32 %v710, %v1110
    %1112 = vmatmul.f32.gmra.mxu0 %v293
    %v1113 = vpop.f32.mrf.mxu0
    %v1114 = vadd.f32 %v713, %v1113
    %1115 = vmatmul.f32.gmra.mxu0 %v295
    %v1116 = vpop.f32.mrf.mxu0
    %v1117 = vadd.f32 %v716, %v1116
    %1118 = vmatmul.f32.gmra.mxu0 %v297
    %v1119 = vpop.f32.mrf.mxu0
    %v1120 = vadd.f32 %v719, %v1119
    %1121 = vmatmul.f32.gmra.mxu0 %v299
    %v1122 = vpop.f32.mrf.mxu0
    %v1123 = vadd.f32 %v722, %v1122
    %1124 = vmatmul.f32.gmra.mxu0 %v301
    %v1125 = vpop.f32.mrf.mxu0
    %v1126 = vadd.f32 %v725, %v1125
    %1127 = vmatmul.f32.gmra.mxu0 %v303
    %v1128 = vpop.f32.mrf.mxu0
    %v1129 = vadd.f32 %v728, %v1128
    %1130 = vmatmul.f32.gmra.mxu0 %v305
    %v1131 = vpop.f32.mrf.mxu0
    %v1132 = vadd.f32 %v731, %v1131
    %1133 = vmatmul.f32.gmra.mxu0 %v307
    %v1134 = vpop.f32.mrf.mxu0
    %v1135 = vadd.f32 %v734, %v1134
    %1136 = vmatmul.f32.gmra.mxu0 %v309
    %v1137 = vpop.f32.mrf.mxu0
    %v1138 = vadd.f32 %v737, %v1137
    %1139 = vmatmul.f32.gmra.mxu0 %v311
    %v1140 = vpop.f32.mrf.mxu0
    %v1141 = vadd.f32 %v740, %v1140
    %1142 = vmatmul.f32.gmra.mxu0 %v313
    %v1143 = vpop.f32.mrf.mxu0
    %v1144 = vadd.f32 %v743, %v1143
    %1145 = vmatmul.f32.gmra.mxu0 %v315
    %v1146 = vpop.f32.mrf.mxu0
    %v1147 = vadd.f32 %v746, %v1146
    %1148 = vmatmul.f32.gmra.mxu0 %v317
    %v1149 = vpop.f32.mrf.mxu0
    %v1150 = vadd.f32 %v749, %v1149
    %1151 = vdwg.mxu0
    %vm1152 = vcmask 23552
    %1153 = vst.msk [vmem:[#allocation2] sm:$0xff] %vm1152, %v769
    %1154 = vst.msk [vmem:[#allocation2 + $0x8] sm:$0xff] %vm1152, %v772
    %1155 = vst.msk [vmem:[#allocation2 + $0x10] sm:$0xff] %vm1152, %v775
    %1156 = vst.msk [vmem:[#allocation2 + $0x18] sm:$0xff] %vm1152, %v778
    %1157 = vst.msk [vmem:[#allocation2 + $0x20] sm:$0xff] %vm1152, %v781
    %1158 = vst.msk [vmem:[#allocation2 + $0x28] sm:$0xff] %vm1152, %v784
    %1159 = vst.msk [vmem:[#allocation2 + $0x30] sm:$0xff] %vm1152, %v787
    %1160 = vst.msk [vmem:[#allocation2 + $0x38] sm:$0xff] %vm1152, %v790
    %1169 = vrot.lane.b32.xlu0 %v793, 3
    %v1170 = vpop.permute.xlu0 %1169
    %1171 = vrot.lane.b32.xlu0 %v796, 3
    %v1172 = vpop.permute.xlu0 %1171
    %1173 = vrot.lane.b32.xlu0 %v799, 3
    %v1174 = vpop.permute.xlu0 %1173
    %1175 = vrot.lane.b32.xlu0 %v802, 3
    %v1176 = vpop.permute.xlu0 %1175
    %1177 = vrot.lane.b32.xlu0 %v805, 3
    %v1178 = vpop.permute.xlu0 %1177
    %1179 = vrot.lane.b32.xlu0 %v808, 3
    %v1180 = vpop.permute.xlu0 %1179
    %1181 = vrot.lane.b32.xlu0 %v811, 3
    %v1182 = vpop.permute.xlu0 %1181
    %1183 = vrot.lane.b32.xlu0 %v814, 3
    %v1184 = vpop.permute.xlu0 %1183
    %vm1193 = vcmask 48152
    %1194 = vst.msk [vmem:[#allocation2] sm:$0xff] %vm1193, %v1170
    %1195 = vst.msk [vmem:[#allocation2 + $0x8] sm:$0xff] %vm1193, %v1172
    %1196 = vst.msk [vmem:[#allocation2 + $0x10] sm:$0xff] %vm1193, %v1174
    %1197 = vst.msk [vmem:[#allocation2 + $0x18] sm:$0xff] %vm1193, %v1176
    %1198 = vst.msk [vmem:[#allocation2 + $0x20] sm:$0xff] %vm1193, %v1178
    %1199 = vst.msk [vmem:[#allocation2 + $0x28] sm:$0xff] %vm1193, %v1180
    %1200 = vst.msk [vmem:[#allocation2 + $0x30] sm:$0xff] %vm1193, %v1182
    %1201 = vst.msk [vmem:[#allocation2 + $0x38] sm:$0xff] %vm1193, %v1184
    %1210 = vrot.lane.b32.xlu0 %v817, 6
    %v1211 = vpop.permute.xlu0 %1210
    %1212 = vrot.lane.b32.xlu0 %v820, 6
    %v1213 = vpop.permute.xlu0 %1212
    %1214 = vrot.lane.b32.xlu0 %v823, 6
    %v1215 = vpop.permute.xlu0 %1214
    %1216 = vrot.lane.b32.xlu0 %v826, 6
    %v1217 = vpop.permute.xlu0 %1216
    %1218 = vrot.lane.b32.xlu0 %v829, 6
    %v1219 = vpop.permute.xlu0 %1218
    %1220 = vrot.lane.b32.xlu0 %v832, 6
    %v1221 = vpop.permute.xlu0 %1220
    %1222 = vrot.lane.b32.xlu0 %v835, 6
    %v1223 = vpop.permute.xlu0 %1222
    %1224 = vrot.lane.b32.xlu0 %v838, 6
    %v1225 = vpop.permute.xlu0 %1224
    %vm1234 = vcmask 72752
    %1235 = vst.msk [vmem:[#allocation2] sm:$0xff] %vm1234, %v1211
    %1236 = vst.msk [vmem:[#allocation2 + $0x8] sm:$0xff] %vm1234, %v1213
    %1237 = vst.msk [vmem:[#allocation2 + $0x10] sm:$0xff] %vm1234, %v1215
    %1238 = vst.msk [vmem:[#allocation2 + $0x18] sm:$0xff] %vm1234, %v1217
    %1239 = vst.msk [vmem:[#allocation2 + $0x20] sm:$0xff] %vm1234, %v1219
    %1240 = vst.msk [vmem:[#allocation2 + $0x28] sm:$0xff] %vm1234, %v1221
    %1241 = vst.msk [vmem:[#allocation2 + $0x30] sm:$0xff] %vm1234, %v1223
    %1242 = vst.msk [vmem:[#allocation2 + $0x38] sm:$0xff] %vm1234, %v1225
    %1251 = vrot.lane.b32.xlu0 %v841, 9
    %v1252 = vpop.permute.xlu0 %1251
    %1253 = vrot.lane.b32.xlu0 %v844, 9
    %v1254 = vpop.permute.xlu0 %1253
    %1255 = vrot.lane.b32.xlu0 %v847, 9
    %v1256 = vpop.permute.xlu0 %1255
    %1257 = vrot.lane.b32.xlu0 %v850, 9
    %v1258 = vpop.permute.xlu0 %1257
    %1259 = vrot.lane.b32.xlu0 %v853, 9
    %v1260 = vpop.permute.xlu0 %1259
    %1261 = vrot.lane.b32.xlu0 %v856, 9
    %v1262 = vpop.permute.xlu0 %1261
    %1263 = vrot.lane.b32.xlu0 %v859, 9
    %v1264 = vpop.permute.xlu0 %1263
    %1265 = vrot.lane.b32.xlu0 %v862, 9
    %v1266 = vpop.permute.xlu0 %1265
    %vm1275 = vcmask 97352
    %1276 = vst.msk [vmem:[#allocation2] sm:$0xff] %vm1275, %v1252
    %1277 = vst.msk [vmem:[#allocation2 + $0x8] sm:$0xff] %vm1275, %v1254
    %1278 = vst.msk [vmem:[#allocation2 + $0x10] sm:$0xff] %vm1275, %v1256
    %1279 = vst.msk [vmem:[#allocation2 + $0x18] sm:$0xff] %vm1275, %v1258
    %1280 = vst.msk [vmem:[#allocation2 + $0x20] sm:$0xff] %vm1275, %v1260
    %1281 = vst.msk [vmem:[#allocation2 + $0x28] sm:$0xff] %vm1275, %v1262
    %1282 = vst.msk [vmem:[#allocation2 + $0x30] sm:$0xff] %vm1275, %v1264
    %1283 = vst.msk [vmem:[#allocation2 + $0x38] sm:$0xff] %vm1275, %v1266
    %1292 = vrot.lane.b32.xlu0 %v865, 12
    %v1293 = vpop.permute.xlu0 %1292
    %1294 = vrot.lane.b32.xlu0 %v868, 12
    %v1295 = vpop.permute.xlu0 %1294
    %1296 = vrot.lane.b32.xlu0 %v871, 12
    %v1297 = vpop.permute.xlu0 %1296
    %1298 = vrot.lane.b32.xlu0 %v874, 12
    %v1299 = vpop.permute.xlu0 %1298
    %1300 = vrot.lane.b32.xlu0 %v877, 12
    %v1301 = vpop.permute.xlu0 %1300
    %1302 = vrot.lane.b32.xlu0 %v880, 12
    %v1303 = vpop.permute.xlu0 %1302
    %1304 = vrot.lane.b32.xlu0 %v883, 12
    %v1305 = vpop.permute.xlu0 %1304
    %1306 = vrot.lane.b32.xlu0 %v886, 12
    %v1307 = vpop.permute.xlu0 %1306
    %vm1316 = vcmask 121952
    %1317 = vst.msk [vmem:[#allocation2] sm:$0xff] %vm1316, %v1293
    %1318 = vst.msk [vmem:[#allocation2 + $0x8] sm:$0xff] %vm1316, %v1295
    %1319 = vst.msk [vmem:[#allocation2 + $0x10] sm:$0xff] %vm1316, %v1297
    %1320 = vst.msk [vmem:[#allocation2 + $0x18] sm:$0xff] %vm1316, %v1299
    %1321 = vst.msk [vmem:[#allocation2 + $0x20] sm:$0xff] %vm1316, %v1301
    %1322 = vst.msk [vmem:[#allocation2 + $0x28] sm:$0xff] %vm1316, %v1303
    %1323 = vst.msk [vmem:[#allocation2 + $0x30] sm:$0xff] %vm1316, %v1305
    %1324 = vst.msk [vmem:[#allocation2 + $0x38] sm:$0xff] %vm1316, %v1307
    %1333 = vrot.lane.b32.xlu0 %v889, 15
    %v1334 = vpop.permute.xlu0 %1333
    %1335 = vrot.lane.b32.xlu0 %v892, 15
    %v1336 = vpop.permute.xlu0 %1335
    %1337 = vrot.lane.b32.xlu0 %v895, 15
    %v1338 = vpop.permute.xlu0 %1337
    %1339 = vrot.lane.b32.xlu0 %v898, 15
    %v1340 = vpop.permute.xlu0 %1339
    %1341 = vrot.lane.b32.xlu0 %v901, 15
    %v1342 = vpop.permute.xlu0 %1341
    %1343 = vrot.lane.b32.xlu0 %v904, 15
    %v1344 = vpop.permute.xlu0 %1343
    %1345 = vrot.lane.b32.xlu0 %v907, 15
    %v1346 = vpop.permute.xlu0 %1345
    %1347 = vrot.lane.b32.xlu0 %v910, 15
    %v1348 = vpop.permute.xlu0 %1347
    %vm1357 = vcmask 146552
    %1358 = vst.msk [vmem:[#allocation2] sm:$0xff] %vm1357, %v1334
    %1359 = vst.msk [vmem:[#allocation2 + $0x8] sm:$0xff] %vm1357, %v1336
    %1360 = vst.msk [vmem:[#allocation2 + $0x10] sm:$0xff] %vm1357, %v1338
    %1361 = vst.msk [vmem:[#allocation2 + $0x18] sm:$0xff] %vm1357, %v1340
    %1362 = vst.msk [vmem:[#allocation2 + $0x20] sm:$0xff] %vm1357, %v1342
    %1363 = vst.msk [vmem:[#allocation2 + $0x28] sm:$0xff] %vm1357, %v1344
    %1364 = vst.msk [vmem:[#allocation2 + $0x30] sm:$0xff] %vm1357, %v1346
    %1365 = vst.msk [vmem:[#allocation2 + $0x38] sm:$0xff] %vm1357, %v1348
    %1374 = vrot.lane.b32.xlu0 %v913, 18
    %v1375 = vpop.permute.xlu0 %1374
    %1376 = vrot.lane.b32.xlu0 %v916, 18
    %v1377 = vpop.permute.xlu0 %1376
    %1378 = vrot.lane.b32.xlu0 %v919, 18
    %v1379 = vpop.permute.xlu0 %1378
    %1380 = vrot.lane.b32.xlu0 %v922, 18
    %v1381 = vpop.permute.xlu0 %1380
    %1382 = vrot.lane.b32.xlu0 %v925, 18
    %v1383 = vpop.permute.xlu0 %1382
    %1384 = vrot.lane.b32.xlu0 %v928, 18
    %v1385 = vpop.permute.xlu0 %1384
    %1386 = vrot.lane.b32.xlu0 %v931, 18
    %v1387 = vpop.permute.xlu0 %1386
    %1388 = vrot.lane.b32.xlu0 %v934, 18
    %v1389 = vpop.permute.xlu0 %1388
    %vm1398 = vcmask 171152
    %1399 = vst.msk [vmem:[#allocation2] sm:$0xff] %vm1398, %v1375
    %1400 = vst.msk [vmem:[#allocation2 + $0x8] sm:$0xff] %vm1398, %v1377
    %1401 = vst.msk [vmem:[#allocation2 + $0x10] sm:$0xff] %vm1398, %v1379
    %1402 = vst.msk [vmem:[#allocation2 + $0x18] sm:$0xff] %vm1398, %v1381
    %1403 = vst.msk [vmem:[#allocation2 + $0x20] sm:$0xff] %vm1398, %v1383
    %1404 = vst.msk [vmem:[#allocation2 + $0x28] sm:$0xff] %vm1398, %v1385
    %1405 = vst.msk [vmem:[#allocation2 + $0x30] sm:$0xff] %vm1398, %v1387
    %1406 = vst.msk [vmem:[#allocation2 + $0x38] sm:$0xff] %vm1398, %v1389
    %1415 = vrot.lane.b32.xlu0 %v937, 21
    %v1416 = vpop.permute.xlu0 %1415
    %1417 = vrot.lane.b32.xlu0 %v940, 21
    %v1418 = vpop.permute.xlu0 %1417
    %1419 = vrot.lane.b32.xlu0 %v943, 21
    %v1420 = vpop.permute.xlu0 %1419
    %1421 = vrot.lane.b32.xlu0 %v946, 21
    %v1422 = vpop.permute.xlu0 %1421
    %1423 = vrot.lane.b32.xlu0 %v949, 21
    %v1424 = vpop.permute.xlu0 %1423
    %1425 = vrot.lane.b32.xlu0 %v952, 21
    %v1426 = vpop.permute.xlu0 %1425
    %1427 = vrot.lane.b32.xlu0 %v955, 21
    %v1428 = vpop.permute.xlu0 %1427
    %1429 = vrot.lane.b32.xlu0 %v958, 21
    %v1430 = vpop.permute.xlu0 %1429
    %vm1439 = vcmask 195752
    %1440 = vst.msk [vmem:[#allocation2] sm:$0xff] %vm1439, %v1416
    %1441 = vst.msk [vmem:[#allocation2 + $0x8] sm:$0xff] %vm1439, %v1418
    %1442 = vst.msk [vmem:[#allocation2 + $0x10] sm:$0xff] %vm1439, %v1420
    %1443 = vst.msk [vmem:[#allocation2 + $0x18] sm:$0xff] %vm1439, %v1422
    %1444 = vst.msk [vmem:[#allocation2 + $0x20] sm:$0xff] %vm1439, %v1424
    %1445 = vst.msk [vmem:[#allocation2 + $0x28] sm:$0xff] %vm1439, %v1426
    %1446 = vst.msk [vmem:[#allocation2 + $0x30] sm:$0xff] %vm1439, %v1428
    %1447 = vst.msk [vmem:[#allocation2 + $0x38] sm:$0xff] %vm1439, %v1430
    %1456 = vrot.lane.b32.xlu0 %v961, 24
    %v1457 = vpop.permute.xlu0 %1456
    %1458 = vrot.lane.b32.xlu0 %v964, 24
    %v1459 = vpop.permute.xlu0 %1458
    %1460 = vrot.lane.b32.xlu0 %v967, 24
    %v1461 = vpop.permute.xlu0 %1460
    %1462 = vrot.lane.b32.xlu0 %v970, 24
    %v1463 = vpop.permute.xlu0 %1462
    %1464 = vrot.lane.b32.xlu0 %v973, 24
    %v1465 = vpop.permute.xlu0 %1464
    %1466 = vrot.lane.b32.xlu0 %v976, 24
    %v1467 = vpop.permute.xlu0 %1466
    %1468 = vrot.lane.b32.xlu0 %v979, 24
    %v1469 = vpop.permute.xlu0 %1468
    %1470 = vrot.lane.b32.xlu0 %v982, 24
    %v1471 = vpop.permute.xlu0 %1470
    %vm1480 = vcmask 220352
    %1481 = vst.msk [vmem:[#allocation2] sm:$0xff] %vm1480, %v1457
    %1482 = vst.msk [vmem:[#allocation2 + $0x8] sm:$0xff] %vm1480, %v1459
    %1483 = vst.msk [vmem:[#allocation2 + $0x10] sm:$0xff] %vm1480, %v1461
    %1484 = vst.msk [vmem:[#allocation2 + $0x18] sm:$0xff] %vm1480, %v1463
    %1485 = vst.msk [vmem:[#allocation2 + $0x20] sm:$0xff] %vm1480, %v1465
    %1486 = vst.msk [vmem:[#allocation2 + $0x28] sm:$0xff] %vm1480, %v1467
    %1487 = vst.msk [vmem:[#allocation2 + $0x30] sm:$0xff] %vm1480, %v1469
    %1488 = vst.msk [vmem:[#allocation2 + $0x38] sm:$0xff] %vm1480, %v1471
    %1497 = vrot.lane.b32.xlu0 %v985, 27
    %v1498 = vpop.permute.xlu0 %1497
    %1499 = vrot.lane.b32.xlu0 %v988, 27
    %v1500 = vpop.permute.xlu0 %1499
    %1501 = vrot.lane.b32.xlu0 %v991, 27
    %v1502 = vpop.permute.xlu0 %1501
    %1503 = vrot.lane.b32.xlu0 %v994, 27
    %v1504 = vpop.permute.xlu0 %1503
    %1505 = vrot.lane.b32.xlu0 %v997, 27
    %v1506 = vpop.permute.xlu0 %1505
    %1507 = vrot.lane.b32.xlu0 %v1000, 27
    %v1508 = vpop.permute.xlu0 %1507
    %1509 = vrot.lane.b32.xlu0 %v1003, 27
    %v1510 = vpop.permute.xlu0 %1509
    %1511 = vrot.lane.b32.xlu0 %v1006, 27
    %v1512 = vpop.permute.xlu0 %1511
    %vm1521 = vcmask 244952
    %1522 = vst.msk [vmem:[#allocation2] sm:$0xff] %vm1521, %v1498
    %1523 = vst.msk [vmem:[#allocation2 + $0x8] sm:$0xff] %vm1521, %v1500
    %1524 = vst.msk [vmem:[#allocation2 + $0x10] sm:$0xff] %vm1521, %v1502
    %1525 = vst.msk [vmem:[#allocation2 + $0x18] sm:$0xff] %vm1521, %v1504
    %1526 = vst.msk [vmem:[#allocation2 + $0x20] sm:$0xff] %vm1521, %v1506
    %1527 = vst.msk [vmem:[#allocation2 + $0x28] sm:$0xff] %vm1521, %v1508
    %1528 = vst.msk [vmem:[#allocation2 + $0x30] sm:$0xff] %vm1521, %v1510
    %1529 = vst.msk [vmem:[#allocation2 + $0x38] sm:$0xff] %vm1521, %v1512
    %1538 = vrot.lane.b32.xlu0 %v1009, 30
    %v1539 = vpop.permute.xlu0 %1538
    %1540 = vrot.lane.b32.xlu0 %v1012, 30
    %v1541 = vpop.permute.xlu0 %1540
    %1542 = vrot.lane.b32.xlu0 %v1015, 30
    %v1543 = vpop.permute.xlu0 %1542
    %1544 = vrot.lane.b32.xlu0 %v1018, 30
    %v1545 = vpop.permute.xlu0 %1544
    %1546 = vrot.lane.b32.xlu0 %v1021, 30
    %v1547 = vpop.permute.xlu0 %1546
    %1548 = vrot.lane.b32.xlu0 %v1024, 30
    %v1549 = vpop.permute.xlu0 %1548
    %1550 = vrot.lane.b32.xlu0 %v1027, 30
    %v1551 = vpop.permute.xlu0 %1550
    %1552 = vrot.lane.b32.xlu0 %v1030, 30
    %v1553 = vpop.permute.xlu0 %1552
    %vm1562 = vcmask 269552
    %1563 = vst.msk [vmem:[#allocation2] sm:$0xff] %vm1562, %v1539
    %1564 = vst.msk [vmem:[#allocation2 + $0x8] sm:$0xff] %vm1562, %v1541
    %1565 = vst.msk [vmem:[#allocation2 + $0x10] sm:$0xff] %vm1562, %v1543
    %1566 = vst.msk [vmem:[#allocation2 + $0x18] sm:$0xff] %vm1562, %v1545
    %1567 = vst.msk [vmem:[#allocation2 + $0x20] sm:$0xff] %vm1562, %v1547
    %1568 = vst.msk [vmem:[#allocation2 + $0x28] sm:$0xff] %vm1562, %v1549
    %1569 = vst.msk [vmem:[#allocation2 + $0x30] sm:$0xff] %vm1562, %v1551
    %1570 = vst.msk [vmem:[#allocation2 + $0x38] sm:$0xff] %vm1562, %v1553
    %1579 = vrot.lane.b32.xlu0 %v1033, 33
    %v1580 = vpop.permute.xlu0 %1579
    %1581 = vrot.lane.b32.xlu0 %v1036, 33
    %v1582 = vpop.permute.xlu0 %1581
    %1583 = vrot.lane.b32.xlu0 %v1039, 33
    %v1584 = vpop.permute.xlu0 %1583
    %1585 = vrot.lane.b32.xlu0 %v1042, 33
    %v1586 = vpop.permute.xlu0 %1585
    %1587 = vrot.lane.b32.xlu0 %v1045, 33
    %v1588 = vpop.permute.xlu0 %1587
    %1589 = vrot.lane.b32.xlu0 %v1048, 33
    %v1590 = vpop.permute.xlu0 %1589
    %1591 = vrot.lane.b32.xlu0 %v1051, 33
    %v1592 = vpop.permute.xlu0 %1591
    %1593 = vrot.lane.b32.xlu0 %v1054, 33
    %v1594 = vpop.permute.xlu0 %1593
    %vm1603 = vcmask 294152
    %1604 = vst.msk [vmem:[#allocation2] sm:$0xff] %vm1603, %v1580
    %1605 = vst.msk [vmem:[#allocation2 + $0x8] sm:$0xff] %vm1603, %v1582
    %1606 = vst.msk [vmem:[#allocation2 + $0x10] sm:$0xff] %vm1603, %v1584
    %1607 = vst.msk [vmem:[#allocation2 + $0x18] sm:$0xff] %vm1603, %v1586
    %1608 = vst.msk [vmem:[#allocation2 + $0x20] sm:$0xff] %vm1603, %v1588
    %1609 = vst.msk [vmem:[#allocation2 + $0x28] sm:$0xff] %vm1603, %v1590
    %1610 = vst.msk [vmem:[#allocation2 + $0x30] sm:$0xff] %vm1603, %v1592
    %1611 = vst.msk [vmem:[#allocation2 + $0x38] sm:$0xff] %vm1603, %v1594
    %1620 = vrot.lane.b32.xlu0 %v1057, 36
    %v1621 = vpop.permute.xlu0 %1620
    %1622 = vrot.lane.b32.xlu0 %v1060, 36
    %v1623 = vpop.permute.xlu0 %1622
    %1624 = vrot.lane.b32.xlu0 %v1063, 36
    %v1625 = vpop.permute.xlu0 %1624
    %1626 = vrot.lane.b32.xlu0 %v1066, 36
    %v1627 = vpop.permute.xlu0 %1626
    %1628 = vrot.lane.b32.xlu0 %v1069, 36
    %v1629 = vpop.permute.xlu0 %1628
    %1630 = vrot.lane.b32.xlu0 %v1072, 36
    %v1631 = vpop.permute.xlu0 %1630
    %1632 = vrot.lane.b32.xlu0 %v1075, 36
    %v1633 = vpop.permute.xlu0 %1632
    %1634 = vrot.lane.b32.xlu0 %v1078, 36
    %v1635 = vpop.permute.xlu0 %1634
    %vm1644 = vcmask 318752
    %1645 = vst.msk [vmem:[#allocation2] sm:$0xff] %vm1644, %v1621
    %1646 = vst.msk [vmem:[#allocation2 + $0x8] sm:$0xff] %vm1644, %v1623
    %1647 = vst.msk [vmem:[#allocation2 + $0x10] sm:$0xff] %vm1644, %v1625
    %1648 = vst.msk [vmem:[#allocation2 + $0x18] sm:$0xff] %vm1644, %v1627
    %1649 = vst.msk [vmem:[#allocation2 + $0x20] sm:$0xff] %vm1644, %v1629
    %1650 = vst.msk [vmem:[#allocation2 + $0x28] sm:$0xff] %vm1644, %v1631
    %1651 = vst.msk [vmem:[#allocation2 + $0x30] sm:$0xff] %vm1644, %v1633
    %1652 = vst.msk [vmem:[#allocation2 + $0x38] sm:$0xff] %vm1644, %v1635
    %1661 = vrot.lane.b32.xlu0 %v1081, 39
    %v1662 = vpop.permute.xlu0 %1661
    %1663 = vrot.lane.b32.xlu0 %v1084, 39
    %v1664 = vpop.permute.xlu0 %1663
    %1665 = vrot.lane.b32.xlu0 %v1087, 39
    %v1666 = vpop.permute.xlu0 %1665
    %1667 = vrot.lane.b32.xlu0 %v1090, 39
    %v1668 = vpop.permute.xlu0 %1667
    %1669 = vrot.lane.b32.xlu0 %v1093, 39
    %v1670 = vpop.permute.xlu0 %1669
    %1671 = vrot.lane.b32.xlu0 %v1096, 39
    %v1672 = vpop.permute.xlu0 %1671
    %1673 = vrot.lane.b32.xlu0 %v1099, 39
    %v1674 = vpop.permute.xlu0 %1673
    %1675 = vrot.lane.b32.xlu0 %v1102, 39
    %v1676 = vpop.permute.xlu0 %1675
    %vm1685 = vcmask 343352
    %1686 = vst.msk [vmem:[#allocation2] sm:$0xff] %vm1685, %v1662
    %1687 = vst.msk [vmem:[#allocation2 + $0x8] sm:$0xff] %vm1685, %v1664
    %1688 = vst.msk [vmem:[#allocation2 + $0x10] sm:$0xff] %vm1685, %v1666
    %1689 = vst.msk [vmem:[#allocation2 + $0x18] sm:$0xff] %vm1685, %v1668
    %1690 = vst.msk [vmem:[#allocation2 + $0x20] sm:$0xff] %vm1685, %v1670
    %1691 = vst.msk [vmem:[#allocation2 + $0x28] sm:$0xff] %vm1685, %v1672
    %1692 = vst.msk [vmem:[#allocation2 + $0x30] sm:$0xff] %vm1685, %v1674
    %1693 = vst.msk [vmem:[#allocation2 + $0x38] sm:$0xff] %vm1685, %v1676
    %1702 = vrot.lane.b32.xlu0 %v1105, 42
    %v1703 = vpop.permute.xlu0 %1702
    %1704 = vrot.lane.b32.xlu0 %v1108, 42
    %v1705 = vpop.permute.xlu0 %1704
    %1706 = vrot.lane.b32.xlu0 %v1111, 42
    %v1707 = vpop.permute.xlu0 %1706
    %1708 = vrot.lane.b32.xlu0 %v1114, 42
    %v1709 = vpop.permute.xlu0 %1708
    %1710 = vrot.lane.b32.xlu0 %v1117, 42
    %v1711 = vpop.permute.xlu0 %1710
    %1712 = vrot.lane.b32.xlu0 %v1120, 42
    %v1713 = vpop.permute.xlu0 %1712
    %1714 = vrot.lane.b32.xlu0 %v1123, 42
    %v1715 = vpop.permute.xlu0 %1714
    %1716 = vrot.lane.b32.xlu0 %v1126, 42
    %v1717 = vpop.permute.xlu0 %1716
    %vm1726 = vcmask 367952
    %1727 = vst.msk [vmem:[#allocation2] sm:$0xff] %vm1726, %v1703
    %1728 = vst.msk [vmem:[#allocation2 + $0x8] sm:$0xff] %vm1726, %v1705
    %1729 = vst.msk [vmem:[#allocation2 + $0x10] sm:$0xff] %vm1726, %v1707
    %1730 = vst.msk [vmem:[#allocation2 + $0x18] sm:$0xff] %vm1726, %v1709
    %1731 = vst.msk [vmem:[#allocation2 + $0x20] sm:$0xff] %vm1726, %v1711
    %1732 = vst.msk [vmem:[#allocation2 + $0x28] sm:$0xff] %vm1726, %v1713
    %1733 = vst.msk [vmem:[#allocation2 + $0x30] sm:$0xff] %vm1726, %v1715
    %1734 = vst.msk [vmem:[#allocation2 + $0x38] sm:$0xff] %vm1726, %v1717
    %1743 = vrot.lane.b32.xlu0 %v1129, 45
    %v1744 = vpop.permute.xlu0 %1743
    %1745 = vrot.lane.b32.xlu0 %v1132, 45
    %v1746 = vpop.permute.xlu0 %1745
    %1747 = vrot.lane.b32.xlu0 %v1135, 45
    %v1748 = vpop.permute.xlu0 %1747
    %1749 = vrot.lane.b32.xlu0 %v1138, 45
    %v1750 = vpop.permute.xlu0 %1749
    %1751 = vrot.lane.b32.xlu0 %v1141, 45
    %v1752 = vpop.permute.xlu0 %1751
    %1753 = vrot.lane.b32.xlu0 %v1144, 45
    %v1754 = vpop.permute.xlu0 %1753
    %1755 = vrot.lane.b32.xlu0 %v1147, 45
    %v1756 = vpop.permute.xlu0 %1755
    %1757 = vrot.lane.b32.xlu0 %v1150, 45
    %v1758 = vpop.permute.xlu0 %1757
    %vm1767 = vcmask 392552
    %1768 = vst.msk [vmem:[#allocation2] sm:$0xff] %vm1767, %v1744
    %1769 = vst.msk [vmem:[#allocation2 + $0x8] sm:$0xff] %vm1767, %v1746
    %1770 = vst.msk [vmem:[#allocation2 + $0x10] sm:$0xff] %vm1767, %v1748
    %1771 = vst.msk [vmem:[#allocation2 + $0x18] sm:$0xff] %vm1767, %v1750
    %1772 = vst.msk [vmem:[#allocation2 + $0x20] sm:$0xff] %vm1767, %v1752
    %1773 = vst.msk [vmem:[#allocation2 + $0x28] sm:$0xff] %vm1767, %v1754
    %1774 = vst.msk [vmem:[#allocation2 + $0x30] sm:$0xff] %vm1767, %v1756
    %1775 = vst.msk [vmem:[#allocation2 + $0x38] sm:$0xff] %vm1767, %v1758
    %v1776 = vld [vmem:[#allocation6] sm:$0xff]
    %v1777 = vld [vmem:[#allocation6 + $0x8] sm:$0xff]
    %v1778 = vld [vmem:[#allocation6 + $0x10] sm:$0xff]
    %v1779 = vld [vmem:[#allocation6 + $0x18] sm:$0xff]
    %v1780 = vld [vmem:[#allocation6 + $0x20] sm:$0xff]
    %v1781 = vld [vmem:[#allocation6 + $0x28] sm:$0xff]
    %v1782 = vld [vmem:[#allocation6 + $0x30] sm:$0xff]
    %v1783 = vld [vmem:[#allocation6 + $0x38] sm:$0xff]
    %v1784 = vld [vmem:[#allocation6 + $0x40] sm:$0xff]
    %v1785 = vld [vmem:[#allocation6 + $0x48] sm:$0xff]
    %v1786 = vld [vmem:[#allocation6 + $0x50] sm:$0xff]
    %v1787 = vld [vmem:[#allocation6 + $0x58] sm:$0xff]
    %v1788 = vld [vmem:[#allocation6 + $0x60] sm:$0xff]
    %v1789 = vld [vmem:[#allocation6 + $0x68] sm:$0xff]
    %v1790 = vld [vmem:[#allocation6 + $0x70] sm:$0xff]
    %v1791 = vld [vmem:[#allocation6 + $0x78] sm:$0xff]
    %v1792 = vld [vmem:[#allocation6 + $0x80] sm:$0xff]
    %v1793 = vld [vmem:[#allocation6 + $0x88] sm:$0xff]
    %v1794 = vld [vmem:[#allocation6 + $0x90] sm:$0xff]
    %v1795 = vld [vmem:[#allocation6 + $0x98] sm:$0xff]
    %v1796 = vld [vmem:[#allocation6 + $0xa0] sm:$0xff]
    %v1797 = vld [vmem:[#allocation6 + $0xa8] sm:$0xff]
    %v1798 = vld [vmem:[#allocation6 + $0xb0] sm:$0xff]
    %v1799 = vld [vmem:[#allocation6 + $0xb8] sm:$0xff]
    %v1800 = vld [vmem:[#allocation6 + $0xc0] sm:$0xff]
    %v1801 = vld [vmem:[#allocation6 + $0xc8] sm:$0xff]
    %v1802 = vld [vmem:[#allocation6 + $0xd0] sm:$0xff]
    %v1803 = vld [vmem:[#allocation6 + $0xd8] sm:$0xff]
    %v1804 = vld [vmem:[#allocation6 + $0xe0] sm:$0xff]
    %v1805 = vld [vmem:[#allocation6 + $0xe8] sm:$0xff]
    %v1806 = vld [vmem:[#allocation6 + $0xf0] sm:$0xff]
    %v1807 = vld [vmem:[#allocation6 + $0xf8] sm:$0xff]
    %v1808 = vld [vmem:[#allocation6 + $0x100] sm:$0xff]
    %v1809 = vld [vmem:[#allocation6 + $0x108] sm:$0xff]
    %v1810 = vld [vmem:[#allocation6 + $0x110] sm:$0xff]
    %v1811 = vld [vmem:[#allocation6 + $0x118] sm:$0xff]
    %v1812 = vld [vmem:[#allocation6 + $0x120] sm:$0xff]
    %v1813 = vld [vmem:[#allocation6 + $0x128] sm:$0xff]
    %v1814 = vld [vmem:[#allocation6 + $0x130] sm:$0xff]
    %v1815 = vld [vmem:[#allocation6 + $0x138] sm:$0xff]
    %v1816 = vld [vmem:[#allocation6 + $0x140] sm:$0xff]
    %v1817 = vld [vmem:[#allocation6 + $0x148] sm:$0xff]
    %v1818 = vld [vmem:[#allocation6 + $0x150] sm:$0xff]
    %v1819 = vld [vmem:[#allocation6 + $0x158] sm:$0xff]
    %v1820 = vld [vmem:[#allocation6 + $0x160] sm:$0xff]
    %v1821 = vld [vmem:[#allocation6 + $0x168] sm:$0xff]
    %v1822 = vld [vmem:[#allocation6 + $0x170] sm:$0xff]
    %v1823 = vld [vmem:[#allocation6 + $0x178] sm:$0xff]
    %v1824 = vld [vmem:[#allocation6 + $0x180] sm:$0xff]
    %v1825 = vld [vmem:[#allocation6 + $0x188] sm:$0xff]
    %v1826 = vld [vmem:[#allocation6 + $0x190] sm:$0xff]
    %v1827 = vld [vmem:[#allocation6 + $0x198] sm:$0xff]
    %v1828 = vld [vmem:[#allocation6 + $0x1a0] sm:$0xff]
    %v1829 = vld [vmem:[#allocation6 + $0x1a8] sm:$0xff]
    %v1830 = vld [vmem:[#allocation6 + $0x1b0] sm:$0xff]
    %v1831 = vld [vmem:[#allocation6 + $0x1b8] sm:$0xff]
    %v1832 = vld [vmem:[#allocation6 + $0x1c0] sm:$0xff]
    %v1833 = vld [vmem:[#allocation6 + $0x1c8] sm:$0xff]
    %v1834 = vld [vmem:[#allocation6 + $0x1d0] sm:$0xff]
    %v1835 = vld [vmem:[#allocation6 + $0x1d8] sm:$0xff]
    %v1836 = vld [vmem:[#allocation6 + $0x1e0] sm:$0xff]
    %v1837 = vld [vmem:[#allocation6 + $0x1e8] sm:$0xff]
    %v1838 = vld [vmem:[#allocation6 + $0x1f0] sm:$0xff]
    %v1839 = vld [vmem:[#allocation6 + $0x1f8] sm:$0xff]
    %v1840 = vld [vmem:[#allocation6 + $0x200] sm:$0xff]
    %v1841 = vld [vmem:[#allocation6 + $0x208] sm:$0xff]
    %v1842 = vld [vmem:[#allocation6 + $0x210] sm:$0xff]
    %v1843 = vld [vmem:[#allocation6 + $0x218] sm:$0xff]
    %v1844 = vld [vmem:[#allocation6 + $0x220] sm:$0xff]
    %v1845 = vld [vmem:[#allocation6 + $0x228] sm:$0xff]
    %v1846 = vld [vmem:[#allocation6 + $0x230] sm:$0xff]
    %v1847 = vld [vmem:[#allocation6 + $0x238] sm:$0xff]
    %v1848 = vld [vmem:[#allocation6 + $0x240] sm:$0xff]
    %v1849 = vld [vmem:[#allocation6 + $0x248] sm:$0xff]
    %v1850 = vld [vmem:[#allocation6 + $0x250] sm:$0xff]
    %v1851 = vld [vmem:[#allocation6 + $0x258] sm:$0xff]
    %v1852 = vld [vmem:[#allocation6 + $0x260] sm:$0xff]
    %v1853 = vld [vmem:[#allocation6 + $0x268] sm:$0xff]
    %v1854 = vld [vmem:[#allocation6 + $0x270] sm:$0xff]
    %v1855 = vld [vmem:[#allocation6 + $0x278] sm:$0xff]
    %v1856 = vld [vmem:[#allocation6 + $0x280] sm:$0xff]
    %v1857 = vld [vmem:[#allocation6 + $0x288] sm:$0xff]
    %v1858 = vld [vmem:[#allocation6 + $0x290] sm:$0xff]
    %v1859 = vld [vmem:[#allocation6 + $0x298] sm:$0xff]
    %v1860 = vld [vmem:[#allocation6 + $0x2a0] sm:$0xff]
    %v1861 = vld [vmem:[#allocation6 + $0x2a8] sm:$0xff]
    %v1862 = vld [vmem:[#allocation6 + $0x2b0] sm:$0xff]
    %v1863 = vld [vmem:[#allocation6 + $0x2b8] sm:$0xff]
    %v1864 = vld [vmem:[#allocation6 + $0x2c0] sm:$0xff]
    %v1865 = vld [vmem:[#allocation6 + $0x2c8] sm:$0xff]
    %v1866 = vld [vmem:[#allocation6 + $0x2d0] sm:$0xff]
    %v1867 = vld [vmem:[#allocation6 + $0x2d8] sm:$0xff]
    %v1868 = vld [vmem:[#allocation6 + $0x2e0] sm:$0xff]
    %v1869 = vld [vmem:[#allocation6 + $0x2e8] sm:$0xff]
    %v1870 = vld [vmem:[#allocation6 + $0x2f0] sm:$0xff]
    %v1871 = vld [vmem:[#allocation6 + $0x2f8] sm:$0xff]
    %v1872 = vld [vmem:[#allocation6 + $0x300] sm:$0xff]
    %v1873 = vld [vmem:[#allocation6 + $0x308] sm:$0xff]
    %v1874 = vld [vmem:[#allocation6 + $0x310] sm:$0xff]
    %v1875 = vld [vmem:[#allocation6 + $0x318] sm:$0xff]
    %v1876 = vld [vmem:[#allocation6 + $0x320] sm:$0xff]
    %v1877 = vld [vmem:[#allocation6 + $0x328] sm:$0xff]
    %v1878 = vld [vmem:[#allocation6 + $0x330] sm:$0xff]
    %v1879 = vld [vmem:[#allocation6 + $0x338] sm:$0xff]
    %v1880 = vld [vmem:[#allocation6 + $0x340] sm:$0xff]
    %v1881 = vld [vmem:[#allocation6 + $0x348] sm:$0xff]
    %v1882 = vld [vmem:[#allocation6 + $0x350] sm:$0xff]
    %v1883 = vld [vmem:[#allocation6 + $0x358] sm:$0xff]
    %v1884 = vld [vmem:[#allocation6 + $0x360] sm:$0xff]
    %v1885 = vld [vmem:[#allocation6 + $0x368] sm:$0xff]
    %v1886 = vld [vmem:[#allocation6 + $0x370] sm:$0xff]
    %v1887 = vld [vmem:[#allocation6 + $0x378] sm:$0xff]
    %v1888 = vld [vmem:[#allocation6 + $0x380] sm:$0xff]
    %v1889 = vld [vmem:[#allocation6 + $0x388] sm:$0xff]
    %v1890 = vld [vmem:[#allocation6 + $0x390] sm:$0xff]
    %v1891 = vld [vmem:[#allocation6 + $0x398] sm:$0xff]
    %v1892 = vld [vmem:[#allocation6 + $0x3a0] sm:$0xff]
    %v1893 = vld [vmem:[#allocation6 + $0x3a8] sm:$0xff]
    %v1894 = vld [vmem:[#allocation6 + $0x3b0] sm:$0xff]
    %v1895 = vld [vmem:[#allocation6 + $0x3b8] sm:$0xff]
    %v1896 = vld [vmem:[#allocation6 + $0x3c0] sm:$0xff]
    %v1897 = vld [vmem:[#allocation6 + $0x3c8] sm:$0xff]
    %v1898 = vld [vmem:[#allocation6 + $0x3d0] sm:$0xff]
    %v1899 = vld [vmem:[#allocation6 + $0x3d8] sm:$0xff]
    %v1900 = vld [vmem:[#allocation6 + $0x3e0] sm:$0xff]
    %v1901 = vld [vmem:[#allocation6 + $0x3e8] sm:$0xff]
    %v1902 = vld [vmem:[#allocation6 + $0x3f0] sm:$0xff]
    %v1903 = vld [vmem:[#allocation6 + $0x3f8] sm:$0xff]
    %v1904 = vld [vmem:[#allocation6 + $0x400] sm:$0xff]
    %v1905 = vld [vmem:[#allocation6 + $0x408] sm:$0xff]
    %v1906 = vld [vmem:[#allocation6 + $0x410] sm:$0xff]
    %v1907 = vld [vmem:[#allocation6 + $0x418] sm:$0xff]
    %v1908 = vld [vmem:[#allocation6 + $0x420] sm:$0xff]
    %v1909 = vld [vmem:[#allocation6 + $0x428] sm:$0xff]
    %v1910 = vld [vmem:[#allocation6 + $0x430] sm:$0xff]
    %v1911 = vld [vmem:[#allocation6 + $0x438] sm:$0xff]
    %v1912 = vld [vmem:[#allocation6 + $0x440] sm:$0xff]
    %v1913 = vld [vmem:[#allocation6 + $0x448] sm:$0xff]
    %v1914 = vld [vmem:[#allocation6 + $0x450] sm:$0xff]
    %v1915 = vld [vmem:[#allocation6 + $0x458] sm:$0xff]
    %v1916 = vld [vmem:[#allocation6 + $0x460] sm:$0xff]
    %v1917 = vld [vmem:[#allocation6 + $0x468] sm:$0xff]
    %v1918 = vld [vmem:[#allocation6 + $0x470] sm:$0xff]
    %v1919 = vld [vmem:[#allocation6 + $0x478] sm:$0xff]
    %v1920 = vld [vmem:[#allocation6 + $0x480] sm:$0xff]
    %v1921 = vld [vmem:[#allocation6 + $0x488] sm:$0xff]
    %v1922 = vld [vmem:[#allocation6 + $0x490] sm:$0xff]
    %v1923 = vld [vmem:[#allocation6 + $0x498] sm:$0xff]
    %v1924 = vld [vmem:[#allocation6 + $0x4a0] sm:$0xff]
    %v1925 = vld [vmem:[#allocation6 + $0x4a8] sm:$0xff]
    %v1926 = vld [vmem:[#allocation6 + $0x4b0] sm:$0xff]
    %v1927 = vld [vmem:[#allocation6 + $0x4b8] sm:$0xff]
    %v1928 = vld [vmem:[#allocation6 + $0x4c0] sm:$0xff]
    %v1929 = vld [vmem:[#allocation6 + $0x4c8] sm:$0xff]
    %v1930 = vld [vmem:[#allocation6 + $0x4d0] sm:$0xff]
    %v1931 = vld [vmem:[#allocation6 + $0x4d8] sm:$0xff]
    %v1932 = vld [vmem:[#allocation6 + $0x4e0] sm:$0xff]
    %v1933 = vld [vmem:[#allocation6 + $0x4e8] sm:$0xff]
    %v1934 = vld [vmem:[#allocation6 + $0x4f0] sm:$0xff]
    %v1935 = vld [vmem:[#allocation6 + $0x4f8] sm:$0xff]
    %v1936 = vld [vmem:[#allocation6 + $0x500] sm:$0xff]
    %v1937 = vld [vmem:[#allocation6 + $0x508] sm:$0xff]
    %v1938 = vld [vmem:[#allocation6 + $0x510] sm:$0xff]
    %v1939 = vld [vmem:[#allocation6 + $0x518] sm:$0xff]
    %v1940 = vld [vmem:[#allocation6 + $0x520] sm:$0xff]
    %v1941 = vld [vmem:[#allocation6 + $0x528] sm:$0xff]
    %v1942 = vld [vmem:[#allocation6 + $0x530] sm:$0xff]
    %v1943 = vld [vmem:[#allocation6 + $0x538] sm:$0xff]
    %v1944 = vld [vmem:[#allocation6 + $0x540] sm:$0xff]
    %v1945 = vld [vmem:[#allocation6 + $0x548] sm:$0xff]
    %v1946 = vld [vmem:[#allocation6 + $0x550] sm:$0xff]
    %v1947 = vld [vmem:[#allocation6 + $0x558] sm:$0xff]
    %v1948 = vld [vmem:[#allocation6 + $0x560] sm:$0xff]
    %v1949 = vld [vmem:[#allocation6 + $0x568] sm:$0xff]
    %v1950 = vld [vmem:[#allocation6 + $0x570] sm:$0xff]
    %v1951 = vld [vmem:[#allocation6 + $0x578] sm:$0xff]
    %v1952 = vld [vmem:[#allocation6 + $0x580] sm:$0xff]
    %v1953 = vld [vmem:[#allocation6 + $0x588] sm:$0xff]
    %v1954 = vld [vmem:[#allocation6 + $0x590] sm:$0xff]
    %v1955 = vld [vmem:[#allocation6 + $0x598] sm:$0xff]
    %v1956 = vld [vmem:[#allocation6 + $0x5a0] sm:$0xff]
    %v1957 = vld [vmem:[#allocation6 + $0x5a8] sm:$0xff]
    %v1958 = vld [vmem:[#allocation6 + $0x5b0] sm:$0xff]
    %v1959 = vld [vmem:[#allocation6 + $0x5b8] sm:$0xff]
    %v1960 = vld [vmem:[#allocation6 + $0x5c0] sm:$0xff]
    %v1961 = vld [vmem:[#allocation6 + $0x5c8] sm:$0xff]
    %v1962 = vld [vmem:[#allocation6 + $0x5d0] sm:$0xff]
    %v1963 = vld [vmem:[#allocation6 + $0x5d8] sm:$0xff]
    %v1964 = vld [vmem:[#allocation6 + $0x5e0] sm:$0xff]
    %v1965 = vld [vmem:[#allocation6 + $0x5e8] sm:$0xff]
    %v1966 = vld [vmem:[#allocation6 + $0x5f0] sm:$0xff]
    %v1967 = vld [vmem:[#allocation6 + $0x5f8] sm:$0xff]
    %v1968 = vld [vmem:[#allocation6 + $0x600] sm:$0xff]
    %v1969 = vld [vmem:[#allocation6 + $0x608] sm:$0xff]
    %v1970 = vld [vmem:[#allocation6 + $0x610] sm:$0xff]
    %v1971 = vld [vmem:[#allocation6 + $0x618] sm:$0xff]
    %v1972 = vld [vmem:[#allocation6 + $0x620] sm:$0xff]
    %v1973 = vld [vmem:[#allocation6 + $0x628] sm:$0xff]
    %v1974 = vld [vmem:[#allocation6 + $0x630] sm:$0xff]
    %v1975 = vld [vmem:[#allocation6 + $0x638] sm:$0xff]
    %v1976 = vld [vmem:[#allocation6 + $0x640] sm:$0xff]
    %v1977 = vld [vmem:[#allocation6 + $0x648] sm:$0xff]
    %v1978 = vld [vmem:[#allocation6 + $0x650] sm:$0xff]
    %v1979 = vld [vmem:[#allocation6 + $0x658] sm:$0xff]
    %v1980 = vld [vmem:[#allocation6 + $0x660] sm:$0xff]
    %v1981 = vld [vmem:[#allocation6 + $0x668] sm:$0xff]
    %v1982 = vld [vmem:[#allocation6 + $0x670] sm:$0xff]
    %v1983 = vld [vmem:[#allocation6 + $0x678] sm:$0xff]
    %v1984 = vld [vmem:[#allocation6 + $0x680] sm:$0xff]
    %v1985 = vld [vmem:[#allocation6 + $0x688] sm:$0xff]
    %v1986 = vld [vmem:[#allocation6 + $0x690] sm:$0xff]
    %v1987 = vld [vmem:[#allocation6 + $0x698] sm:$0xff]
    %v1988 = vld [vmem:[#allocation6 + $0x6a0] sm:$0xff]
    %v1989 = vld [vmem:[#allocation6 + $0x6a8] sm:$0xff]
    %v1990 = vld [vmem:[#allocation6 + $0x6b0] sm:$0xff]
    %v1991 = vld [vmem:[#allocation6 + $0x6b8] sm:$0xff]
    %v1992 = vld [vmem:[#allocation6 + $0x6c0] sm:$0xff]
    %v1993 = vld [vmem:[#allocation6 + $0x6c8] sm:$0xff]
    %v1994 = vld [vmem:[#allocation6 + $0x6d0] sm:$0xff]
    %v1995 = vld [vmem:[#allocation6 + $0x6d8] sm:$0xff]
    %v1996 = vld [vmem:[#allocation6 + $0x6e0] sm:$0xff]
    %v1997 = vld [vmem:[#allocation6 + $0x6e8] sm:$0xff]
    %v1998 = vld [vmem:[#allocation6 + $0x6f0] sm:$0xff]
    %v1999 = vld [vmem:[#allocation6 + $0x6f8] sm:$0xff]
    %v2000 = vld [vmem:[#allocation6 + $0x700] sm:$0xff]
    %v2001 = vld [vmem:[#allocation6 + $0x708] sm:$0xff]
    %v2002 = vld [vmem:[#allocation6 + $0x710] sm:$0xff]
    %v2003 = vld [vmem:[#allocation6 + $0x718] sm:$0xff]
    %v2004 = vld [vmem:[#allocation6 + $0x720] sm:$0xff]
    %v2005 = vld [vmem:[#allocation6 + $0x728] sm:$0xff]
    %v2006 = vld [vmem:[#allocation6 + $0x730] sm:$0xff]
    %v2007 = vld [vmem:[#allocation6 + $0x738] sm:$0xff]
    %v2008 = vld [vmem:[#allocation6 + $0x740] sm:$0xff]
    %v2009 = vld [vmem:[#allocation6 + $0x748] sm:$0xff]
    %v2010 = vld [vmem:[#allocation6 + $0x750] sm:$0xff]
    %v2011 = vld [vmem:[#allocation6 + $0x758] sm:$0xff]
    %v2012 = vld [vmem:[#allocation6 + $0x760] sm:$0xff]
    %v2013 = vld [vmem:[#allocation6 + $0x768] sm:$0xff]
    %v2014 = vld [vmem:[#allocation6 + $0x770] sm:$0xff]
    %v2015 = vld [vmem:[#allocation6 + $0x778] sm:$0xff]
    %v2016 = vld [vmem:[#allocation6 + $0x780] sm:$0xff]
    %v2017 = vld [vmem:[#allocation6 + $0x788] sm:$0xff]
    %v2018 = vld [vmem:[#allocation6 + $0x790] sm:$0xff]
    %v2019 = vld [vmem:[#allocation6 + $0x798] sm:$0xff]
    %v2020 = vld [vmem:[#allocation6 + $0x7a0] sm:$0xff]
    %v2021 = vld [vmem:[#allocation6 + $0x7a8] sm:$0xff]
    %v2022 = vld [vmem:[#allocation6 + $0x7b0] sm:$0xff]
    %v2023 = vld [vmem:[#allocation6 + $0x7b8] sm:$0xff]
    %v2024 = vld [vmem:[#allocation6 + $0x7c0] sm:$0xff]
    %v2025 = vld [vmem:[#allocation6 + $0x7c8] sm:$0xff]
    %v2026 = vld [vmem:[#allocation6 + $0x7d0] sm:$0xff]
    %v2027 = vld [vmem:[#allocation6 + $0x7d8] sm:$0xff]
    %v2028 = vld [vmem:[#allocation6 + $0x7e0] sm:$0xff]
    %v2029 = vld [vmem:[#allocation6 + $0x7e8] sm:$0xff]
    %v2030 = vld [vmem:[#allocation6 + $0x7f0] sm:$0xff]
    %v2031 = vld [vmem:[#allocation6 + $0x7f8] sm:$0xff]
    %v2032 = vld [vmem:[%s0 + $0x100] sm:$0xff]
    %v2033 = vld [vmem:[%s0 + $0x108] sm:$0xff]
    %v2034 = vld [vmem:[%s0 + $0x110] sm:$0xff]
    %v2035 = vld [vmem:[%s0 + $0x118] sm:$0xff]
    %v2036 = vld [vmem:[%s0 + $0x120] sm:$0xff]
    %v2037 = vld [vmem:[%s0 + $0x128] sm:$0xff]
    %v2038 = vld [vmem:[%s0 + $0x130] sm:$0xff]
    %v2039 = vld [vmem:[%s0 + $0x138] sm:$0xff]
    %v2040 = vld [vmem:[%s0 + $0x140] sm:$0xff]
    %v2041 = vld [vmem:[%s0 + $0x148] sm:$0xff]
    %v2042 = vld [vmem:[%s0 + $0x150] sm:$0xff]
    %v2043 = vld [vmem:[%s0 + $0x158] sm:$0xff]
    %v2044 = vld [vmem:[%s0 + $0x160] sm:$0xff]
    %v2045 = vld [vmem:[%s0 + $0x168] sm:$0xff]
    %v2046 = vld [vmem:[%s0 + $0x170] sm:$0xff]
    %v2047 = vld [vmem:[%s0 + $0x178] sm:$0xff]
    %v2048 = vld [vmem:[%s0 + $0x180] sm:$0xff]
    %v2049 = vld [vmem:[%s0 + $0x188] sm:$0xff]
    %v2050 = vld [vmem:[%s0 + $0x190] sm:$0xff]
    %v2051 = vld [vmem:[%s0 + $0x198] sm:$0xff]
    %v2052 = vld [vmem:[%s0 + $0x1a0] sm:$0xff]
    %v2053 = vld [vmem:[%s0 + $0x1a8] sm:$0xff]
    %v2054 = vld [vmem:[%s0 + $0x1b0] sm:$0xff]
    %v2055 = vld [vmem:[%s0 + $0x1b8] sm:$0xff]
    %v2056 = vld [vmem:[%s0 + $0x1c0] sm:$0xff]
    %v2057 = vld [vmem:[%s0 + $0x1c8] sm:$0xff]
    %v2058 = vld [vmem:[%s0 + $0x1d0] sm:$0xff]
    %v2059 = vld [vmem:[%s0 + $0x1d8] sm:$0xff]
    %v2060 = vld [vmem:[%s0 + $0x1e0] sm:$0xff]
    %v2061 = vld [vmem:[%s0 + $0x1e8] sm:$0xff]
    %v2062 = vld [vmem:[%s0 + $0x1f0] sm:$0xff]
    %v2063 = vld [vmem:[%s0 + $0x1f8] sm:$0xff]
    %2064 = vmatpush.msra.mxu0 %v2047
    %2065 = vmatpush.msra.mxu0 %v2046
    %2066 = vmatpush.msra.mxu0 %v2045
    %2067 = vmatpush.msra.mxu0 %v2044
    %2068 = vmatpush.msra.mxu0 %v2043
    %2069 = vmatpush.msra.mxu0 %v2042
    %2070 = vmatpush.msra.mxu0 %v2041
    %2071 = vmatpush.msra.mxu0 %v2040
    %2072 = vmatpush.msra.mxu0 %v2039
    %2073 = vmatpush.msra.mxu0 %v2038
    %2074 = vmatpush.msra.mxu0 %v2037
    %2075 = vmatpush.msra.mxu0 %v2036
    %2076 = vmatpush.msra.mxu0 %v2035
    %2077 = vmatpush.msra.mxu0 %v2034
    %2078 = vmatpush.msra.mxu0 %v2033
    %2079 = vmatpush.msra.mxu0 %v2032
    %2080 = vmatmul.f32.gmra.mxu0 %v1776
    %v2081 = vpop.f32.mrf.mxu0
    %v2082 = vadd.f32 0.0, %v2081
    %2083 = vmatmul.f32.gmra.mxu0 %v1778
    %v2084 = vpop.f32.mrf.mxu0
    %v2085 = vadd.f32 0.0, %v2084
    %2086 = vmatmul.f32.gmra.mxu0 %v1780
    %v2087 = vpop.f32.mrf.mxu0
    %v2088 = vadd.f32 0.0, %v2087
    %2089 = vmatmul.f32.gmra.mxu0 %v1782
    %v2090 = vpop.f32.mrf.mxu0
    %v2091 = vadd.f32 0.0, %v2090
    %2092 = vmatmul.f32.gmra.mxu0 %v1784
    %v2093 = vpop.f32.mrf.mxu0
    %v2094 = vadd.f32 0.0, %v2093
    %2095 = vmatmul.f32.gmra.mxu0 %v1786
    %v2096 = vpop.f32.mrf.mxu0
    %v2097 = vadd.f32 0.0, %v2096
    %2098 = vmatmul.f32.gmra.mxu0 %v1788
    %v2099 = vpop.f32.mrf.mxu0
    %v2100 = vadd.f32 0.0, %v2099
    %2101 = vmatmul.f32.gmra.mxu0 %v1790
    %v2102 = vpop.f32.mrf.mxu0
    %v2103 = vadd.f32 0.0, %v2102
    %2104 = vmatmul.f32.gmra.mxu0 %v1792
    %v2105 = vpop.f32.mrf.mxu0
    %v2106 = vadd.f32 0.0, %v2105
    %2107 = vmatmul.f32.gmra.mxu0 %v1794
    %v2108 = vpop.f32.mrf.mxu0
    %v2109 = vadd.f32 0.0, %v2108
    %2110 = vmatmul.f32.gmra.mxu0 %v1796
    %v2111 = vpop.f32.mrf.mxu0
    %v2112 = vadd.f32 0.0, %v2111
    %2113 = vmatmul.f32.gmra.mxu0 %v1798
    %v2114 = vpop.f32.mrf.mxu0
    %v2115 = vadd.f32 0.0, %v2114
    %2116 = vmatmul.f32.gmra.mxu0 %v1800
    %v2117 = vpop.f32.mrf.mxu0
    %v2118 = vadd.f32 0.0, %v2117
    %2119 = vmatmul.f32.gmra.mxu0 %v1802
    %v2120 = vpop.f32.mrf.mxu0
    %v2121 = vadd.f32 0.0, %v2120
    %2122 = vmatmul.f32.gmra.mxu0 %v1804
    %v2123 = vpop.f32.mrf.mxu0
    %v2124 = vadd.f32 0.0, %v2123
    %2125 = vmatmul.f32.gmra.mxu0 %v1806
    %v2126 = vpop.f32.mrf.mxu0
    %v2127 = vadd.f32 0.0, %v2126
    %2128 = vmatmul.f32.gmra.mxu0 %v1808
    %v2129 = vpop.f32.mrf.mxu0
    %v2130 = vadd.f32 0.0, %v2129
    %2131 = vmatmul.f32.gmra.mxu0 %v1810
    %v2132 = vpop.f32.mrf.mxu0
    %v2133 = vadd.f32 0.0, %v2132
    %2134 = vmatmul.f32.gmra.mxu0 %v1812
    %v2135 = vpop.f32.mrf.mxu0
    %v2136 = vadd.f32 0.0, %v2135
    %2137 = vmatmul.f32.gmra.mxu0 %v1814
    %v2138 = vpop.f32.mrf.mxu0
    %v2139 = vadd.f32 0.0, %v2138
    %2140 = vmatmul.f32.gmra.mxu0 %v1816
    %v2141 = vpop.f32.mrf.mxu0
    %v2142 = vadd.f32 0.0, %v2141
    %2143 = vmatmul.f32.gmra.mxu0 %v1818
    %v2144 = vpop.f32.mrf.mxu0
    %v2145 = vadd.f32 0.0, %v2144
    %2146 = vmatmul.f32.gmra.mxu0 %v1820
    %v2147 = vpop.f32.mrf.mxu0
    %v2148 = vadd.f32 0.0, %v2147
    %2149 = vmatmul.f32.gmra.mxu0 %v1822
    %v2150 = vpop.f32.mrf.mxu0
    %v2151 = vadd.f32 0.0, %v2150
    %2152 = vmatmul.f32.gmra.mxu0 %v1824
    %v2153 = vpop.f32.mrf.mxu0
    %v2154 = vadd.f32 0.0, %v2153
    %2155 = vmatmul.f32.gmra.mxu0 %v1826
    %v2156 = vpop.f32.mrf.mxu0
    %v2157 = vadd.f32 0.0, %v2156
    %2158 = vmatmul.f32.gmra.mxu0 %v1828
    %v2159 = vpop.f32.mrf.mxu0
    %v2160 = vadd.f32 0.0, %v2159
    %2161 = vmatmul.f32.gmra.mxu0 %v1830
    %v2162 = vpop.f32.mrf.mxu0
    %v2163 = vadd.f32 0.0, %v2162
    %2164 = vmatmul.f32.gmra.mxu0 %v1832
    %v2165 = vpop.f32.mrf.mxu0
    %v2166 = vadd.f32 0.0, %v2165
    %2167 = vmatmul.f32.gmra.mxu0 %v1834
    %v2168 = vpop.f32.mrf.mxu0
    %v2169 = vadd.f32 0.0, %v2168
    %2170 = vmatmul.f32.gmra.mxu0 %v1836
    %v2171 = vpop.f32.mrf.mxu0
    %v2172 = vadd.f32 0.0, %v2171
    %2173 = vmatmul.f32.gmra.mxu0 %v1838
    %v2174 = vpop.f32.mrf.mxu0
    %v2175 = vadd.f32 0.0, %v2174
    %2176 = vmatmul.f32.gmra.mxu0 %v1840
    %v2177 = vpop.f32.mrf.mxu0
    %v2178 = vadd.f32 0.0, %v2177
    %2179 = vmatmul.f32.gmra.mxu0 %v1842
    %v2180 = vpop.f32.mrf.mxu0
    %v2181 = vadd.f32 0.0, %v2180
    %2182 = vmatmul.f32.gmra.mxu0 %v1844
    %v2183 = vpop.f32.mrf.mxu0
    %v2184 = vadd.f32 0.0, %v2183
    %2185 = vmatmul.f32.gmra.mxu0 %v1846
    %v2186 = vpop.f32.mrf.mxu0
    %v2187 = vadd.f32 0.0, %v2186
    %2188 = vmatmul.f32.gmra.mxu0 %v1848
    %v2189 = vpop.f32.mrf.mxu0
    %v2190 = vadd.f32 0.0, %v2189
    %2191 = vmatmul.f32.gmra.mxu0 %v1850
    %v2192 = vpop.f32.mrf.mxu0
    %v2193 = vadd.f32 0.0, %v2192
    %2194 = vmatmul.f32.gmra.mxu0 %v1852
    %v2195 = vpop.f32.mrf.mxu0
    %v2196 = vadd.f32 0.0, %v2195
    %2197 = vmatmul.f32.gmra.mxu0 %v1854
    %v2198 = vpop.f32.mrf.mxu0
    %v2199 = vadd.f32 0.0, %v2198
    %2200 = vmatmul.f32.gmra.mxu0 %v1856
    %v2201 = vpop.f32.mrf.mxu0
    %v2202 = vadd.f32 0.0, %v2201
    %2203 = vmatmul.f32.gmra.mxu0 %v1858
    %v2204 = vpop.f32.mrf.mxu0
    %v2205 = vadd.f32 0.0, %v2204
    %2206 = vmatmul.f32.gmra.mxu0 %v1860
    %v2207 = vpop.f32.mrf.mxu0
    %v2208 = vadd.f32 0.0, %v2207
    %2209 = vmatmul.f32.gmra.mxu0 %v1862
    %v2210 = vpop.f32.mrf.mxu0
    %v2211 = vadd.f32 0.0, %v2210
    %2212 = vmatmul.f32.gmra.mxu0 %v1864
    %v2213 = vpop.f32.mrf.mxu0
    %v2214 = vadd.f32 0.0, %v2213
    %2215 = vmatmul.f32.gmra.mxu0 %v1866
    %v2216 = vpop.f32.mrf.mxu0
    %v2217 = vadd.f32 0.0, %v2216
    %2218 = vmatmul.f32.gmra.mxu0 %v1868
    %v2219 = vpop.f32.mrf.mxu0
    %v2220 = vadd.f32 0.0, %v2219
    %2221 = vmatmul.f32.gmra.mxu0 %v1870
    %v2222 = vpop.f32.mrf.mxu0
    %v2223 = vadd.f32 0.0, %v2222
    %2224 = vmatmul.f32.gmra.mxu0 %v1872
    %v2225 = vpop.f32.mrf.mxu0
    %v2226 = vadd.f32 0.0, %v2225
    %2227 = vmatmul.f32.gmra.mxu0 %v1874
    %v2228 = vpop.f32.mrf.mxu0
    %v2229 = vadd.f32 0.0, %v2228
    %2230 = vmatmul.f32.gmra.mxu0 %v1876
    %v2231 = vpop.f32.mrf.mxu0
    %v2232 = vadd.f32 0.0, %v2231
    %2233 = vmatmul.f32.gmra.mxu0 %v1878
    %v2234 = vpop.f32.mrf.mxu0
    %v2235 = vadd.f32 0.0, %v2234
    %2236 = vmatmul.f32.gmra.mxu0 %v1880
    %v2237 = vpop.f32.mrf.mxu0
    %v2238 = vadd.f32 0.0, %v2237
    %2239 = vmatmul.f32.gmra.mxu0 %v1882
    %v2240 = vpop.f32.mrf.mxu0
    %v2241 = vadd.f32 0.0, %v2240
    %2242 = vmatmul.f32.gmra.mxu0 %v1884
    %v2243 = vpop.f32.mrf.mxu0
    %v2244 = vadd.f32 0.0, %v2243
    %2245 = vmatmul.f32.gmra.mxu0 %v1886
    %v2246 = vpop.f32.mrf.mxu0
    %v2247 = vadd.f32 0.0, %v2246
    %2248 = vmatmul.f32.gmra.mxu0 %v1888
    %v2249 = vpop.f32.mrf.mxu0
    %v2250 = vadd.f32 0.0, %v2249
    %2251 = vmatmul.f32.gmra.mxu0 %v1890
    %v2252 = vpop.f32.mrf.mxu0
    %v2253 = vadd.f32 0.0, %v2252
    %2254 = vmatmul.f32.gmra.mxu0 %v1892
    %v2255 = vpop.f32.mrf.mxu0
    %v2256 = vadd.f32 0.0, %v2255
    %2257 = vmatmul.f32.gmra.mxu0 %v1894
    %v2258 = vpop.f32.mrf.mxu0
    %v2259 = vadd.f32 0.0, %v2258
    %2260 = vmatmul.f32.gmra.mxu0 %v1896
    %v2261 = vpop.f32.mrf.mxu0
    %v2262 = vadd.f32 0.0, %v2261
    %2263 = vmatmul.f32.gmra.mxu0 %v1898
    %v2264 = vpop.f32.mrf.mxu0
    %v2265 = vadd.f32 0.0, %v2264
    %2266 = vmatmul.f32.gmra.mxu0 %v1900
    %v2267 = vpop.f32.mrf.mxu0
    %v2268 = vadd.f32 0.0, %v2267
    %2269 = vmatmul.f32.gmra.mxu0 %v1902
    %v2270 = vpop.f32.mrf.mxu0
    %v2271 = vadd.f32 0.0, %v2270
    %2272 = vmatmul.f32.gmra.mxu0 %v1904
    %v2273 = vpop.f32.mrf.mxu0
    %v2274 = vadd.f32 0.0, %v2273
    %2275 = vmatmul.f32.gmra.mxu0 %v1906
    %v2276 = vpop.f32.mrf.mxu0
    %v2277 = vadd.f32 0.0, %v2276
    %2278 = vmatmul.f32.gmra.mxu0 %v1908
    %v2279 = vpop.f32.mrf.mxu0
    %v2280 = vadd.f32 0.0, %v2279
    %2281 = vmatmul.f32.gmra.mxu0 %v1910
    %v2282 = vpop.f32.mrf.mxu0
    %v2283 = vadd.f32 0.0, %v2282
    %2284 = vmatmul.f32.gmra.mxu0 %v1912
    %v2285 = vpop.f32.mrf.mxu0
    %v2286 = vadd.f32 0.0, %v2285
    %2287 = vmatmul.f32.gmra.mxu0 %v1914
    %v2288 = vpop.f32.mrf.mxu0
    %v2289 = vadd.f32 0.0, %v2288
    %2290 = vmatmul.f32.gmra.mxu0 %v1916
    %v2291 = vpop.f32.mrf.mxu0
    %v2292 = vadd.f32 0.0, %v2291
    %2293 = vmatmul.f32.gmra.mxu0 %v1918
    %v2294 = vpop.f32.mrf.mxu0
    %v2295 = vadd.f32 0.0, %v2294
    %2296 = vmatmul.f32.gmra.mxu0 %v1920
    %v2297 = vpop.f32.mrf.mxu0
    %v2298 = vadd.f32 0.0, %v2297
    %2299 = vmatmul.f32.gmra.mxu0 %v1922
    %v2300 = vpop.f32.mrf.mxu0
    %v2301 = vadd.f32 0.0, %v2300
    %2302 = vmatmul.f32.gmra.mxu0 %v1924
    %v2303 = vpop.f32.mrf.mxu0
    %v2304 = vadd.f32 0.0, %v2303
    %2305 = vmatmul.f32.gmra.mxu0 %v1926
    %v2306 = vpop.f32.mrf.mxu0
    %v2307 = vadd.f32 0.0, %v2306
    %2308 = vmatmul.f32.gmra.mxu0 %v1928
    %v2309 = vpop.f32.mrf.mxu0
    %v2310 = vadd.f32 0.0, %v2309
    %2311 = vmatmul.f32.gmra.mxu0 %v1930
    %v2312 = vpop.f32.mrf.mxu0
    %v2313 = vadd.f32 0.0, %v2312
    %2314 = vmatmul.f32.gmra.mxu0 %v1932
    %v2315 = vpop.f32.mrf.mxu0
    %v2316 = vadd.f32 0.0, %v2315
    %2317 = vmatmul.f32.gmra.mxu0 %v1934
    %v2318 = vpop.f32.mrf.mxu0
    %v2319 = vadd.f32 0.0, %v2318
    %2320 = vmatmul.f32.gmra.mxu0 %v1936
    %v2321 = vpop.f32.mrf.mxu0
    %v2322 = vadd.f32 0.0, %v2321
    %2323 = vmatmul.f32.gmra.mxu0 %v1938
    %v2324 = vpop.f32.mrf.mxu0
    %v2325 = vadd.f32 0.0, %v2324
    %2326 = vmatmul.f32.gmra.mxu0 %v1940
    %v2327 = vpop.f32.mrf.mxu0
    %v2328 = vadd.f32 0.0, %v2327
    %2329 = vmatmul.f32.gmra.mxu0 %v1942
    %v2330 = vpop.f32.mrf.mxu0
    %v2331 = vadd.f32 0.0, %v2330
    %2332 = vmatmul.f32.gmra.mxu0 %v1944
    %v2333 = vpop.f32.mrf.mxu0
    %v2334 = vadd.f32 0.0, %v2333
    %2335 = vmatmul.f32.gmra.mxu0 %v1946
    %v2336 = vpop.f32.mrf.mxu0
    %v2337 = vadd.f32 0.0, %v2336
    %2338 = vmatmul.f32.gmra.mxu0 %v1948
    %v2339 = vpop.f32.mrf.mxu0
    %v2340 = vadd.f32 0.0, %v2339
    %2341 = vmatmul.f32.gmra.mxu0 %v1950
    %v2342 = vpop.f32.mrf.mxu0
    %v2343 = vadd.f32 0.0, %v2342
    %2344 = vmatmul.f32.gmra.mxu0 %v1952
    %v2345 = vpop.f32.mrf.mxu0
    %v2346 = vadd.f32 0.0, %v2345
    %2347 = vmatmul.f32.gmra.mxu0 %v1954
    %v2348 = vpop.f32.mrf.mxu0
    %v2349 = vadd.f32 0.0, %v2348
    %2350 = vmatmul.f32.gmra.mxu0 %v1956
    %v2351 = vpop.f32.mrf.mxu0
    %v2352 = vadd.f32 0.0, %v2351
    %2353 = vmatmul.f32.gmra.mxu0 %v1958
    %v2354 = vpop.f32.mrf.mxu0
    %v2355 = vadd.f32 0.0, %v2354
    %2356 = vmatmul.f32.gmra.mxu0 %v1960
    %v2357 = vpop.f32.mrf.mxu0
    %v2358 = vadd.f32 0.0, %v2357
    %2359 = vmatmul.f32.gmra.mxu0 %v1962
    %v2360 = vpop.f32.mrf.mxu0
    %v2361 = vadd.f32 0.0, %v2360
    %2362 = vmatmul.f32.gmra.mxu0 %v1964
    %v2363 = vpop.f32.mrf.mxu0
    %v2364 = vadd.f32 0.0, %v2363
    %2365 = vmatmul.f32.gmra.mxu0 %v1966
    %v2366 = vpop.f32.mrf.mxu0
    %v2367 = vadd.f32 0.0, %v2366
    %2368 = vmatmul.f32.gmra.mxu0 %v1968
    %v2369 = vpop.f32.mrf.mxu0
    %v2370 = vadd.f32 0.0, %v2369
    %2371 = vmatmul.f32.gmra.mxu0 %v1970
    %v2372 = vpop.f32.mrf.mxu0
    %v2373 = vadd.f32 0.0, %v2372
    %2374 = vmatmul.f32.gmra.mxu0 %v1972
    %v2375 = vpop.f32.mrf.mxu0
    %v2376 = vadd.f32 0.0, %v2375
    %2377 = vmatmul.f32.gmra.mxu0 %v1974
    %v2378 = vpop.f32.mrf.mxu0
    %v2379 = vadd.f32 0.0, %v2378
    %2380 = vmatmul.f32.gmra.mxu0 %v1976
    %v2381 = vpop.f32.mrf.mxu0
    %v2382 = vadd.f32 0.0, %v2381
    %2383 = vmatmul.f32.gmra.mxu0 %v1978
    %v2384 = vpop.f32.mrf.mxu0
    %v2385 = vadd.f32 0.0, %v2384
    %2386 = vmatmul.f32.gmra.mxu0 %v1980
    %v2387 = vpop.f32.mrf.mxu0
    %v2388 = vadd.f32 0.0, %v2387
    %2389 = vmatmul.f32.gmra.mxu0 %v1982
    %v2390 = vpop.f32.mrf.mxu0
    %v2391 = vadd.f32 0.0, %v2390
    %2392 = vmatmul.f32.gmra.mxu0 %v1984
    %v2393 = vpop.f32.mrf.mxu0
    %v2394 = vadd.f32 0.0, %v2393
    %2395 = vmatmul.f32.gmra.mxu0 %v1986
    %v2396 = vpop.f32.mrf.mxu0
    %v2397 = vadd.f32 0.0, %v2396
    %2398 = vmatmul.f32.gmra.mxu0 %v1988
    %v2399 = vpop.f32.mrf.mxu0
    %v2400 = vadd.f32 0.0, %v2399
    %2401 = vmatmul.f32.gmra.mxu0 %v1990
    %v2402 = vpop.f32.mrf.mxu0
    %v2403 = vadd.f32 0.0, %v2402
    %2404 = vmatmul.f32.gmra.mxu0 %v1992
    %v2405 = vpop.f32.mrf.mxu0
    %v2406 = vadd.f32 0.0, %v2405
    %2407 = vmatmul.f32.gmra.mxu0 %v1994
    %v2408 = vpop.f32.mrf.mxu0
    %v2409 = vadd.f32 0.0, %v2408
    %2410 = vmatmul.f32.gmra.mxu0 %v1996
    %v2411 = vpop.f32.mrf.mxu0
    %v2412 = vadd.f32 0.0, %v2411
    %2413 = vmatmul.f32.gmra.mxu0 %v1998
    %v2414 = vpop.f32.mrf.mxu0
    %v2415 = vadd.f32 0.0, %v2414
    %2416 = vmatmul.f32.gmra.mxu0 %v2000
    %v2417 = vpop.f32.mrf.mxu0
    %v2418 = vadd.f32 0.0, %v2417
    %2419 = vmatmul.f32.gmra.mxu0 %v2002
    %v2420 = vpop.f32.mrf.mxu0
    %v2421 = vadd.f32 0.0, %v2420
    %2422 = vmatmul.f32.gmra.mxu0 %v2004
    %v2423 = vpop.f32.mrf.mxu0
    %v2424 = vadd.f32 0.0, %v2423
    %2425 = vmatmul.f32.gmra.mxu0 %v2006
    %v2426 = vpop.f32.mrf.mxu0
    %v2427 = vadd.f32 0.0, %v2426
    %2428 = vmatmul.f32.gmra.mxu0 %v2008
    %v2429 = vpop.f32.mrf.mxu0
    %v2430 = vadd.f32 0.0, %v2429
    %2431 = vmatmul.f32.gmra.mxu0 %v2010
    %v2432 = vpop.f32.mrf.mxu0
    %v2433 = vadd.f32 0.0, %v2432
    %2434 = vmatmul.f32.gmra.mxu0 %v2012
    %v2435 = vpop.f32.mrf.mxu0
    %v2436 = vadd.f32 0.0, %v2435
    %2437 = vmatmul.f32.gmra.mxu0 %v2014
    %v2438 = vpop.f32.mrf.mxu0
    %v2439 = vadd.f32 0.0, %v2438
    %2440 = vmatmul.f32.gmra.mxu0 %v2016
    %v2441 = vpop.f32.mrf.mxu0
    %v2442 = vadd.f32 0.0, %v2441
    %2443 = vmatmul.f32.gmra.mxu0 %v2018
    %v2444 = vpop.f32.mrf.mxu0
    %v2445 = vadd.f32 0.0, %v2444
    %2446 = vmatmul.f32.gmra.mxu0 %v2020
    %v2447 = vpop.f32.mrf.mxu0
    %v2448 = vadd.f32 0.0, %v2447
    %2449 = vmatmul.f32.gmra.mxu0 %v2022
    %v2450 = vpop.f32.mrf.mxu0
    %v2451 = vadd.f32 0.0, %v2450
    %2452 = vmatmul.f32.gmra.mxu0 %v2024
    %v2453 = vpop.f32.mrf.mxu0
    %v2454 = vadd.f32 0.0, %v2453
    %2455 = vmatmul.f32.gmra.mxu0 %v2026
    %v2456 = vpop.f32.mrf.mxu0
    %v2457 = vadd.f32 0.0, %v2456
    %2458 = vmatmul.f32.gmra.mxu0 %v2028
    %v2459 = vpop.f32.mrf.mxu0
    %v2460 = vadd.f32 0.0, %v2459
    %2461 = vmatmul.f32.gmra.mxu0 %v2030
    %v2462 = vpop.f32.mrf.mxu0
    %v2463 = vadd.f32 0.0, %v2462
    %2464 = vdwg.mxu0
    %2465 = vmatpush.msra.mxu0 %v2063
    %2466 = vmatpush.msra.mxu0 %v2062
    %2467 = vmatpush.msra.mxu0 %v2061
    %2468 = vmatpush.msra.mxu0 %v2060
    %2469 = vmatpush.msra.mxu0 %v2059
    %2470 = vmatpush.msra.mxu0 %v2058
    %2471 = vmatpush.msra.mxu0 %v2057
    %2472 = vmatpush.msra.mxu0 %v2056
    %2473 = vmatpush.msra.mxu0 %v2055
    %2474 = vmatpush.msra.mxu0 %v2054
    %2475 = vmatpush.msra.mxu0 %v2053
    %2476 = vmatpush.msra.mxu0 %v2052
    %2477 = vmatpush.msra.mxu0 %v2051
    %2478 = vmatpush.msra.mxu0 %v2050
    %2479 = vmatpush.msra.mxu0 %v2049
    %2480 = vmatpush.msra.mxu0 %v2048
    %2481 = vmatmul.f32.gmra.mxu0 %v1777
    %v2482 = vpop.f32.mrf.mxu0
    %v2483 = vadd.f32 %v2082, %v2482
    %2484 = vmatmul.f32.gmra.mxu0 %v1779
    %v2485 = vpop.f32.mrf.mxu0
    %v2486 = vadd.f32 %v2085, %v2485
    %2487 = vmatmul.f32.gmra.mxu0 %v1781
    %v2488 = vpop.f32.mrf.mxu0
    %v2489 = vadd.f32 %v2088, %v2488
    %2490 = vmatmul.f32.gmra.mxu0 %v1783
    %v2491 = vpop.f32.mrf.mxu0
    %v2492 = vadd.f32 %v2091, %v2491
    %2493 = vmatmul.f32.gmra.mxu0 %v1785
    %v2494 = vpop.f32.mrf.mxu0
    %v2495 = vadd.f32 %v2094, %v2494
    %2496 = vmatmul.f32.gmra.mxu0 %v1787
    %v2497 = vpop.f32.mrf.mxu0
    %v2498 = vadd.f32 %v2097, %v2497
    %2499 = vmatmul.f32.gmra.mxu0 %v1789
    %v2500 = vpop.f32.mrf.mxu0
    %v2501 = vadd.f32 %v2100, %v2500
    %2502 = vmatmul.f32.gmra.mxu0 %v1791
    %v2503 = vpop.f32.mrf.mxu0
    %v2504 = vadd.f32 %v2103, %v2503
    %2505 = vmatmul.f32.gmra.mxu0 %v1793
    %v2506 = vpop.f32.mrf.mxu0
    %v2507 = vadd.f32 %v2106, %v2506
    %2508 = vmatmul.f32.gmra.mxu0 %v1795
    %v2509 = vpop.f32.mrf.mxu0
    %v2510 = vadd.f32 %v2109, %v2509
    %2511 = vmatmul.f32.gmra.mxu0 %v1797
    %v2512 = vpop.f32.mrf.mxu0
    %v2513 = vadd.f32 %v2112, %v2512
    %2514 = vmatmul.f32.gmra.mxu0 %v1799
    %v2515 = vpop.f32.mrf.mxu0
    %v2516 = vadd.f32 %v2115, %v2515
    %2517 = vmatmul.f32.gmra.mxu0 %v1801
    %v2518 = vpop.f32.mrf.mxu0
    %v2519 = vadd.f32 %v2118, %v2518
    %2520 = vmatmul.f32.gmra.mxu0 %v1803
    %v2521 = vpop.f32.mrf.mxu0
    %v2522 = vadd.f32 %v2121, %v2521
    %2523 = vmatmul.f32.gmra.mxu0 %v1805
    %v2524 = vpop.f32.mrf.mxu0
    %v2525 = vadd.f32 %v2124, %v2524
    %2526 = vmatmul.f32.gmra.mxu0 %v1807
    %v2527 = vpop.f32.mrf.mxu0
    %v2528 = vadd.f32 %v2127, %v2527
    %2529 = vmatmul.f32.gmra.mxu0 %v1809
    %v2530 = vpop.f32.mrf.mxu0
    %v2531 = vadd.f32 %v2130, %v2530
    %2532 = vmatmul.f32.gmra.mxu0 %v1811
    %v2533 = vpop.f32.mrf.mxu0
    %v2534 = vadd.f32 %v2133, %v2533
    %2535 = vmatmul.f32.gmra.mxu0 %v1813
    %v2536 = vpop.f32.mrf.mxu0
    %v2537 = vadd.f32 %v2136, %v2536
    %2538 = vmatmul.f32.gmra.mxu0 %v1815
    %v2539 = vpop.f32.mrf.mxu0
    %v2540 = vadd.f32 %v2139, %v2539
    %2541 = vmatmul.f32.gmra.mxu0 %v1817
    %v2542 = vpop.f32.mrf.mxu0
    %v2543 = vadd.f32 %v2142, %v2542
    %2544 = vmatmul.f32.gmra.mxu0 %v1819
    %v2545 = vpop.f32.mrf.mxu0
    %v2546 = vadd.f32 %v2145, %v2545
    %2547 = vmatmul.f32.gmra.mxu0 %v1821
    %v2548 = vpop.f32.mrf.mxu0
    %v2549 = vadd.f32 %v2148, %v2548
    %2550 = vmatmul.f32.gmra.mxu0 %v1823
    %v2551 = vpop.f32.mrf.mxu0
    %v2552 = vadd.f32 %v2151, %v2551
    %2553 = vmatmul.f32.gmra.mxu0 %v1825
    %v2554 = vpop.f32.mrf.mxu0
    %v2555 = vadd.f32 %v2154, %v2554
    %2556 = vmatmul.f32.gmra.mxu0 %v1827
    %v2557 = vpop.f32.mrf.mxu0
    %v2558 = vadd.f32 %v2157, %v2557
    %2559 = vmatmul.f32.gmra.mxu0 %v1829
    %v2560 = vpop.f32.mrf.mxu0
    %v2561 = vadd.f32 %v2160, %v2560
    %2562 = vmatmul.f32.gmra.mxu0 %v1831
    %v2563 = vpop.f32.mrf.mxu0
    %v2564 = vadd.f32 %v2163, %v2563
    %2565 = vmatmul.f32.gmra.mxu0 %v1833
    %v2566 = vpop.f32.mrf.mxu0
    %v2567 = vadd.f32 %v2166, %v2566
    %2568 = vmatmul.f32.gmra.mxu0 %v1835
    %v2569 = vpop.f32.mrf.mxu0
    %v2570 = vadd.f32 %v2169, %v2569
    %2571 = vmatmul.f32.gmra.mxu0 %v1837
    %v2572 = vpop.f32.mrf.mxu0
    %v2573 = vadd.f32 %v2172, %v2572
    %2574 = vmatmul.f32.gmra.mxu0 %v1839
    %v2575 = vpop.f32.mrf.mxu0
    %v2576 = vadd.f32 %v2175, %v2575
    %2577 = vmatmul.f32.gmra.mxu0 %v1841
    %v2578 = vpop.f32.mrf.mxu0
    %v2579 = vadd.f32 %v2178, %v2578
    %2580 = vmatmul.f32.gmra.mxu0 %v1843
    %v2581 = vpop.f32.mrf.mxu0
    %v2582 = vadd.f32 %v2181, %v2581
    %2583 = vmatmul.f32.gmra.mxu0 %v1845
    %v2584 = vpop.f32.mrf.mxu0
    %v2585 = vadd.f32 %v2184, %v2584
    %2586 = vmatmul.f32.gmra.mxu0 %v1847
    %v2587 = vpop.f32.mrf.mxu0
    %v2588 = vadd.f32 %v2187, %v2587
    %2589 = vmatmul.f32.gmra.mxu0 %v1849
    %v2590 = vpop.f32.mrf.mxu0
    %v2591 = vadd.f32 %v2190, %v2590
    %2592 = vmatmul.f32.gmra.mxu0 %v1851
    %v2593 = vpop.f32.mrf.mxu0
    %v2594 = vadd.f32 %v2193, %v2593
    %2595 = vmatmul.f32.gmra.mxu0 %v1853
    %v2596 = vpop.f32.mrf.mxu0
    %v2597 = vadd.f32 %v2196, %v2596
    %2598 = vmatmul.f32.gmra.mxu0 %v1855
    %v2599 = vpop.f32.mrf.mxu0
    %v2600 = vadd.f32 %v2199, %v2599
    %2601 = vmatmul.f32.gmra.mxu0 %v1857
    %v2602 = vpop.f32.mrf.mxu0
    %v2603 = vadd.f32 %v2202, %v2602
    %2604 = vmatmul.f32.gmra.mxu0 %v1859
    %v2605 = vpop.f32.mrf.mxu0
    %v2606 = vadd.f32 %v2205, %v2605
    %2607 = vmatmul.f32.gmra.mxu0 %v1861
    %v2608 = vpop.f32.mrf.mxu0
    %v2609 = vadd.f32 %v2208, %v2608
    %2610 = vmatmul.f32.gmra.mxu0 %v1863
    %v2611 = vpop.f32.mrf.mxu0
    %v2612 = vadd.f32 %v2211, %v2611
    %2613 = vmatmul.f32.gmra.mxu0 %v1865
    %v2614 = vpop.f32.mrf.mxu0
    %v2615 = vadd.f32 %v2214, %v2614
    %2616 = vmatmul.f32.gmra.mxu0 %v1867
    %v2617 = vpop.f32.mrf.mxu0
    %v2618 = vadd.f32 %v2217, %v2617
    %2619 = vmatmul.f32.gmra.mxu0 %v1869
    %v2620 = vpop.f32.mrf.mxu0
    %v2621 = vadd.f32 %v2220, %v2620
    %2622 = vmatmul.f32.gmra.mxu0 %v1871
    %v2623 = vpop.f32.mrf.mxu0
    %v2624 = vadd.f32 %v2223, %v2623
    %2625 = vmatmul.f32.gmra.mxu0 %v1873
    %v2626 = vpop.f32.mrf.mxu0
    %v2627 = vadd.f32 %v2226, %v2626
    %2628 = vmatmul.f32.gmra.mxu0 %v1875
    %v2629 = vpop.f32.mrf.mxu0
    %v2630 = vadd.f32 %v2229, %v2629
    %2631 = vmatmul.f32.gmra.mxu0 %v1877
    %v2632 = vpop.f32.mrf.mxu0
    %v2633 = vadd.f32 %v2232, %v2632
    %2634 = vmatmul.f32.gmra.mxu0 %v1879
    %v2635 = vpop.f32.mrf.mxu0
    %v2636 = vadd.f32 %v2235, %v2635
    %2637 = vmatmul.f32.gmra.mxu0 %v1881
    %v2638 = vpop.f32.mrf.mxu0
    %v2639 = vadd.f32 %v2238, %v2638
    %2640 = vmatmul.f32.gmra.mxu0 %v1883
    %v2641 = vpop.f32.mrf.mxu0
    %v2642 = vadd.f32 %v2241, %v2641
    %2643 = vmatmul.f32.gmra.mxu0 %v1885
    %v2644 = vpop.f32.mrf.mxu0
    %v2645 = vadd.f32 %v2244, %v2644
    %2646 = vmatmul.f32.gmra.mxu0 %v1887
    %v2647 = vpop.f32.mrf.mxu0
    %v2648 = vadd.f32 %v2247, %v2647
    %2649 = vmatmul.f32.gmra.mxu0 %v1889
    %v2650 = vpop.f32.mrf.mxu0
    %v2651 = vadd.f32 %v2250, %v2650
    %2652 = vmatmul.f32.gmra.mxu0 %v1891
    %v2653 = vpop.f32.mrf.mxu0
    %v2654 = vadd.f32 %v2253, %v2653
    %2655 = vmatmul.f32.gmra.mxu0 %v1893
    %v2656 = vpop.f32.mrf.mxu0
    %v2657 = vadd.f32 %v2256, %v2656
    %2658 = vmatmul.f32.gmra.mxu0 %v1895
    %v2659 = vpop.f32.mrf.mxu0
    %v2660 = vadd.f32 %v2259, %v2659
    %2661 = vmatmul.f32.gmra.mxu0 %v1897
    %v2662 = vpop.f32.mrf.mxu0
    %v2663 = vadd.f32 %v2262, %v2662
    %2664 = vmatmul.f32.gmra.mxu0 %v1899
    %v2665 = vpop.f32.mrf.mxu0
    %v2666 = vadd.f32 %v2265, %v2665
    %2667 = vmatmul.f32.gmra.mxu0 %v1901
    %v2668 = vpop.f32.mrf.mxu0
    %v2669 = vadd.f32 %v2268, %v2668
    %2670 = vmatmul.f32.gmra.mxu0 %v1903
    %v2671 = vpop.f32.mrf.mxu0
    %v2672 = vadd.f32 %v2271, %v2671
    %2673 = vmatmul.f32.gmra.mxu0 %v1905
    %v2674 = vpop.f32.mrf.mxu0
    %v2675 = vadd.f32 %v2274, %v2674
    %2676 = vmatmul.f32.gmra.mxu0 %v1907
    %v2677 = vpop.f32.mrf.mxu0
    %v2678 = vadd.f32 %v2277, %v2677
    %2679 = vmatmul.f32.gmra.mxu0 %v1909
    %v2680 = vpop.f32.mrf.mxu0
    %v2681 = vadd.f32 %v2280, %v2680
    %2682 = vmatmul.f32.gmra.mxu0 %v1911
    %v2683 = vpop.f32.mrf.mxu0
    %v2684 = vadd.f32 %v2283, %v2683
    %2685 = vmatmul.f32.gmra.mxu0 %v1913
    %v2686 = vpop.f32.mrf.mxu0
    %v2687 = vadd.f32 %v2286, %v2686
    %2688 = vmatmul.f32.gmra.mxu0 %v1915
    %v2689 = vpop.f32.mrf.mxu0
    %v2690 = vadd.f32 %v2289, %v2689
    %2691 = vmatmul.f32.gmra.mxu0 %v1917
    %v2692 = vpop.f32.mrf.mxu0
    %v2693 = vadd.f32 %v2292, %v2692
    %2694 = vmatmul.f32.gmra.mxu0 %v1919
    %v2695 = vpop.f32.mrf.mxu0
    %v2696 = vadd.f32 %v2295, %v2695
    %2697 = vmatmul.f32.gmra.mxu0 %v1921
    %v2698 = vpop.f32.mrf.mxu0
    %v2699 = vadd.f32 %v2298, %v2698
    %2700 = vmatmul.f32.gmra.mxu0 %v1923
    %v2701 = vpop.f32.mrf.mxu0
    %v2702 = vadd.f32 %v2301, %v2701
    %2703 = vmatmul.f32.gmra.mxu0 %v1925
    %v2704 = vpop.f32.mrf.mxu0
    %v2705 = vadd.f32 %v2304, %v2704
    %2706 = vmatmul.f32.gmra.mxu0 %v1927
    %v2707 = vpop.f32.mrf.mxu0
    %v2708 = vadd.f32 %v2307, %v2707
    %2709 = vmatmul.f32.gmra.mxu0 %v1929
    %v2710 = vpop.f32.mrf.mxu0
    %v2711 = vadd.f32 %v2310, %v2710
    %2712 = vmatmul.f32.gmra.mxu0 %v1931
    %v2713 = vpop.f32.mrf.mxu0
    %v2714 = vadd.f32 %v2313, %v2713
    %2715 = vmatmul.f32.gmra.mxu0 %v1933
    %v2716 = vpop.f32.mrf.mxu0
    %v2717 = vadd.f32 %v2316, %v2716
    %2718 = vmatmul.f32.gmra.mxu0 %v1935
    %v2719 = vpop.f32.mrf.mxu0
    %v2720 = vadd.f32 %v2319, %v2719
    %2721 = vmatmul.f32.gmra.mxu0 %v1937
    %v2722 = vpop.f32.mrf.mxu0
    %v2723 = vadd.f32 %v2322, %v2722
    %2724 = vmatmul.f32.gmra.mxu0 %v1939
    %v2725 = vpop.f32.mrf.mxu0
    %v2726 = vadd.f32 %v2325, %v2725
    %2727 = vmatmul.f32.gmra.mxu0 %v1941
    %v2728 = vpop.f32.mrf.mxu0
    %v2729 = vadd.f32 %v2328, %v2728
    %2730 = vmatmul.f32.gmra.mxu0 %v1943
    %v2731 = vpop.f32.mrf.mxu0
    %v2732 = vadd.f32 %v2331, %v2731
    %2733 = vmatmul.f32.gmra.mxu0 %v1945
    %v2734 = vpop.f32.mrf.mxu0
    %v2735 = vadd.f32 %v2334, %v2734
    %2736 = vmatmul.f32.gmra.mxu0 %v1947
    %v2737 = vpop.f32.mrf.mxu0
    %v2738 = vadd.f32 %v2337, %v2737
    %2739 = vmatmul.f32.gmra.mxu0 %v1949
    %v2740 = vpop.f32.mrf.mxu0
    %v2741 = vadd.f32 %v2340, %v2740
    %2742 = vmatmul.f32.gmra.mxu0 %v1951
    %v2743 = vpop.f32.mrf.mxu0
    %v2744 = vadd.f32 %v2343, %v2743
    %2745 = vmatmul.f32.gmra.mxu0 %v1953
    %v2746 = vpop.f32.mrf.mxu0
    %v2747 = vadd.f32 %v2346, %v2746
    %2748 = vmatmul.f32.gmra.mxu0 %v1955
    %v2749 = vpop.f32.mrf.mxu0
    %v2750 = vadd.f32 %v2349, %v2749
    %2751 = vmatmul.f32.gmra.mxu0 %v1957
    %v2752 = vpop.f32.mrf.mxu0
    %v2753 = vadd.f32 %v2352, %v2752
    %2754 = vmatmul.f32.gmra.mxu0 %v1959
    %v2755 = vpop.f32.mrf.mxu0
    %v2756 = vadd.f32 %v2355, %v2755
    %2757 = vmatmul.f32.gmra.mxu0 %v1961
    %v2758 = vpop.f32.mrf.mxu0
    %v2759 = vadd.f32 %v2358, %v2758
    %2760 = vmatmul.f32.gmra.mxu0 %v1963
    %v2761 = vpop.f32.mrf.mxu0
    %v2762 = vadd.f32 %v2361, %v2761
    %2763 = vmatmul.f32.gmra.mxu0 %v1965
    %v2764 = vpop.f32.mrf.mxu0
    %v2765 = vadd.f32 %v2364, %v2764
    %2766 = vmatmul.f32.gmra.mxu0 %v1967
    %v2767 = vpop.f32.mrf.mxu0
    %v2768 = vadd.f32 %v2367, %v2767
    %2769 = vmatmul.f32.gmra.mxu0 %v1969
    %v2770 = vpop.f32.mrf.mxu0
    %v2771 = vadd.f32 %v2370, %v2770
    %2772 = vmatmul.f32.gmra.mxu0 %v1971
    %v2773 = vpop.f32.mrf.mxu0
    %v2774 = vadd.f32 %v2373, %v2773
    %2775 = vmatmul.f32.gmra.mxu0 %v1973
    %v2776 = vpop.f32.mrf.mxu0
    %v2777 = vadd.f32 %v2376, %v2776
    %2778 = vmatmul.f32.gmra.mxu0 %v1975
    %v2779 = vpop.f32.mrf.mxu0
    %v2780 = vadd.f32 %v2379, %v2779
    %2781 = vmatmul.f32.gmra.mxu0 %v1977
    %v2782 = vpop.f32.mrf.mxu0
    %v2783 = vadd.f32 %v2382, %v2782
    %2784 = vmatmul.f32.gmra.mxu0 %v1979
    %v2785 = vpop.f32.mrf.mxu0
    %v2786 = vadd.f32 %v2385, %v2785
    %2787 = vmatmul.f32.gmra.mxu0 %v1981
    %v2788 = vpop.f32.mrf.mxu0
    %v2789 = vadd.f32 %v2388, %v2788
    %2790 = vmatmul.f32.gmra.mxu0 %v1983
    %v2791 = vpop.f32.mrf.mxu0
    %v2792 = vadd.f32 %v2391, %v2791
    %2793 = vmatmul.f32.gmra.mxu0 %v1985
    %v2794 = vpop.f32.mrf.mxu0
    %v2795 = vadd.f32 %v2394, %v2794
    %2796 = vmatmul.f32.gmra.mxu0 %v1987
    %v2797 = vpop.f32.mrf.mxu0
    %v2798 = vadd.f32 %v2397, %v2797
    %2799 = vmatmul.f32.gmra.mxu0 %v1989
    %v2800 = vpop.f32.mrf.mxu0
    %v2801 = vadd.f32 %v2400, %v2800
    %2802 = vmatmul.f32.gmra.mxu0 %v1991
    %v2803 = vpop.f32.mrf.mxu0
    %v2804 = vadd.f32 %v2403, %v2803
    %2805 = vmatmul.f32.gmra.mxu0 %v1993
    %v2806 = vpop.f32.mrf.mxu0
    %v2807 = vadd.f32 %v2406, %v2806
    %2808 = vmatmul.f32.gmra.mxu0 %v1995
    %v2809 = vpop.f32.mrf.mxu0
    %v2810 = vadd.f32 %v2409, %v2809
    %2811 = vmatmul.f32.gmra.mxu0 %v1997
    %v2812 = vpop.f32.mrf.mxu0
    %v2813 = vadd.f32 %v2412, %v2812
    %2814 = vmatmul.f32.gmra.mxu0 %v1999
    %v2815 = vpop.f32.mrf.mxu0
    %v2816 = vadd.f32 %v2415, %v2815
    %2817 = vmatmul.f32.gmra.mxu0 %v2001
    %v2818 = vpop.f32.mrf.mxu0
    %v2819 = vadd.f32 %v2418, %v2818
    %2820 = vmatmul.f32.gmra.mxu0 %v2003
    %v2821 = vpop.f32.mrf.mxu0
    %v2822 = vadd.f32 %v2421, %v2821
    %2823 = vmatmul.f32.gmra.mxu0 %v2005
    %v2824 = vpop.f32.mrf.mxu0
    %v2825 = vadd.f32 %v2424, %v2824
    %2826 = vmatmul.f32.gmra.mxu0 %v2007
    %v2827 = vpop.f32.mrf.mxu0
    %v2828 = vadd.f32 %v2427, %v2827
    %2829 = vmatmul.f32.gmra.mxu0 %v2009
    %v2830 = vpop.f32.mrf.mxu0
    %v2831 = vadd.f32 %v2430, %v2830
    %2832 = vmatmul.f32.gmra.mxu0 %v2011
    %v2833 = vpop.f32.mrf.mxu0
    %v2834 = vadd.f32 %v2433, %v2833
    %2835 = vmatmul.f32.gmra.mxu0 %v2013
    %v2836 = vpop.f32.mrf.mxu0
    %v2837 = vadd.f32 %v2436, %v2836
    %2838 = vmatmul.f32.gmra.mxu0 %v2015
    %v2839 = vpop.f32.mrf.mxu0
    %v2840 = vadd.f32 %v2439, %v2839
    %2841 = vmatmul.f32.gmra.mxu0 %v2017
    %v2842 = vpop.f32.mrf.mxu0
    %v2843 = vadd.f32 %v2442, %v2842
    %2844 = vmatmul.f32.gmra.mxu0 %v2019
    %v2845 = vpop.f32.mrf.mxu0
    %v2846 = vadd.f32 %v2445, %v2845
    %2847 = vmatmul.f32.gmra.mxu0 %v2021
    %v2848 = vpop.f32.mrf.mxu0
    %v2849 = vadd.f32 %v2448, %v2848
    %2850 = vmatmul.f32.gmra.mxu0 %v2023
    %v2851 = vpop.f32.mrf.mxu0
    %v2852 = vadd.f32 %v2451, %v2851
    %2853 = vmatmul.f32.gmra.mxu0 %v2025
    %v2854 = vpop.f32.mrf.mxu0
    %v2855 = vadd.f32 %v2454, %v2854
    %2856 = vmatmul.f32.gmra.mxu0 %v2027
    %v2857 = vpop.f32.mrf.mxu0
    %v2858 = vadd.f32 %v2457, %v2857
    %2859 = vmatmul.f32.gmra.mxu0 %v2029
    %v2860 = vpop.f32.mrf.mxu0
    %v2861 = vadd.f32 %v2460, %v2860
    %2862 = vmatmul.f32.gmra.mxu0 %v2031
    %v2863 = vpop.f32.mrf.mxu0
    %v2864 = vadd.f32 %v2463, %v2863
    %2865 = vdwg.mxu0
    %2866 = vst.msk [vmem:[#allocation2 + $0x40] sm:$0xff] %vm1152, %v2483
    %2867 = vst.msk [vmem:[#allocation2 + $0x48] sm:$0xff] %vm1152, %v2486
    %2868 = vst.msk [vmem:[#allocation2 + $0x50] sm:$0xff] %vm1152, %v2489
    %2869 = vst.msk [vmem:[#allocation2 + $0x58] sm:$0xff] %vm1152, %v2492
    %2870 = vst.msk [vmem:[#allocation2 + $0x60] sm:$0xff] %vm1152, %v2495
    %2871 = vst.msk [vmem:[#allocation2 + $0x68] sm:$0xff] %vm1152, %v2498
    %2872 = vst.msk [vmem:[#allocation2 + $0x70] sm:$0xff] %vm1152, %v2501
    %2873 = vst.msk [vmem:[#allocation2 + $0x78] sm:$0xff] %vm1152, %v2504
    %2882 = vrot.lane.b32.xlu0 %v2507, 3
    %v2883 = vpop.permute.xlu0 %2882
    %2884 = vrot.lane.b32.xlu0 %v2510, 3
    %v2885 = vpop.permute.xlu0 %2884
    %2886 = vrot.lane.b32.xlu0 %v2513, 3
    %v2887 = vpop.permute.xlu0 %2886
    %2888 = vrot.lane.b32.xlu0 %v2516, 3
    %v2889 = vpop.permute.xlu0 %2888
    %2890 = vrot.lane.b32.xlu0 %v2519, 3
    %v2891 = vpop.permute.xlu0 %2890
    %2892 = vrot.lane.b32.xlu0 %v2522, 3
    %v2893 = vpop.permute.xlu0 %2892
    %2894 = vrot.lane.b32.xlu0 %v2525, 3
    %v2895 = vpop.permute.xlu0 %2894
    %2896 = vrot.lane.b32.xlu0 %v2528, 3
    %v2897 = vpop.permute.xlu0 %2896
    %2906 = vst.msk [vmem:[#allocation2 + $0x40] sm:$0xff] %vm1193, %v2883
    %2907 = vst.msk [vmem:[#allocation2 + $0x48] sm:$0xff] %vm1193, %v2885
    %2908 = vst.msk [vmem:[#allocation2 + $0x50] sm:$0xff] %vm1193, %v2887
    %2909 = vst.msk [vmem:[#allocation2 + $0x58] sm:$0xff] %vm1193, %v2889
    %2910 = vst.msk [vmem:[#allocation2 + $0x60] sm:$0xff] %vm1193, %v2891
    %2911 = vst.msk [vmem:[#allocation2 + $0x68] sm:$0xff] %vm1193, %v2893
    %2912 = vst.msk [vmem:[#allocation2 + $0x70] sm:$0xff] %vm1193, %v2895
    %2913 = vst.msk [vmem:[#allocation2 + $0x78] sm:$0xff] %vm1193, %v2897
    %2922 = vrot.lane.b32.xlu0 %v2531, 6
    %v2923 = vpop.permute.xlu0 %2922
    %2924 = vrot.lane.b32.xlu0 %v2534, 6
    %v2925 = vpop.permute.xlu0 %2924
    %2926 = vrot.lane.b32.xlu0 %v2537, 6
    %v2927 = vpop.permute.xlu0 %2926
    %2928 = vrot.lane.b32.xlu0 %v2540, 6
    %v2929 = vpop.permute.xlu0 %2928
    %2930 = vrot.lane.b32.xlu0 %v2543, 6
    %v2931 = vpop.permute.xlu0 %2930
    %2932 = vrot.lane.b32.xlu0 %v2546, 6
    %v2933 = vpop.permute.xlu0 %2932
    %2934 = vrot.lane.b32.xlu0 %v2549, 6
    %v2935 = vpop.permute.xlu0 %2934
    %2936 = vrot.lane.b32.xlu0 %v2552, 6
    %v2937 = vpop.permute.xlu0 %2936
    %2946 = vst.msk [vmem:[#allocation2 + $0x40] sm:$0xff] %vm1234, %v2923
    %2947 = vst.msk [vmem:[#allocation2 + $0x48] sm:$0xff] %vm1234, %v2925
    %2948 = vst.msk [vmem:[#allocation2 + $0x50] sm:$0xff] %vm1234, %v2927
    %2949 = vst.msk [vmem:[#allocation2 + $0x58] sm:$0xff] %vm1234, %v2929
    %2950 = vst.msk [vmem:[#allocation2 + $0x60] sm:$0xff] %vm1234, %v2931
    %2951 = vst.msk [vmem:[#allocation2 + $0x68] sm:$0xff] %vm1234, %v2933
    %2952 = vst.msk [vmem:[#allocation2 + $0x70] sm:$0xff] %vm1234, %v2935
    %2953 = vst.msk [vmem:[#allocation2 + $0x78] sm:$0xff] %vm1234, %v2937
    %2962 = vrot.lane.b32.xlu0 %v2555, 9
    %v2963 = vpop.permute.xlu0 %2962
    %2964 = vrot.lane.b32.xlu0 %v2558, 9
    %v2965 = vpop.permute.xlu0 %2964
    %2966 = vrot.lane.b32.xlu0 %v2561, 9
    %v2967 = vpop.permute.xlu0 %2966
    %2968 = vrot.lane.b32.xlu0 %v2564, 9
    %v2969 = vpop.permute.xlu0 %2968
    %2970 = vrot.lane.b32.xlu0 %v2567, 9
    %v2971 = vpop.permute.xlu0 %2970
    %2972 = vrot.lane.b32.xlu0 %v2570, 9
    %v2973 = vpop.permute.xlu0 %2972
    %2974 = vrot.lane.b32.xlu0 %v2573, 9
    %v2975 = vpop.permute.xlu0 %2974
    %2976 = vrot.lane.b32.xlu0 %v2576, 9
    %v2977 = vpop.permute.xlu0 %2976
    %2986 = vst.msk [vmem:[#allocation2 + $0x40] sm:$0xff] %vm1275, %v2963
    %2987 = vst.msk [vmem:[#allocation2 + $0x48] sm:$0xff] %vm1275, %v2965
    %2988 = vst.msk [vmem:[#allocation2 + $0x50] sm:$0xff] %vm1275, %v2967
    %2989 = vst.msk [vmem:[#allocation2 + $0x58] sm:$0xff] %vm1275, %v2969
    %2990 = vst.msk [vmem:[#allocation2 + $0x60] sm:$0xff] %vm1275, %v2971
    %2991 = vst.msk [vmem:[#allocation2 + $0x68] sm:$0xff] %vm1275, %v2973
    %2992 = vst.msk [vmem:[#allocation2 + $0x70] sm:$0xff] %vm1275, %v2975
    %2993 = vst.msk [vmem:[#allocation2 + $0x78] sm:$0xff] %vm1275, %v2977
    %3002 = vrot.lane.b32.xlu0 %v2579, 12
    %v3003 = vpop.permute.xlu0 %3002
    %3004 = vrot.lane.b32.xlu0 %v2582, 12
    %v3005 = vpop.permute.xlu0 %3004
    %3006 = vrot.lane.b32.xlu0 %v2585, 12
    %v3007 = vpop.permute.xlu0 %3006
    %3008 = vrot.lane.b32.xlu0 %v2588, 12
    %v3009 = vpop.permute.xlu0 %3008
    %3010 = vrot.lane.b32.xlu0 %v2591, 12
    %v3011 = vpop.permute.xlu0 %3010
    %3012 = vrot.lane.b32.xlu0 %v2594, 12
    %v3013 = vpop.permute.xlu0 %3012
    %3014 = vrot.lane.b32.xlu0 %v2597, 12
    %v3015 = vpop.permute.xlu0 %3014
    %3016 = vrot.lane.b32.xlu0 %v2600, 12
    %v3017 = vpop.permute.xlu0 %3016
    %3026 = vst.msk [vmem:[#allocation2 + $0x40] sm:$0xff] %vm1316, %v3003
    %3027 = vst.msk [vmem:[#allocation2 + $0x48] sm:$0xff] %vm1316, %v3005
    %3028 = vst.msk [vmem:[#allocation2 + $0x50] sm:$0xff] %vm1316, %v3007
    %3029 = vst.msk [vmem:[#allocation2 + $0x58] sm:$0xff] %vm1316, %v3009
    %3030 = vst.msk [vmem:[#allocation2 + $0x60] sm:$0xff] %vm1316, %v3011
    %3031 = vst.msk [vmem:[#allocation2 + $0x68] sm:$0xff] %vm1316, %v3013
    %3032 = vst.msk [vmem:[#allocation2 + $0x70] sm:$0xff] %vm1316, %v3015
    %3033 = vst.msk [vmem:[#allocation2 + $0x78] sm:$0xff] %vm1316, %v3017
    %3042 = vrot.lane.b32.xlu0 %v2603, 15
    %v3043 = vpop.permute.xlu0 %3042
    %3044 = vrot.lane.b32.xlu0 %v2606, 15
    %v3045 = vpop.permute.xlu0 %3044
    %3046 = vrot.lane.b32.xlu0 %v2609, 15
    %v3047 = vpop.permute.xlu0 %3046
    %3048 = vrot.lane.b32.xlu0 %v2612, 15
    %v3049 = vpop.permute.xlu0 %3048
    %3050 = vrot.lane.b32.xlu0 %v2615, 15
    %v3051 = vpop.permute.xlu0 %3050
    %3052 = vrot.lane.b32.xlu0 %v2618, 15
    %v3053 = vpop.permute.xlu0 %3052
    %3054 = vrot.lane.b32.xlu0 %v2621, 15
    %v3055 = vpop.permute.xlu0 %3054
    %3056 = vrot.lane.b32.xlu0 %v2624, 15
    %v3057 = vpop.permute.xlu0 %3056
    %3066 = vst.msk [vmem:[#allocation2 + $0x40] sm:$0xff] %vm1357, %v3043
    %3067 = vst.msk [vmem:[#allocation2 + $0x48] sm:$0xff] %vm1357, %v3045
    %3068 = vst.msk [vmem:[#allocation2 + $0x50] sm:$0xff] %vm1357, %v3047
    %3069 = vst.msk [vmem:[#allocation2 + $0x58] sm:$0xff] %vm1357, %v3049
    %3070 = vst.msk [vmem:[#allocation2 + $0x60] sm:$0xff] %vm1357, %v3051
    %3071 = vst.msk [vmem:[#allocation2 + $0x68] sm:$0xff] %vm1357, %v3053
    %3072 = vst.msk [vmem:[#allocation2 + $0x70] sm:$0xff] %vm1357, %v3055
    %3073 = vst.msk [vmem:[#allocation2 + $0x78] sm:$0xff] %vm1357, %v3057
    %3082 = vrot.lane.b32.xlu0 %v2627, 18
    %v3083 = vpop.permute.xlu0 %3082
    %3084 = vrot.lane.b32.xlu0 %v2630, 18
    %v3085 = vpop.permute.xlu0 %3084
    %3086 = vrot.lane.b32.xlu0 %v2633, 18
    %v3087 = vpop.permute.xlu0 %3086
    %3088 = vrot.lane.b32.xlu0 %v2636, 18
    %v3089 = vpop.permute.xlu0 %3088
    %3090 = vrot.lane.b32.xlu0 %v2639, 18
    %v3091 = vpop.permute.xlu0 %3090
    %3092 = vrot.lane.b32.xlu0 %v2642, 18
    %v3093 = vpop.permute.xlu0 %3092
    %3094 = vrot.lane.b32.xlu0 %v2645, 18
    %v3095 = vpop.permute.xlu0 %3094
    %3096 = vrot.lane.b32.xlu0 %v2648, 18
    %v3097 = vpop.permute.xlu0 %3096
    %3106 = vst.msk [vmem:[#allocation2 + $0x40] sm:$0xff] %vm1398, %v3083
    %3107 = vst.msk [vmem:[#allocation2 + $0x48] sm:$0xff] %vm1398, %v3085
    %3108 = vst.msk [vmem:[#allocation2 + $0x50] sm:$0xff] %vm1398, %v3087
    %3109 = vst.msk [vmem:[#allocation2 + $0x58] sm:$0xff] %vm1398, %v3089
    %3110 = vst.msk [vmem:[#allocation2 + $0x60] sm:$0xff] %vm1398, %v3091
    %3111 = vst.msk [vmem:[#allocation2 + $0x68] sm:$0xff] %vm1398, %v3093
    %3112 = vst.msk [vmem:[#allocation2 + $0x70] sm:$0xff] %vm1398, %v3095
    %3113 = vst.msk [vmem:[#allocation2 + $0x78] sm:$0xff] %vm1398, %v3097
    %3122 = vrot.lane.b32.xlu0 %v2651, 21
    %v3123 = vpop.permute.xlu0 %3122
    %3124 = vrot.lane.b32.xlu0 %v2654, 21
    %v3125 = vpop.permute.xlu0 %3124
    %3126 = vrot.lane.b32.xlu0 %v2657, 21
    %v3127 = vpop.permute.xlu0 %3126
    %3128 = vrot.lane.b32.xlu0 %v2660, 21
    %v3129 = vpop.permute.xlu0 %3128
    %3130 = vrot.lane.b32.xlu0 %v2663, 21
    %v3131 = vpop.permute.xlu0 %3130
    %3132 = vrot.lane.b32.xlu0 %v2666, 21
    %v3133 = vpop.permute.xlu0 %3132
    %3134 = vrot.lane.b32.xlu0 %v2669, 21
    %v3135 = vpop.permute.xlu0 %3134
    %3136 = vrot.lane.b32.xlu0 %v2672, 21
    %v3137 = vpop.permute.xlu0 %3136
    %3146 = vst.msk [vmem:[#allocation2 + $0x40] sm:$0xff] %vm1439, %v3123
    %3147 = vst.msk [vmem:[#allocation2 + $0x48] sm:$0xff] %vm1439, %v3125
    %3148 = vst.msk [vmem:[#allocation2 + $0x50] sm:$0xff] %vm1439, %v3127
    %3149 = vst.msk [vmem:[#allocation2 + $0x58] sm:$0xff] %vm1439, %v3129
    %3150 = vst.msk [vmem:[#allocation2 + $0x60] sm:$0xff] %vm1439, %v3131
    %3151 = vst.msk [vmem:[#allocation2 + $0x68] sm:$0xff] %vm1439, %v3133
    %3152 = vst.msk [vmem:[#allocation2 + $0x70] sm:$0xff] %vm1439, %v3135
    %3153 = vst.msk [vmem:[#allocation2 + $0x78] sm:$0xff] %vm1439, %v3137
    %3162 = vrot.lane.b32.xlu0 %v2675, 24
    %v3163 = vpop.permute.xlu0 %3162
    %3164 = vrot.lane.b32.xlu0 %v2678, 24
    %v3165 = vpop.permute.xlu0 %3164
    %3166 = vrot.lane.b32.xlu0 %v2681, 24
    %v3167 = vpop.permute.xlu0 %3166
    %3168 = vrot.lane.b32.xlu0 %v2684, 24
    %v3169 = vpop.permute.xlu0 %3168
    %3170 = vrot.lane.b32.xlu0 %v2687, 24
    %v3171 = vpop.permute.xlu0 %3170
    %3172 = vrot.lane.b32.xlu0 %v2690, 24
    %v3173 = vpop.permute.xlu0 %3172
    %3174 = vrot.lane.b32.xlu0 %v2693, 24
    %v3175 = vpop.permute.xlu0 %3174
    %3176 = vrot.lane.b32.xlu0 %v2696, 24
    %v3177 = vpop.permute.xlu0 %3176
    %3186 = vst.msk [vmem:[#allocation2 + $0x40] sm:$0xff] %vm1480, %v3163
    %3187 = vst.msk [vmem:[#allocation2 + $0x48] sm:$0xff] %vm1480, %v3165
    %3188 = vst.msk [vmem:[#allocation2 + $0x50] sm:$0xff] %vm1480, %v3167
    %3189 = vst.msk [vmem:[#allocation2 + $0x58] sm:$0xff] %vm1480, %v3169
    %3190 = vst.msk [vmem:[#allocation2 + $0x60] sm:$0xff] %vm1480, %v3171
    %3191 = vst.msk [vmem:[#allocation2 + $0x68] sm:$0xff] %vm1480, %v3173
    %3192 = vst.msk [vmem:[#allocation2 + $0x70] sm:$0xff] %vm1480, %v3175
    %3193 = vst.msk [vmem:[#allocation2 + $0x78] sm:$0xff] %vm1480, %v3177
    %3202 = vrot.lane.b32.xlu0 %v2699, 27
    %v3203 = vpop.permute.xlu0 %3202
    %3204 = vrot.lane.b32.xlu0 %v2702, 27
    %v3205 = vpop.permute.xlu0 %3204
    %3206 = vrot.lane.b32.xlu0 %v2705, 27
    %v3207 = vpop.permute.xlu0 %3206
    %3208 = vrot.lane.b32.xlu0 %v2708, 27
    %v3209 = vpop.permute.xlu0 %3208
    %3210 = vrot.lane.b32.xlu0 %v2711, 27
    %v3211 = vpop.permute.xlu0 %3210
    %3212 = vrot.lane.b32.xlu0 %v2714, 27
    %v3213 = vpop.permute.xlu0 %3212
    %3214 = vrot.lane.b32.xlu0 %v2717, 27
    %v3215 = vpop.permute.xlu0 %3214
    %3216 = vrot.lane.b32.xlu0 %v2720, 27
    %v3217 = vpop.permute.xlu0 %3216
    %3226 = vst.msk [vmem:[#allocation2 + $0x40] sm:$0xff] %vm1521, %v3203
    %3227 = vst.msk [vmem:[#allocation2 + $0x48] sm:$0xff] %vm1521, %v3205
    %3228 = vst.msk [vmem:[#allocation2 + $0x50] sm:$0xff] %vm1521, %v3207
    %3229 = vst.msk [vmem:[#allocation2 + $0x58] sm:$0xff] %vm1521, %v3209
    %3230 = vst.msk [vmem:[#allocation2 + $0x60] sm:$0xff] %vm1521, %v3211
    %3231 = vst.msk [vmem:[#allocation2 + $0x68] sm:$0xff] %vm1521, %v3213
    %3232 = vst.msk [vmem:[#allocation2 + $0x70] sm:$0xff] %vm1521, %v3215
    %3233 = vst.msk [vmem:[#allocation2 + $0x78] sm:$0xff] %vm1521, %v3217
    %3242 = vrot.lane.b32.xlu0 %v2723, 30
    %v3243 = vpop.permute.xlu0 %3242
    %3244 = vrot.lane.b32.xlu0 %v2726, 30
    %v3245 = vpop.permute.xlu0 %3244
    %3246 = vrot.lane.b32.xlu0 %v2729, 30
    %v3247 = vpop.permute.xlu0 %3246
    %3248 = vrot.lane.b32.xlu0 %v2732, 30
    %v3249 = vpop.permute.xlu0 %3248
    %3250 = vrot.lane.b32.xlu0 %v2735, 30
    %v3251 = vpop.permute.xlu0 %3250
    %3252 = vrot.lane.b32.xlu0 %v2738, 30
    %v3253 = vpop.permute.xlu0 %3252
    %3254 = vrot.lane.b32.xlu0 %v2741, 30
    %v3255 = vpop.permute.xlu0 %3254
    %3256 = vrot.lane.b32.xlu0 %v2744, 30
    %v3257 = vpop.permute.xlu0 %3256
    %3266 = vst.msk [vmem:[#allocation2 + $0x40] sm:$0xff] %vm1562, %v3243
    %3267 = vst.msk [vmem:[#allocation2 + $0x48] sm:$0xff] %vm1562, %v3245
    %3268 = vst.msk [vmem:[#allocation2 + $0x50] sm:$0xff] %vm1562, %v3247
    %3269 = vst.msk [vmem:[#allocation2 + $0x58] sm:$0xff] %vm1562, %v3249
    %3270 = vst.msk [vmem:[#allocation2 + $0x60] sm:$0xff] %vm1562, %v3251
    %3271 = vst.msk [vmem:[#allocation2 + $0x68] sm:$0xff] %vm1562, %v3253
    %3272 = vst.msk [vmem:[#allocation2 + $0x70] sm:$0xff] %vm1562, %v3255
    %3273 = vst.msk [vmem:[#allocation2 + $0x78] sm:$0xff] %vm1562, %v3257
    %3282 = vrot.lane.b32.xlu0 %v2747, 33
    %v3283 = vpop.permute.xlu0 %3282
    %3284 = vrot.lane.b32.xlu0 %v2750, 33
    %v3285 = vpop.permute.xlu0 %3284
    %3286 = vrot.lane.b32.xlu0 %v2753, 33
    %v3287 = vpop.permute.xlu0 %3286
    %3288 = vrot.lane.b32.xlu0 %v2756, 33
    %v3289 = vpop.permute.xlu0 %3288
    %3290 = vrot.lane.b32.xlu0 %v2759, 33
    %v3291 = vpop.permute.xlu0 %3290
    %3292 = vrot.lane.b32.xlu0 %v2762, 33
    %v3293 = vpop.permute.xlu0 %3292
    %3294 = vrot.lane.b32.xlu0 %v2765, 33
    %v3295 = vpop.permute.xlu0 %3294
    %3296 = vrot.lane.b32.xlu0 %v2768, 33
    %v3297 = vpop.permute.xlu0 %3296
    %3306 = vst.msk [vmem:[#allocation2 + $0x40] sm:$0xff] %vm1603, %v3283
    %3307 = vst.msk [vmem:[#allocation2 + $0x48] sm:$0xff] %vm1603, %v3285
    %3308 = vst.msk [vmem:[#allocation2 + $0x50] sm:$0xff] %vm1603, %v3287
    %3309 = vst.msk [vmem:[#allocation2 + $0x58] sm:$0xff] %vm1603, %v3289
    %3310 = vst.msk [vmem:[#allocation2 + $0x60] sm:$0xff] %vm1603, %v3291
    %3311 = vst.msk [vmem:[#allocation2 + $0x68] sm:$0xff] %vm1603, %v3293
    %3312 = vst.msk [vmem:[#allocation2 + $0x70] sm:$0xff] %vm1603, %v3295
    %3313 = vst.msk [vmem:[#allocation2 + $0x78] sm:$0xff] %vm1603, %v3297
    %3322 = vrot.lane.b32.xlu0 %v2771, 36
    %v3323 = vpop.permute.xlu0 %3322
    %3324 = vrot.lane.b32.xlu0 %v2774, 36
    %v3325 = vpop.permute.xlu0 %3324
    %3326 = vrot.lane.b32.xlu0 %v2777, 36
    %v3327 = vpop.permute.xlu0 %3326
    %3328 = vrot.lane.b32.xlu0 %v2780, 36
    %v3329 = vpop.permute.xlu0 %3328
    %3330 = vrot.lane.b32.xlu0 %v2783, 36
    %v3331 = vpop.permute.xlu0 %3330
    %3332 = vrot.lane.b32.xlu0 %v2786, 36
    %v3333 = vpop.permute.xlu0 %3332
    %3334 = vrot.lane.b32.xlu0 %v2789, 36
    %v3335 = vpop.permute.xlu0 %3334
    %3336 = vrot.lane.b32.xlu0 %v2792, 36
    %v3337 = vpop.permute.xlu0 %3336
    %3346 = vst.msk [vmem:[#allocation2 + $0x40] sm:$0xff] %vm1644, %v3323
    %3347 = vst.msk [vmem:[#allocation2 + $0x48] sm:$0xff] %vm1644, %v3325
    %3348 = vst.msk [vmem:[#allocation2 + $0x50] sm:$0xff] %vm1644, %v3327
    %3349 = vst.msk [vmem:[#allocation2 + $0x58] sm:$0xff] %vm1644, %v3329
    %3350 = vst.msk [vmem:[#allocation2 + $0x60] sm:$0xff] %vm1644, %v3331
    %3351 = vst.msk [vmem:[#allocation2 + $0x68] sm:$0xff] %vm1644, %v3333
    %3352 = vst.msk [vmem:[#allocation2 + $0x70] sm:$0xff] %vm1644, %v3335
    %3353 = vst.msk [vmem:[#allocation2 + $0x78] sm:$0xff] %vm1644, %v3337
    %3362 = vrot.lane.b32.xlu0 %v2795, 39
    %v3363 = vpop.permute.xlu0 %3362
    %3364 = vrot.lane.b32.xlu0 %v2798, 39
    %v3365 = vpop.permute.xlu0 %3364
    %3366 = vrot.lane.b32.xlu0 %v2801, 39
    %v3367 = vpop.permute.xlu0 %3366
    %3368 = vrot.lane.b32.xlu0 %v2804, 39
    %v3369 = vpop.permute.xlu0 %3368
    %3370 = vrot.lane.b32.xlu0 %v2807, 39
    %v3371 = vpop.permute.xlu0 %3370
    %3372 = vrot.lane.b32.xlu0 %v2810, 39
    %v3373 = vpop.permute.xlu0 %3372
    %3374 = vrot.lane.b32.xlu0 %v2813, 39
    %v3375 = vpop.permute.xlu0 %3374
    %3376 = vrot.lane.b32.xlu0 %v2816, 39
    %v3377 = vpop.permute.xlu0 %3376
    %3386 = vst.msk [vmem:[#allocation2 + $0x40] sm:$0xff] %vm1685, %v3363
    %3387 = vst.msk [vmem:[#allocation2 + $0x48] sm:$0xff] %vm1685, %v3365
    %3388 = vst.msk [vmem:[#allocation2 + $0x50] sm:$0xff] %vm1685, %v3367
    %3389 = vst.msk [vmem:[#allocation2 + $0x58] sm:$0xff] %vm1685, %v3369
    %3390 = vst.msk [vmem:[#allocation2 + $0x60] sm:$0xff] %vm1685, %v3371
    %3391 = vst.msk [vmem:[#allocation2 + $0x68] sm:$0xff] %vm1685, %v3373
    %3392 = vst.msk [vmem:[#allocation2 + $0x70] sm:$0xff] %vm1685, %v3375
    %3393 = vst.msk [vmem:[#allocation2 + $0x78] sm:$0xff] %vm1685, %v3377
    %3402 = vrot.lane.b32.xlu0 %v2819, 42
    %v3403 = vpop.permute.xlu0 %3402
    %3404 = vrot.lane.b32.xlu0 %v2822, 42
    %v3405 = vpop.permute.xlu0 %3404
    %3406 = vrot.lane.b32.xlu0 %v2825, 42
    %v3407 = vpop.permute.xlu0 %3406
    %3408 = vrot.lane.b32.xlu0 %v2828, 42
    %v3409 = vpop.permute.xlu0 %3408
    %3410 = vrot.lane.b32.xlu0 %v2831, 42
    %v3411 = vpop.permute.xlu0 %3410
    %3412 = vrot.lane.b32.xlu0 %v2834, 42
    %v3413 = vpop.permute.xlu0 %3412
    %3414 = vrot.lane.b32.xlu0 %v2837, 42
    %v3415 = vpop.permute.xlu0 %3414
    %3416 = vrot.lane.b32.xlu0 %v2840, 42
    %v3417 = vpop.permute.xlu0 %3416
    %3426 = vst.msk [vmem:[#allocation2 + $0x40] sm:$0xff] %vm1726, %v3403
    %3427 = vst.msk [vmem:[#allocation2 + $0x48] sm:$0xff] %vm1726, %v3405
    %3428 = vst.msk [vmem:[#allocation2 + $0x50] sm:$0xff] %vm1726, %v3407
    %3429 = vst.msk [vmem:[#allocation2 + $0x58] sm:$0xff] %vm1726, %v3409
    %3430 = vst.msk [vmem:[#allocation2 + $0x60] sm:$0xff] %vm1726, %v3411
    %3431 = vst.msk [vmem:[#allocation2 + $0x68] sm:$0xff] %vm1726, %v3413
    %3432 = vst.msk [vmem:[#allocation2 + $0x70] sm:$0xff] %vm1726, %v3415
    %3433 = vst.msk [vmem:[#allocation2 + $0x78] sm:$0xff] %vm1726, %v3417
    %3442 = vrot.lane.b32.xlu0 %v2843, 45
    %v3443 = vpop.permute.xlu0 %3442
    %3444 = vrot.lane.b32.xlu0 %v2846, 45
    %v3445 = vpop.permute.xlu0 %3444
    %3446 = vrot.lane.b32.xlu0 %v2849, 45
    %v3447 = vpop.permute.xlu0 %3446
    %3448 = vrot.lane.b32.xlu0 %v2852, 45
    %v3449 = vpop.permute.xlu0 %3448
    %3450 = vrot.lane.b32.xlu0 %v2855, 45
    %v3451 = vpop.permute.xlu0 %3450
    %3452 = vrot.lane.b32.xlu0 %v2858, 45
    %v3453 = vpop.permute.xlu0 %3452
    %3454 = vrot.lane.b32.xlu0 %v2861, 45
    %v3455 = vpop.permute.xlu0 %3454
    %3456 = vrot.lane.b32.xlu0 %v2864, 45
    %v3457 = vpop.permute.xlu0 %3456
    %3466 = vst.msk [vmem:[#allocation2 + $0x40] sm:$0xff] %vm1767, %v3443
    %3467 = vst.msk [vmem:[#allocation2 + $0x48] sm:$0xff] %vm1767, %v3445
    %3468 = vst.msk [vmem:[#allocation2 + $0x50] sm:$0xff] %vm1767, %v3447
    %3469 = vst.msk [vmem:[#allocation2 + $0x58] sm:$0xff] %vm1767, %v3449
    %3470 = vst.msk [vmem:[#allocation2 + $0x60] sm:$0xff] %vm1767, %v3451
    %3471 = vst.msk [vmem:[#allocation2 + $0x68] sm:$0xff] %vm1767, %v3453
    %3472 = vst.msk [vmem:[#allocation2 + $0x70] sm:$0xff] %vm1767, %v3455
    %3473 = vst.msk [vmem:[#allocation2 + $0x78] sm:$0xff] %vm1767, %v3457
    %v3474 = vld [vmem:[#allocation2] sm:$0xff]
    %v3475 = vld [vmem:[#allocation2 + $0x8] sm:$0xff]
    %v3476 = vld [vmem:[#allocation2 + $0x10] sm:$0xff]
    %v3477 = vld [vmem:[#allocation2 + $0x18] sm:$0xff]
    %v3478 = vld [vmem:[#allocation2 + $0x20] sm:$0xff]
    %v3479 = vld [vmem:[#allocation2 + $0x28] sm:$0xff]
    %v3480 = vld [vmem:[#allocation2 + $0x30] sm:$0xff]
    %v3481 = vld [vmem:[#allocation2 + $0x38] sm:$0xff]
    %v3482 = vld [vmem:[#allocation2 + $0x40] sm:$0xff]
    %v3483 = vld [vmem:[#allocation2 + $0x48] sm:$0xff]
    %v3484 = vld [vmem:[#allocation2 + $0x50] sm:$0xff]
    %v3485 = vld [vmem:[#allocation2 + $0x58] sm:$0xff]
    %v3486 = vld [vmem:[#allocation2 + $0x60] sm:$0xff]
    %v3487 = vld [vmem:[#allocation2 + $0x68] sm:$0xff]
    %v3488 = vld [vmem:[#allocation2 + $0x70] sm:$0xff]
    %v3489 = vld [vmem:[#allocation2 + $0x78] sm:$0xff]
    %v3490 = vld [vmem:[%s2] sm:$0xff]
    %v3491 = vld [vmem:[%s2 + $0x8] sm:$0xff]
    %v3492 = vld [vmem:[%s2 + $0x10] sm:$0xff]
    %v3493 = vld [vmem:[%s2 + $0x18] sm:$0xff]
    %v3494 = vld [vmem:[%s2 + $0x20] sm:$0xff]
    %v3495 = vld [vmem:[%s2 + $0x28] sm:$0xff]
    %v3496 = vld [vmem:[%s3] sm:$0x1]
    %v3498 = vperm.slane %v3496, 0
    %vm3500 = vcmask 392192
    %v3502 = vsel %vm3500, %v3474, 0
    %v3505 = vsel %vm3500, %v3475, 0
    %v3508 = vsel %vm3500, %v3476, 0
    %v3511 = vsel %vm3500, %v3477, 0
    %v3514 = vsel %vm3500, %v3478, 0
    %v3517 = vsel %vm3500, %v3479, 0
    %v3520 = vsel %vm3500, %v3480, 0
    %v3523 = vsel %vm3500, %v3481, 0
    %v3526 = vsel %vm3500, %v3482, 0
    %v3529 = vsel %vm3500, %v3483, 0
    %v3532 = vsel %vm3500, %v3484, 0
    %v3535 = vsel %vm3500, %v3485, 0
    %v3538 = vsel %vm3500, %v3486, 0
    %v3541 = vsel %vm3500, %v3487, 0
    %v3544 = vsel %vm3500, %v3488, 0
    %v3547 = vsel %vm3500, %v3489, 0
    %3549 = vmatpush.msra.mxu0 0.0
    %3550 = vmatpush.msra.mxu0 0.0
    %3551 = vmatpush.msra.mxu0 0.0
    %3552 = vmatpush.msra.mxu0 0.0
    %3553 = vmatpush.msra.mxu0 0.0
    %3554 = vmatpush.msra.mxu0 0.0
    %3555 = vmatpush.msra.mxu0 0.0
    %3556 = vmatpush.msra.mxu0 0.0
    %3557 = vmatpush.msra.mxu0 0.0
    %3558 = vmatpush.msra.mxu0 0.0
    %3559 = vmatpush.msra.mxu0 %v3495
    %3560 = vmatpush.msra.mxu0 %v3494
    %3561 = vmatpush.msra.mxu0 %v3493
    %3562 = vmatpush.msra.mxu0 %v3492
    %3563 = vmatpush.msra.mxu0 %v3491
    %3564 = vmatpush.msra.mxu0 %v3490
    %3565 = vmatmul.f32.gmra.mxu0 %v3502
    %v3566 = vpop.f32.mrf.mxu0
    %v3567 = vadd.f32 %v3498, %v3566
    %3568 = vmatmul.f32.gmra.mxu0 %v3505
    %v3569 = vpop.f32.mrf.mxu0
    %v3570 = vadd.f32 %v3498, %v3569
    %3571 = vmatmul.f32.gmra.mxu0 %v3508
    %v3572 = vpop.f32.mrf.mxu0
    %v3573 = vadd.f32 %v3498, %v3572
    %3574 = vmatmul.f32.gmra.mxu0 %v3511
    %v3575 = vpop.f32.mrf.mxu0
    %v3576 = vadd.f32 %v3498, %v3575
    %3577 = vmatmul.f32.gmra.mxu0 %v3514
    %v3578 = vpop.f32.mrf.mxu0
    %v3579 = vadd.f32 %v3498, %v3578
    %3580 = vmatmul.f32.gmra.mxu0 %v3517
    %v3581 = vpop.f32.mrf.mxu0
    %v3582 = vadd.f32 %v3498, %v3581
    %3583 = vmatmul.f32.gmra.mxu0 %v3520
    %v3584 = vpop.f32.mrf.mxu0
    %v3585 = vadd.f32 %v3498, %v3584
    %3586 = vmatmul.f32.gmra.mxu0 %v3523
    %v3587 = vpop.f32.mrf.mxu0
    %v3588 = vadd.f32 %v3498, %v3587
    %3589 = vmatmul.f32.gmra.mxu0 %v3526
    %v3590 = vpop.f32.mrf.mxu0
    %v3591 = vadd.f32 %v3498, %v3590
    %3592 = vmatmul.f32.gmra.mxu0 %v3529
    %v3593 = vpop.f32.mrf.mxu0
    %v3594 = vadd.f32 %v3498, %v3593
    %3595 = vmatmul.f32.gmra.mxu0 %v3532
    %v3596 = vpop.f32.mrf.mxu0
    %v3597 = vadd.f32 %v3498, %v3596
    %3598 = vmatmul.f32.gmra.mxu0 %v3535
    %v3599 = vpop.f32.mrf.mxu0
    %v3600 = vadd.f32 %v3498, %v3599
    %3601 = vmatmul.f32.gmra.mxu0 %v3538
    %v3602 = vpop.f32.mrf.mxu0
    %v3603 = vadd.f32 %v3498, %v3602
    %3604 = vmatmul.f32.gmra.mxu0 %v3541
    %v3605 = vpop.f32.mrf.mxu0
    %v3606 = vadd.f32 %v3498, %v3605
    %3607 = vmatmul.f32.gmra.mxu0 %v3544
    %v3608 = vpop.f32.mrf.mxu0
    %v3609 = vadd.f32 %v3498, %v3608
    %3610 = vmatmul.f32.gmra.mxu0 %v3547
    %v3611 = vpop.f32.mrf.mxu0
    %v3612 = vadd.f32 %v3498, %v3611
    %3613 = vdwg.mxu0
    %v3614 = vmul.f32 %v3567, 0.2
    %v3615 = vmul.f32 %v3570, 0.2
    %v3616 = vmul.f32 %v3573, 0.2
    %v3617 = vmul.f32 %v3576, 0.2
    %v3618 = vmul.f32 %v3579, 0.2
    %v3619 = vmul.f32 %v3582, 0.2
    %v3620 = vmul.f32 %v3585, 0.2
    %v3621 = vmul.f32 %v3588, 0.2
    %v3622 = vmul.f32 %v3591, 0.2
    %v3623 = vmul.f32 %v3594, 0.2
    %v3624 = vmul.f32 %v3597, 0.2
    %v3625 = vmul.f32 %v3600, 0.2
    %v3626 = vmul.f32 %v3603, 0.2
    %v3627 = vmul.f32 %v3606, 0.2
    %v3628 = vmul.f32 %v3609, 0.2
    %v3629 = vmul.f32 %v3612, 0.2
    %v3630 = vmax.f32 %v3567, %v3614
    %v3631 = vmax.f32 %v3570, %v3615
    %v3632 = vmax.f32 %v3573, %v3616
    %v3633 = vmax.f32 %v3576, %v3617
    %v3634 = vmax.f32 %v3579, %v3618
    %v3635 = vmax.f32 %v3582, %v3619
    %v3636 = vmax.f32 %v3585, %v3620
    %v3637 = vmax.f32 %v3588, %v3621
    %v3638 = vmax.f32 %v3591, %v3622
    %v3639 = vmax.f32 %v3594, %v3623
    %v3640 = vmax.f32 %v3597, %v3624
    %v3641 = vmax.f32 %v3600, %v3625
    %v3642 = vmax.f32 %v3603, %v3626
    %v3643 = vmax.f32 %v3606, %v3627
    %v3644 = vmax.f32 %v3609, %v3628
    %v3645 = vmax.f32 %v3612, %v3629
    %v3646 = vld [vmem:[%s4] sm:$0xff]
    %v3647 = vld [vmem:[%s4 + $0x8] sm:$0xff]
    %v3648 = vld [vmem:[%s4 + $0x10] sm:$0xff]
    %v3649 = vld [vmem:[%s4 + $0x18] sm:$0xff]
    %v3650 = vld [vmem:[%s4 + $0x20] sm:$0xff]
    %v3651 = vld [vmem:[%s4 + $0x28] sm:$0xff]
    %v3652 = vld [vmem:[%s4 + $0x30] sm:$0xff]
    %v3653 = vld [vmem:[%s4 + $0x38] sm:$0xff]
    %v3654 = vld [vmem:[%s4 + $0x40] sm:$0xff]
    %v3655 = vld [vmem:[%s4 + $0x48] sm:$0xff]
    %v3656 = vld [vmem:[%s4 + $0x50] sm:$0xff]
    %v3657 = vld [vmem:[%s4 + $0x58] sm:$0xff]
    %v3658 = vld [vmem:[%s4 + $0x60] sm:$0xff]
    %v3659 = vld [vmem:[%s4 + $0x68] sm:$0xff]
    %v3660 = vld [vmem:[%s4 + $0x70] sm:$0xff]
    %v3661 = vld [vmem:[%s4 + $0x78] sm:$0xff]
    %v3662 = vld [vmem:[%s4 + $0x80] sm:$0xff]
    %v3663 = vld [vmem:[%s4 + $0x88] sm:$0xff]
    %v3664 = vld [vmem:[%s4 + $0x90] sm:$0xff]
    %v3665 = vld [vmem:[%s4 + $0x98] sm:$0xff]
    %v3666 = vld [vmem:[%s4 + $0xa0] sm:$0xff]
    %v3667 = vld [vmem:[%s4 + $0xa8] sm:$0xff]
    %v3668 = vld [vmem:[%s4 + $0xb0] sm:$0xff]
    %v3669 = vld [vmem:[%s4 + $0xb8] sm:$0xff]
    %v3670 = vld [vmem:[%s4 + $0xc0] sm:$0xff]
    %v3671 = vld [vmem:[%s4 + $0xc8] sm:$0xff]
    %v3672 = vld [vmem:[%s4 + $0xd0] sm:$0xff]
    %v3673 = vld [vmem:[%s4 + $0xd8] sm:$0xff]
    %v3674 = vld [vmem:[%s4 + $0xe0] sm:$0xff]
    %v3675 = vld [vmem:[%s4 + $0xe8] sm:$0xff]
    %v3676 = vld [vmem:[%s4 + $0xf0] sm:$0xff]
    %v3677 = vld [vmem:[%s4 + $0xf8] sm:$0xff]
    %vm3678 = vcmask 523264
    %v3680 = vsel %vm3678, %v3646, 0
    %v3683 = vsel %vm3678, %v3647, 0
    %v3686 = vsel %vm3678, %v3648, 0
    %v3689 = vsel %vm3678, %v3649, 0
    %v3692 = vsel %vm3678, %v3650, 0
    %v3695 = vsel %vm3678, %v3651, 0
    %v3698 = vsel %vm3678, %v3652, 0
    %v3701 = vsel %vm3678, %v3653, 0
    %v3704 = vsel %vm3678, %v3654, 0
    %v3707 = vsel %vm3678, %v3655, 0
    %v3710 = vsel %vm3678, %v3656, 0
    %v3713 = vsel %vm3678, %v3657, 0
    %v3716 = vsel %vm3678, %v3658, 0
    %v3719 = vsel %vm3678, %v3659, 0
    %v3722 = vsel %vm3678, %v3660, 0
    %v3725 = vsel %vm3678, %v3661, 0
    %v3728 = vsel %vm3678, %v3662, 0
    %v3731 = vsel %vm3678, %v3663, 0
    %v3734 = vsel %vm3678, %v3664, 0
    %v3737 = vsel %vm3678, %v3665, 0
    %v3740 = vsel %vm3678, %v3666, 0
    %v3743 = vsel %vm3678, %v3667, 0
    %v3746 = vsel %vm3678, %v3668, 0
    %v3749 = vsel %vm3678, %v3669, 0
    %v3752 = vsel %vm3678, %v3670, 0
    %v3755 = vsel %vm3678, %v3671, 0
    %v3758 = vsel %vm3678, %v3672, 0
    %v3761 = vsel %vm3678, %v3673, 0
    %v3764 = vsel %vm3678, %v3674, 0
    %v3767 = vsel %vm3678, %v3675, 0
    %v3770 = vsel %vm3678, %v3676, 0
    %v3773 = vsel %vm3678, %v3677, 0
    %3775 = vmatpush.msra.mxu0 0.0
    %3776 = vmatpush.msra.mxu0 0.0
    %3777 = vmatpush.msra.mxu0 0.0
    %3778 = vmatpush.msra.mxu0 0.0
    %3779 = vmatpush.msra.mxu0 0.0
    %3780 = vmatpush.msra.mxu0 0.0
    %3781 = vmatpush.msra.mxu0 0.0
    %3782 = vmatpush.msra.mxu0 0.0
    %3783 = vmatpush.msra.mxu0 %v3637
    %3784 = vmatpush.msra.mxu0 %v3636
    %3785 = vmatpush.msra.mxu0 %v3635
    %3786 = vmatpush.msra.mxu0 %v3634
    %3787 = vmatpush.msra.mxu0 %v3633
    %3788 = vmatpush.msra.mxu0 %v3632
    %3789 = vmatpush.msra.mxu0 %v3631
    %3790 = vmatpush.msra.mxu0 %v3630
    %3791 = vmatmul.f32.gmra.mxu0 %v3680
    %v3792 = vpop.f32.mrf.mxu0
    %v3793 = vadd.f32 0.0, %v3792
    %3794 = vmatmul.f32.gmra.mxu0 %v3683
    %v3795 = vpop.f32.mrf.mxu0
    %v3796 = vadd.f32 0.0, %v3795
    %3797 = vmatmul.f32.gmra.mxu0 %v3686
    %v3798 = vpop.f32.mrf.mxu0
    %v3799 = vadd.f32 0.0, %v3798
    %3800 = vmatmul.f32.gmra.mxu0 %v3689
    %v3801 = vpop.f32.mrf.mxu0
    %v3802 = vadd.f32 0.0, %v3801
    %3803 = vmatmul.f32.gmra.mxu0 %v3692
    %v3804 = vpop.f32.mrf.mxu0
    %v3805 = vadd.f32 0.0, %v3804
    %3806 = vmatmul.f32.gmra.mxu0 %v3695
    %v3807 = vpop.f32.mrf.mxu0
    %v3808 = vadd.f32 0.0, %v3807
    %3809 = vmatmul.f32.gmra.mxu0 %v3698
    %v3810 = vpop.f32.mrf.mxu0
    %v3811 = vadd.f32 0.0, %v3810
    %3812 = vmatmul.f32.gmra.mxu0 %v3701
    %v3813 = vpop.f32.mrf.mxu0
    %v3814 = vadd.f32 0.0, %v3813
    %3815 = vmatmul.f32.gmra.mxu0 %v3704
    %v3816 = vpop.f32.mrf.mxu0
    %v3817 = vadd.f32 0.0, %v3816
    %3818 = vmatmul.f32.gmra.mxu0 %v3707
    %v3819 = vpop.f32.mrf.mxu0
    %v3820 = vadd.f32 0.0, %v3819
    %3821 = vmatmul.f32.gmra.mxu0 %v3710
    %v3822 = vpop.f32.mrf.mxu0
    %v3823 = vadd.f32 0.0, %v3822
    %3824 = vmatmul.f32.gmra.mxu0 %v3713
    %v3825 = vpop.f32.mrf.mxu0
    %v3826 = vadd.f32 0.0, %v3825
    %3827 = vmatmul.f32.gmra.mxu0 %v3716
    %v3828 = vpop.f32.mrf.mxu0
    %v3829 = vadd.f32 0.0, %v3828
    %3830 = vmatmul.f32.gmra.mxu0 %v3719
    %v3831 = vpop.f32.mrf.mxu0
    %v3832 = vadd.f32 0.0, %v3831
    %3833 = vmatmul.f32.gmra.mxu0 %v3722
    %v3834 = vpop.f32.mrf.mxu0
    %v3835 = vadd.f32 0.0, %v3834
    %3836 = vmatmul.f32.gmra.mxu0 %v3725
    %v3837 = vpop.f32.mrf.mxu0
    %v3838 = vadd.f32 0.0, %v3837
    %3839 = vmatmul.f32.gmra.mxu0 %v3728
    %v3840 = vpop.f32.mrf.mxu0
    %v3841 = vadd.f32 0.0, %v3840
    %3842 = vmatmul.f32.gmra.mxu0 %v3731
    %v3843 = vpop.f32.mrf.mxu0
    %v3844 = vadd.f32 0.0, %v3843
    %3845 = vmatmul.f32.gmra.mxu0 %v3734
    %v3846 = vpop.f32.mrf.mxu0
    %v3847 = vadd.f32 0.0, %v3846
    %3848 = vmatmul.f32.gmra.mxu0 %v3737
    %v3849 = vpop.f32.mrf.mxu0
    %v3850 = vadd.f32 0.0, %v3849
    %3851 = vmatmul.f32.gmra.mxu0 %v3740
    %v3852 = vpop.f32.mrf.mxu0
    %v3853 = vadd.f32 0.0, %v3852
    %3854 = vmatmul.f32.gmra.mxu0 %v3743
    %v3855 = vpop.f32.mrf.mxu0
    %v3856 = vadd.f32 0.0, %v3855
    %3857 = vmatmul.f32.gmra.mxu0 %v3746
    %v3858 = vpop.f32.mrf.mxu0
    %v3859 = vadd.f32 0.0, %v3858
    %3860 = vmatmul.f32.gmra.mxu0 %v3749
    %v3861 = vpop.f32.mrf.mxu0
    %v3862 = vadd.f32 0.0, %v3861
    %3863 = vmatmul.f32.gmra.mxu0 %v3752
    %v3864 = vpop.f32.mrf.mxu0
    %v3865 = vadd.f32 0.0, %v3864
    %3866 = vmatmul.f32.gmra.mxu0 %v3755
    %v3867 = vpop.f32.mrf.mxu0
    %v3868 = vadd.f32 0.0, %v3867
    %3869 = vmatmul.f32.gmra.mxu0 %v3758
    %v3870 = vpop.f32.mrf.mxu0
    %v3871 = vadd.f32 0.0, %v3870
    %3872 = vmatmul.f32.gmra.mxu0 %v3761
    %v3873 = vpop.f32.mrf.mxu0
    %v3874 = vadd.f32 0.0, %v3873
    %3875 = vmatmul.f32.gmra.mxu0 %v3764
    %v3876 = vpop.f32.mrf.mxu0
    %v3877 = vadd.f32 0.0, %v3876
    %3878 = vmatmul.f32.gmra.mxu0 %v3767
    %v3879 = vpop.f32.mrf.mxu0
    %v3880 = vadd.f32 0.0, %v3879
    %3881 = vmatmul.f32.gmra.mxu0 %v3770
    %v3882 = vpop.f32.mrf.mxu0
    %v3883 = vadd.f32 0.0, %v3882
    %3884 = vmatmul.f32.gmra.mxu0 %v3773
    %v3885 = vpop.f32.mrf.mxu0
    %v3886 = vadd.f32 0.0, %v3885
    %3887 = vdwg.mxu0
    %vm3888 = vcmask 261120
    %3889 = vst.msk [vmem:[#allocation3] sm:$0xff] %vm3888, %v3793
    %3890 = vst.msk [vmem:[#allocation3 + $0x20] sm:$0xff] %vm3888, %v3796
    %3893 = vrot.lane.b32.xlu0 %v3799, 32
    %v3894 = vpop.permute.xlu0 %3893
    %3895 = vrot.lane.b32.xlu0 %v3802, 32
    %v3896 = vpop.permute.xlu0 %3895
    %vm3899 = vcmask 523520
    %3900 = vst.msk [vmem:[#allocation3] sm:$0xff] %vm3899, %v3894
    %3901 = vst.msk [vmem:[#allocation3 + $0x20] sm:$0xff] %vm3899, %v3896
    %3904 = vrot.lane.b32.xlu0 %v3805, 64
    %v3905 = vpop.permute.xlu0 %3904
    %3906 = vrot.lane.b32.xlu0 %v3808, 64
    %v3907 = vpop.permute.xlu0 %3906
    %vm3910 = vcmask 785920
    %3911 = vst.msk [vmem:[#allocation3] sm:$0xff] %vm3910, %v3905
    %3912 = vst.msk [vmem:[#allocation3 + $0x20] sm:$0xff] %vm3910, %v3907
    %3915 = vrot.lane.b32.xlu0 %v3811, 96
    %v3916 = vpop.permute.xlu0 %3915
    %3917 = vrot.lane.b32.xlu0 %v3814, 96
    %v3918 = vpop.permute.xlu0 %3917
    %vm3921 = vcmask 1048320
    %3922 = vst.msk [vmem:[#allocation3] sm:$0xff] %vm3921, %v3916
    %3923 = vst.msk [vmem:[#allocation3 + $0x20] sm:$0xff] %vm3921, %v3918
    %3924 = vst.msk [vmem:[#allocation3 + $0x8] sm:$0xff] %vm3888, %v3817
    %3925 = vst.msk [vmem:[#allocation3 + $0x28] sm:$0xff] %vm3888, %v3820
    %3928 = vrot.lane.b32.xlu0 %v3823, 32
    %v3929 = vpop.permute.xlu0 %3928
    %3930 = vrot.lane.b32.xlu0 %v3826, 32
    %v3931 = vpop.permute.xlu0 %3930
    %3934 = vst.msk [vmem:[#allocation3 + $0x8] sm:$0xff] %vm3899, %v3929
    %3935 = vst.msk [vmem:[#allocation3 + $0x28] sm:$0xff] %vm3899, %v3931
    %3938 = vrot.lane.b32.xlu0 %v3829, 64
    %v3939 = vpop.permute.xlu0 %3938
    %3940 = vrot.lane.b32.xlu0 %v3832, 64
    %v3941 = vpop.permute.xlu0 %3940
    %3944 = vst.msk [vmem:[#allocation3 + $0x8] sm:$0xff] %vm3910, %v3939
    %3945 = vst.msk [vmem:[#allocation3 + $0x28] sm:$0xff] %vm3910, %v3941
    %3948 = vrot.lane.b32.xlu0 %v3835, 96
    %v3949 = vpop.permute.xlu0 %3948
    %3950 = vrot.lane.b32.xlu0 %v3838, 96
    %v3951 = vpop.permute.xlu0 %3950
    %3954 = vst.msk [vmem:[#allocation3 + $0x8] sm:$0xff] %vm3921, %v3949
    %3955 = vst.msk [vmem:[#allocation3 + $0x28] sm:$0xff] %vm3921, %v3951
    %3956 = vst.msk [vmem:[#allocation3 + $0x10] sm:$0xff] %vm3888, %v3841
    %3957 = vst.msk [vmem:[#allocation3 + $0x30] sm:$0xff] %vm3888, %v3844
    %3960 = vrot.lane.b32.xlu0 %v3847, 32
    %v3961 = vpop.permute.xlu0 %3960
    %3962 = vrot.lane.b32.xlu0 %v3850, 32
    %v3963 = vpop.permute.xlu0 %3962
    %3966 = vst.msk [vmem:[#allocation3 + $0x10] sm:$0xff] %vm3899, %v3961
    %3967 = vst.msk [vmem:[#allocation3 + $0x30] sm:$0xff] %vm3899, %v3963
    %3970 = vrot.lane.b32.xlu0 %v3853, 64
    %v3971 = vpop.permute.xlu0 %3970
    %3972 = vrot.lane.b32.xlu0 %v3856, 64
    %v3973 = vpop.permute.xlu0 %3972
    %3976 = vst.msk [vmem:[#allocation3 + $0x10] sm:$0xff] %vm3910, %v3971
    %3977 = vst.msk [vmem:[#allocation3 + $0x30] sm:$0xff] %vm3910, %v3973
    %3980 = vrot.lane.b32.xlu0 %v3859, 96
    %v3981 = vpop.permute.xlu0 %3980
    %3982 = vrot.lane.b32.xlu0 %v3862, 96
    %v3983 = vpop.permute.xlu0 %3982
    %3986 = vst.msk [vmem:[#allocation3 + $0x10] sm:$0xff] %vm3921, %v3981
    %3987 = vst.msk [vmem:[#allocation3 + $0x30] sm:$0xff] %vm3921, %v3983
    %3988 = vst.msk [vmem:[#allocation3 + $0x18] sm:$0xff] %vm3888, %v3865
    %3989 = vst.msk [vmem:[#allocation3 + $0x38] sm:$0xff] %vm3888, %v3868
    %3992 = vrot.lane.b32.xlu0 %v3871, 32
    %v3993 = vpop.permute.xlu0 %3992
    %3994 = vrot.lane.b32.xlu0 %v3874, 32
    %v3995 = vpop.permute.xlu0 %3994
    %3998 = vst.msk [vmem:[#allocation3 + $0x18] sm:$0xff] %vm3899, %v3993
    %3999 = vst.msk [vmem:[#allocation3 + $0x38] sm:$0xff] %vm3899, %v3995
    %4002 = vrot.lane.b32.xlu0 %v3877, 64
    %v4003 = vpop.permute.xlu0 %4002
    %4004 = vrot.lane.b32.xlu0 %v3880, 64
    %v4005 = vpop.permute.xlu0 %4004
    %4008 = vst.msk [vmem:[#allocation3 + $0x18] sm:$0xff] %vm3910, %v4003
    %4009 = vst.msk [vmem:[#allocation3 + $0x38] sm:$0xff] %vm3910, %v4005
    %4012 = vrot.lane.b32.xlu0 %v3883, 96
    %v4013 = vpop.permute.xlu0 %4012
    %4014 = vrot.lane.b32.xlu0 %v3886, 96
    %v4015 = vpop.permute.xlu0 %4014
    %4018 = vst.msk [vmem:[#allocation3 + $0x18] sm:$0xff] %vm3921, %v4013
    %4019 = vst.msk [vmem:[#allocation3 + $0x38] sm:$0xff] %vm3921, %v4015
    %v4020 = vld [vmem:[%s4] sm:$0xff]
    %v4021 = vld [vmem:[%s4 + $0x8] sm:$0xff]
    %v4022 = vld [vmem:[%s4 + $0x10] sm:$0xff]
    %v4023 = vld [vmem:[%s4 + $0x18] sm:$0xff]
    %v4024 = vld [vmem:[%s4 + $0x20] sm:$0xff]
    %v4025 = vld [vmem:[%s4 + $0x28] sm:$0xff]
    %v4026 = vld [vmem:[%s4 + $0x30] sm:$0xff]
    %v4027 = vld [vmem:[%s4 + $0x38] sm:$0xff]
    %v4028 = vld [vmem:[%s4 + $0x40] sm:$0xff]
    %v4029 = vld [vmem:[%s4 + $0x48] sm:$0xff]
    %v4030 = vld [vmem:[%s4 + $0x50] sm:$0xff]
    %v4031 = vld [vmem:[%s4 + $0x58] sm:$0xff]
    %v4032 = vld [vmem:[%s4 + $0x60] sm:$0xff]
    %v4033 = vld [vmem:[%s4 + $0x68] sm:$0xff]
    %v4034 = vld [vmem:[%s4 + $0x70] sm:$0xff]
    %v4035 = vld [vmem:[%s4 + $0x78] sm:$0xff]
    %v4036 = vld [vmem:[%s4 + $0x80] sm:$0xff]
    %v4037 = vld [vmem:[%s4 + $0x88] sm:$0xff]
    %v4038 = vld [vmem:[%s4 + $0x90] sm:$0xff]
    %v4039 = vld [vmem:[%s4 + $0x98] sm:$0xff]
    %v4040 = vld [vmem:[%s4 + $0xa0] sm:$0xff]
    %v4041 = vld [vmem:[%s4 + $0xa8] sm:$0xff]
    %v4042 = vld [vmem:[%s4 + $0xb0] sm:$0xff]
    %v4043 = vld [vmem:[%s4 + $0xb8] sm:$0xff]
    %v4044 = vld [vmem:[%s4 + $0xc0] sm:$0xff]
    %v4045 = vld [vmem:[%s4 + $0xc8] sm:$0xff]
    %v4046 = vld [vmem:[%s4 + $0xd0] sm:$0xff]
    %v4047 = vld [vmem:[%s4 + $0xd8] sm:$0xff]
    %v4048 = vld [vmem:[%s4 + $0xe0] sm:$0xff]
    %v4049 = vld [vmem:[%s4 + $0xe8] sm:$0xff]
    %v4050 = vld [vmem:[%s4 + $0xf0] sm:$0xff]
    %v4051 = vld [vmem:[%s4 + $0xf8] sm:$0xff]
    %v4053 = vsel %vm3678, %v4020, 0
    %v4056 = vsel %vm3678, %v4021, 0
    %v4059 = vsel %vm3678, %v4022, 0
    %v4062 = vsel %vm3678, %v4023, 0
    %v4065 = vsel %vm3678, %v4024, 0
    %v4068 = vsel %vm3678, %v4025, 0
    %v4071 = vsel %vm3678, %v4026, 0
    %v4074 = vsel %vm3678, %v4027, 0
    %v4077 = vsel %vm3678, %v4028, 0
    %v4080 = vsel %vm3678, %v4029, 0
    %v4083 = vsel %vm3678, %v4030, 0
    %v4086 = vsel %vm3678, %v4031, 0
    %v4089 = vsel %vm3678, %v4032, 0
    %v4092 = vsel %vm3678, %v4033, 0
    %v4095 = vsel %vm3678, %v4034, 0
    %v4098 = vsel %vm3678, %v4035, 0
    %v4101 = vsel %vm3678, %v4036, 0
    %v4104 = vsel %vm3678, %v4037, 0
    %v4107 = vsel %vm3678, %v4038, 0
    %v4110 = vsel %vm3678, %v4039, 0
    %v4113 = vsel %vm3678, %v4040, 0
    %v4116 = vsel %vm3678, %v4041, 0
    %v4119 = vsel %vm3678, %v4042, 0
    %v4122 = vsel %vm3678, %v4043, 0
    %v4125 = vsel %vm3678, %v4044, 0
    %v4128 = vsel %vm3678, %v4045, 0
    %v4131 = vsel %vm3678, %v4046, 0
    %v4134 = vsel %vm3678, %v4047, 0
    %v4137 = vsel %vm3678, %v4048, 0
    %v4140 = vsel %vm3678, %v4049, 0
    %v4143 = vsel %vm3678, %v4050, 0
    %v4146 = vsel %vm3678, %v4051, 0
    %4148 = vmatpush.msra.mxu0 0.0
    %4149 = vmatpush.msra.mxu0 0.0
    %4150 = vmatpush.msra.mxu0 0.0
    %4151 = vmatpush.msra.mxu0 0.0
    %4152 = vmatpush.msra.mxu0 0.0
    %4153 = vmatpush.msra.mxu0 0.0
    %4154 = vmatpush.msra.mxu0 0.0
    %4155 = vmatpush.msra.mxu0 0.0
    %4156 = vmatpush.msra.mxu0 %v3645
    %4157 = vmatpush.msra.mxu0 %v3644
    %4158 = vmatpush.msra.mxu0 %v3643
    %4159 = vmatpush.msra.mxu0 %v3642
    %4160 = vmatpush.msra.mxu0 %v3641
    %4161 = vmatpush.msra.mxu0 %v3640
    %4162 = vmatpush.msra.mxu0 %v3639
    %4163 = vmatpush.msra.mxu0 %v3638
    %4164 = vmatmul.f32.gmra.mxu0 %v4053
    %v4165 = vpop.f32.mrf.mxu0
    %v4166 = vadd.f32 0.0, %v4165
    %4167 = vmatmul.f32.gmra.mxu0 %v4056
    %v4168 = vpop.f32.mrf.mxu0
    %v4169 = vadd.f32 0.0, %v4168
    %4170 = vmatmul.f32.gmra.mxu0 %v4059
    %v4171 = vpop.f32.mrf.mxu0
    %v4172 = vadd.f32 0.0, %v4171
    %4173 = vmatmul.f32.gmra.mxu0 %v4062
    %v4174 = vpop.f32.mrf.mxu0
    %v4175 = vadd.f32 0.0, %v4174
    %4176 = vmatmul.f32.gmra.mxu0 %v4065
    %v4177 = vpop.f32.mrf.mxu0
    %v4178 = vadd.f32 0.0, %v4177
    %4179 = vmatmul.f32.gmra.mxu0 %v4068
    %v4180 = vpop.f32.mrf.mxu0
    %v4181 = vadd.f32 0.0, %v4180
    %4182 = vmatmul.f32.gmra.mxu0 %v4071
    %v4183 = vpop.f32.mrf.mxu0
    %v4184 = vadd.f32 0.0, %v4183
    %4185 = vmatmul.f32.gmra.mxu0 %v4074
    %v4186 = vpop.f32.mrf.mxu0
    %v4187 = vadd.f32 0.0, %v4186
    %4188 = vmatmul.f32.gmra.mxu0 %v4077
    %v4189 = vpop.f32.mrf.mxu0
    %v4190 = vadd.f32 0.0, %v4189
    %4191 = vmatmul.f32.gmra.mxu0 %v4080
    %v4192 = vpop.f32.mrf.mxu0
    %v4193 = vadd.f32 0.0, %v4192
    %4194 = vmatmul.f32.gmra.mxu0 %v4083
    %v4195 = vpop.f32.mrf.mxu0
    %v4196 = vadd.f32 0.0, %v4195
    %4197 = vmatmul.f32.gmra.mxu0 %v4086
    %v4198 = vpop.f32.mrf.mxu0
    %v4199 = vadd.f32 0.0, %v4198
    %4200 = vmatmul.f32.gmra.mxu0 %v4089
    %v4201 = vpop.f32.mrf.mxu0
    %v4202 = vadd.f32 0.0, %v4201
    %4203 = vmatmul.f32.gmra.mxu0 %v4092
    %v4204 = vpop.f32.mrf.mxu0
    %v4205 = vadd.f32 0.0, %v4204
    %4206 = vmatmul.f32.gmra.mxu0 %v4095
    %v4207 = vpop.f32.mrf.mxu0
    %v4208 = vadd.f32 0.0, %v4207
    %4209 = vmatmul.f32.gmra.mxu0 %v4098
    %v4210 = vpop.f32.mrf.mxu0
    %v4211 = vadd.f32 0.0, %v4210
    %4212 = vmatmul.f32.gmra.mxu0 %v4101
    %v4213 = vpop.f32.mrf.mxu0
    %v4214 = vadd.f32 0.0, %v4213
    %4215 = vmatmul.f32.gmra.mxu0 %v4104
    %v4216 = vpop.f32.mrf.mxu0
    %v4217 = vadd.f32 0.0, %v4216
    %4218 = vmatmul.f32.gmra.mxu0 %v4107
    %v4219 = vpop.f32.mrf.mxu0
    %v4220 = vadd.f32 0.0, %v4219
    %4221 = vmatmul.f32.gmra.mxu0 %v4110
    %v4222 = vpop.f32.mrf.mxu0
    %v4223 = vadd.f32 0.0, %v4222
    %4224 = vmatmul.f32.gmra.mxu0 %v4113
    %v4225 = vpop.f32.mrf.mxu0
    %v4226 = vadd.f32 0.0, %v4225
    %4227 = vmatmul.f32.gmra.mxu0 %v4116
    %v4228 = vpop.f32.mrf.mxu0
    %v4229 = vadd.f32 0.0, %v4228
    %4230 = vmatmul.f32.gmra.mxu0 %v4119
    %v4231 = vpop.f32.mrf.mxu0
    %v4232 = vadd.f32 0.0, %v4231
    %4233 = vmatmul.f32.gmra.mxu0 %v4122
    %v4234 = vpop.f32.mrf.mxu0
    %v4235 = vadd.f32 0.0, %v4234
    %4236 = vmatmul.f32.gmra.mxu0 %v4125
    %v4237 = vpop.f32.mrf.mxu0
    %v4238 = vadd.f32 0.0, %v4237
    %4239 = vmatmul.f32.gmra.mxu0 %v4128
    %v4240 = vpop.f32.mrf.mxu0
    %v4241 = vadd.f32 0.0, %v4240
    %4242 = vmatmul.f32.gmra.mxu0 %v4131
    %v4243 = vpop.f32.mrf.mxu0
    %v4244 = vadd.f32 0.0, %v4243
    %4245 = vmatmul.f32.gmra.mxu0 %v4134
    %v4246 = vpop.f32.mrf.mxu0
    %v4247 = vadd.f32 0.0, %v4246
    %4248 = vmatmul.f32.gmra.mxu0 %v4137
    %v4249 = vpop.f32.mrf.mxu0
    %v4250 = vadd.f32 0.0, %v4249
    %4251 = vmatmul.f32.gmra.mxu0 %v4140
    %v4252 = vpop.f32.mrf.mxu0
    %v4253 = vadd.f32 0.0, %v4252
    %4254 = vmatmul.f32.gmra.mxu0 %v4143
    %v4255 = vpop.f32.mrf.mxu0
    %v4256 = vadd.f32 0.0, %v4255
    %4257 = vmatmul.f32.gmra.mxu0 %v4146
    %v4258 = vpop.f32.mrf.mxu0
    %v4259 = vadd.f32 0.0, %v4258
    %4260 = vdwg.mxu0
    %4261 = vst.msk [vmem:[#allocation3 + $0x40] sm:$0xff] %vm3888, %v4166
    %4262 = vst.msk [vmem:[#allocation3 + $0x60] sm:$0xff] %vm3888, %v4169
    %4265 = vrot.lane.b32.xlu0 %v4172, 32
    %v4266 = vpop.permute.xlu0 %4265
    %4267 = vrot.lane.b32.xlu0 %v4175, 32
    %v4268 = vpop.permute.xlu0 %4267
    %4271 = vst.msk [vmem:[#allocation3 + $0x40] sm:$0xff] %vm3899, %v4266
    %4272 = vst.msk [vmem:[#allocation3 + $0x60] sm:$0xff] %vm3899, %v4268
    %4275 = vrot.lane.b32.xlu0 %v4178, 64
    %v4276 = vpop.permute.xlu0 %4275
    %4277 = vrot.lane.b32.xlu0 %v4181, 64
    %v4278 = vpop.permute.xlu0 %4277
    %4281 = vst.msk [vmem:[#allocation3 + $0x40] sm:$0xff] %vm3910, %v4276
    %4282 = vst.msk [vmem:[#allocation3 + $0x60] sm:$0xff] %vm3910, %v4278
    %4285 = vrot.lane.b32.xlu0 %v4184, 96
    %v4286 = vpop.permute.xlu0 %4285
    %4287 = vrot.lane.b32.xlu0 %v4187, 96
    %v4288 = vpop.permute.xlu0 %4287
    %4291 = vst.msk [vmem:[#allocation3 + $0x40] sm:$0xff] %vm3921, %v4286
    %4292 = vst.msk [vmem:[#allocation3 + $0x60] sm:$0xff] %vm3921, %v4288
    %4293 = vst.msk [vmem:[#allocation3 + $0x48] sm:$0xff] %vm3888, %v4190
    %4294 = vst.msk [vmem:[#allocation3 + $0x68] sm:$0xff] %vm3888, %v4193
    %4297 = vrot.lane.b32.xlu0 %v4196, 32
    %v4298 = vpop.permute.xlu0 %4297
    %4299 = vrot.lane.b32.xlu0 %v4199, 32
    %v4300 = vpop.permute.xlu0 %4299
    %4303 = vst.msk [vmem:[#allocation3 + $0x48] sm:$0xff] %vm3899, %v4298
    %4304 = vst.msk [vmem:[#allocation3 + $0x68] sm:$0xff] %vm3899, %v4300
    %4307 = vrot.lane.b32.xlu0 %v4202, 64
    %v4308 = vpop.permute.xlu0 %4307
    %4309 = vrot.lane.b32.xlu0 %v4205, 64
    %v4310 = vpop.permute.xlu0 %4309
    %4313 = vst.msk [vmem:[#allocation3 + $0x48] sm:$0xff] %vm3910, %v4308
    %4314 = vst.msk [vmem:[#allocation3 + $0x68] sm:$0xff] %vm3910, %v4310
    %4317 = vrot.lane.b32.xlu0 %v4208, 96
    %v4318 = vpop.permute.xlu0 %4317
    %4319 = vrot.lane.b32.xlu0 %v4211, 96
    %v4320 = vpop.permute.xlu0 %4319
    %4323 = vst.msk [vmem:[#allocation3 + $0x48] sm:$0xff] %vm3921, %v4318
    %4324 = vst.msk [vmem:[#allocation3 + $0x68] sm:$0xff] %vm3921, %v4320
    %4325 = vst.msk [vmem:[#allocation3 + $0x50] sm:$0xff] %vm3888, %v4214
    %4326 = vst.msk [vmem:[#allocation3 + $0x70] sm:$0xff] %vm3888, %v4217
    %4329 = vrot.lane.b32.xlu0 %v4220, 32
    %v4330 = vpop.permute.xlu0 %4329
    %4331 = vrot.lane.b32.xlu0 %v4223, 32
    %v4332 = vpop.permute.xlu0 %4331
    %4335 = vst.msk [vmem:[#allocation3 + $0x50] sm:$0xff] %vm3899, %v4330
    %4336 = vst.msk [vmem:[#allocation3 + $0x70] sm:$0xff] %vm3899, %v4332
    %4339 = vrot.lane.b32.xlu0 %v4226, 64
    %v4340 = vpop.permute.xlu0 %4339
    %4341 = vrot.lane.b32.xlu0 %v4229, 64
    %v4342 = vpop.permute.xlu0 %4341
    %4345 = vst.msk [vmem:[#allocation3 + $0x50] sm:$0xff] %vm3910, %v4340
    %4346 = vst.msk [vmem:[#allocation3 + $0x70] sm:$0xff] %vm3910, %v4342
    %4349 = vrot.lane.b32.xlu0 %v4232, 96
    %v4350 = vpop.permute.xlu0 %4349
    %4351 = vrot.lane.b32.xlu0 %v4235, 96
    %v4352 = vpop.permute.xlu0 %4351
    %4355 = vst.msk [vmem:[#allocation3 + $0x50] sm:$0xff] %vm3921, %v4350
    %4356 = vst.msk [vmem:[#allocation3 + $0x70] sm:$0xff] %vm3921, %v4352
    %4357 = vst.msk [vmem:[#allocation3 + $0x58] sm:$0xff] %vm3888, %v4238
    %4358 = vst.msk [vmem:[#allocation3 + $0x78] sm:$0xff] %vm3888, %v4241
    %4361 = vrot.lane.b32.xlu0 %v4244, 32
    %v4362 = vpop.permute.xlu0 %4361
    %4363 = vrot.lane.b32.xlu0 %v4247, 32
    %v4364 = vpop.permute.xlu0 %4363
    %4367 = vst.msk [vmem:[#allocation3 + $0x58] sm:$0xff] %vm3899, %v4362
    %4368 = vst.msk [vmem:[#allocation3 + $0x78] sm:$0xff] %vm3899, %v4364
    %4371 = vrot.lane.b32.xlu0 %v4250, 64
    %v4372 = vpop.permute.xlu0 %4371
    %4373 = vrot.lane.b32.xlu0 %v4253, 64
    %v4374 = vpop.permute.xlu0 %4373
    %4377 = vst.msk [vmem:[#allocation3 + $0x58] sm:$0xff] %vm3910, %v4372
    %4378 = vst.msk [vmem:[#allocation3 + $0x78] sm:$0xff] %vm3910, %v4374
    %4381 = vrot.lane.b32.xlu0 %v4256, 96
    %v4382 = vpop.permute.xlu0 %4381
    %4383 = vrot.lane.b32.xlu0 %v4259, 96
    %v4384 = vpop.permute.xlu0 %4383
    %4387 = vst.msk [vmem:[#allocation3 + $0x58] sm:$0xff] %vm3921, %v4382
    %4388 = vst.msk [vmem:[#allocation3 + $0x78] sm:$0xff] %vm3921, %v4384
    %v4389 = vld [vmem:[#allocation3] sm:$0xff]
    %v4390 = vld [vmem:[#allocation3 + $0x8] sm:$0xff]
    %v4391 = vld [vmem:[#allocation3 + $0x10] sm:$0xff]
    %v4392 = vld [vmem:[#allocation3 + $0x18] sm:$0xff]
    %v4393 = vld [vmem:[#allocation3 + $0x20] sm:$0xff]
    %v4394 = vld [vmem:[#allocation3 + $0x28] sm:$0xff]
    %v4395 = vld [vmem:[#allocation3 + $0x30] sm:$0xff]
    %v4396 = vld [vmem:[#allocation3 + $0x38] sm:$0xff]
    %v4397 = vld [vmem:[#allocation3 + $0x40] sm:$0xff]
    %v4398 = vld [vmem:[#allocation3 + $0x48] sm:$0xff]
    %v4399 = vld [vmem:[#allocation3 + $0x50] sm:$0xff]
    %v4400 = vld [vmem:[#allocation3 + $0x58] sm:$0xff]
    %v4401 = vld [vmem:[#allocation3 + $0x60] sm:$0xff]
    %v4402 = vld [vmem:[#allocation3 + $0x68] sm:$0xff]
    %v4403 = vld [vmem:[#allocation3 + $0x70] sm:$0xff]
    %v4404 = vld [vmem:[#allocation3 + $0x78] sm:$0xff]
    %v4405 = vld [vmem:[%s5] sm:$0xff]
    %v4406 = vld [vmem:[%s5 + $0x8] sm:$0xff]
    %v4407 = vld [vmem:[%s5 + $0x10] sm:$0xff]
    %v4408 = vld [vmem:[%s5 + $0x18] sm:$0xff]
    %v4409 = vld [vmem:[%s5 + $0x20] sm:$0xff]
    %v4410 = vld [vmem:[%s5 + $0x28] sm:$0xff]
    %v4411 = vld [vmem:[%s5 + $0x30] sm:$0xff]
    %v4412 = vld [vmem:[%s5 + $0x38] sm:$0xff]
    %v4413 = vld [vmem:[%s5 + $0x40] sm:$0xff]
    %v4414 = vld [vmem:[%s5 + $0x48] sm:$0xff]
    %v4415 = vld [vmem:[%s5 + $0x50] sm:$0xff]
    %v4416 = vld [vmem:[%s5 + $0x58] sm:$0xff]
    %v4417 = vld [vmem:[%s5 + $0x60] sm:$0xff]
    %v4418 = vld [vmem:[%s5 + $0x68] sm:$0xff]
    %v4419 = vld [vmem:[%s5 + $0x70] sm:$0xff]
    %v4420 = vld [vmem:[%s5 + $0x78] sm:$0xff]
    %v4421 = vld [vmem:[%s5 + $0x80] sm:$0xff]
    %v4422 = vld [vmem:[%s5 + $0x88] sm:$0xff]
    %v4423 = vld [vmem:[%s5 + $0x90] sm:$0xff]
    %v4424 = vld [vmem:[%s5 + $0x98] sm:$0xff]
    %v4425 = vld [vmem:[%s5 + $0xa0] sm:$0xff]
    %v4426 = vld [vmem:[%s5 + $0xa8] sm:$0xff]
    %v4427 = vld [vmem:[%s5 + $0xb0] sm:$0xff]
    %v4428 = vld [vmem:[%s5 + $0xb8] sm:$0xff]
    %v4429 = vld [vmem:[%s5 + $0xc0] sm:$0xff]
    %v4430 = vld [vmem:[%s5 + $0xc8] sm:$0xff]
    %v4431 = vld [vmem:[%s5 + $0xd0] sm:$0xff]
    %v4432 = vld [vmem:[%s5 + $0xd8] sm:$0xff]
    %v4433 = vld [vmem:[%s5 + $0xe0] sm:$0xff]
    %v4434 = vld [vmem:[%s5 + $0xe8] sm:$0xff]
    %v4435 = vld [vmem:[%s5 + $0xf0] sm:$0xff]
    %v4436 = vld [vmem:[%s5 + $0xf8] sm:$0xff]
    %v4437 = vld [vmem:[%s5 + $0x100] sm:$0xff]
    %v4438 = vld [vmem:[%s5 + $0x108] sm:$0xff]
    %v4439 = vld [vmem:[%s5 + $0x110] sm:$0xff]
    %v4440 = vld [vmem:[%s5 + $0x118] sm:$0xff]
    %v4441 = vld [vmem:[%s5 + $0x120] sm:$0xff]
    %v4442 = vld [vmem:[%s5 + $0x128] sm:$0xff]
    %v4443 = vld [vmem:[%s5 + $0x130] sm:$0xff]
    %v4444 = vld [vmem:[%s5 + $0x138] sm:$0xff]
    %v4445 = vld [vmem:[%s5 + $0x140] sm:$0xff]
    %v4446 = vld [vmem:[%s5 + $0x148] sm:$0xff]
    %v4447 = vld [vmem:[%s5 + $0x150] sm:$0xff]
    %v4448 = vld [vmem:[%s5 + $0x158] sm:$0xff]
    %v4449 = vld [vmem:[%s5 + $0x160] sm:$0xff]
    %v4450 = vld [vmem:[%s5 + $0x168] sm:$0xff]
    %v4451 = vld [vmem:[%s5 + $0x170] sm:$0xff]
    %v4452 = vld [vmem:[%s5 + $0x178] sm:$0xff]
    %v4453 = vld [vmem:[%s5 + $0x180] sm:$0xff]
    %v4454 = vld [vmem:[%s5 + $0x188] sm:$0xff]
    %v4455 = vld [vmem:[%s5 + $0x190] sm:$0xff]
    %v4456 = vld [vmem:[%s5 + $0x198] sm:$0xff]
    %v4457 = vld [vmem:[%s5 + $0x1a0] sm:$0xff]
    %v4458 = vld [vmem:[%s5 + $0x1a8] sm:$0xff]
    %v4459 = vld [vmem:[%s5 + $0x1b0] sm:$0xff]
    %v4460 = vld [vmem:[%s5 + $0x1b8] sm:$0xff]
    %v4461 = vld [vmem:[%s5 + $0x1c0] sm:$0xff]
    %v4462 = vld [vmem:[%s5 + $0x1c8] sm:$0xff]
    %v4463 = vld [vmem:[%s5 + $0x1d0] sm:$0xff]
    %v4464 = vld [vmem:[%s5 + $0x1d8] sm:$0xff]
    %v4465 = vld [vmem:[%s5 + $0x1e0] sm:$0xff]
    %v4466 = vld [vmem:[%s5 + $0x1e8] sm:$0xff]
    %v4467 = vld [vmem:[%s5 + $0x1f0] sm:$0xff]
    %v4468 = vld [vmem:[%s5 + $0x1f8] sm:$0xff]
    %4469 = vmatpush.msra.mxu0 %v4420
    %4470 = vmatpush.msra.mxu0 %v4419
    %4471 = vmatpush.msra.mxu0 %v4418
    %4472 = vmatpush.msra.mxu0 %v4417
    %4473 = vmatpush.msra.mxu0 %v4416
    %4474 = vmatpush.msra.mxu0 %v4415
    %4475 = vmatpush.msra.mxu0 %v4414
    %4476 = vmatpush.msra.mxu0 %v4413
    %4477 = vmatpush.msra.mxu0 %v4412
    %4478 = vmatpush.msra.mxu0 %v4411
    %4479 = vmatpush.msra.mxu0 %v4410
    %4480 = vmatpush.msra.mxu0 %v4409
    %4481 = vmatpush.msra.mxu0 %v4408
    %4482 = vmatpush.msra.mxu0 %v4407
    %4483 = vmatpush.msra.mxu0 %v4406
    %4484 = vmatpush.msra.mxu0 %v4405
    %4485 = vmatmul.f32.gmra.mxu0 %v4389
    %v4486 = vpop.f32.mrf.mxu0
    %v4487 = vadd.f32 0.0, %v4486
    %4488 = vmatmul.f32.gmra.mxu0 %v4393
    %v4489 = vpop.f32.mrf.mxu0
    %v4490 = vadd.f32 0.0, %v4489
    %4491 = vmatmul.f32.gmra.mxu0 %v4397
    %v4492 = vpop.f32.mrf.mxu0
    %v4493 = vadd.f32 0.0, %v4492
    %4494 = vmatmul.f32.gmra.mxu0 %v4401
    %v4495 = vpop.f32.mrf.mxu0
    %v4496 = vadd.f32 0.0, %v4495
    %4497 = vdwg.mxu0
    %4498 = vmatpush.msra.mxu0 %v4436
    %4499 = vmatpush.msra.mxu0 %v4435
    %4500 = vmatpush.msra.mxu0 %v4434
    %4501 = vmatpush.msra.mxu0 %v4433
    %4502 = vmatpush.msra.mxu0 %v4432
    %4503 = vmatpush.msra.mxu0 %v4431
    %4504 = vmatpush.msra.mxu0 %v4430
    %4505 = vmatpush.msra.mxu0 %v4429
    %4506 = vmatpush.msra.mxu0 %v4428
    %4507 = vmatpush.msra.mxu0 %v4427
    %4508 = vmatpush.msra.mxu0 %v4426
    %4509 = vmatpush.msra.mxu0 %v4425
    %4510 = vmatpush.msra.mxu0 %v4424
    %4511 = vmatpush.msra.mxu0 %v4423
    %4512 = vmatpush.msra.mxu0 %v4422
    %4513 = vmatpush.msra.mxu0 %v4421
    %4514 = vmatmul.f32.gmra.mxu0 %v4390
    %v4515 = vpop.f32.mrf.mxu0
    %v4516 = vadd.f32 %v4487, %v4515
    %4517 = vmatmul.f32.gmra.mxu0 %v4394
    %v4518 = vpop.f32.mrf.mxu0
    %v4519 = vadd.f32 %v4490, %v4518
    %4520 = vmatmul.f32.gmra.mxu0 %v4398
    %v4521 = vpop.f32.mrf.mxu0
    %v4522 = vadd.f32 %v4493, %v4521
    %4523 = vmatmul.f32.gmra.mxu0 %v4402
    %v4524 = vpop.f32.mrf.mxu0
    %v4525 = vadd.f32 %v4496, %v4524
    %4526 = vdwg.mxu0
    %4527 = vmatpush.msra.mxu0 %v4452
    %4528 = vmatpush.msra.mxu0 %v4451
    %4529 = vmatpush.msra.mxu0 %v4450
    %4530 = vmatpush.msra.mxu0 %v4449
    %4531 = vmatpush.msra.mxu0 %v4448
    %4532 = vmatpush.msra.mxu0 %v4447
    %4533 = vmatpush.msra.mxu0 %v4446
    %4534 = vmatpush.msra.mxu0 %v4445
    %4535 = vmatpush.msra.mxu0 %v4444
    %4536 = vmatpush.msra.mxu0 %v4443
    %4537 = vmatpush.msra.mxu0 %v4442
    %4538 = vmatpush.msra.mxu0 %v4441
    %4539 = vmatpush.msra.mxu0 %v4440
    %4540 = vmatpush.msra.mxu0 %v4439
    %4541 = vmatpush.msra.mxu0 %v4438
    %4542 = vmatpush.msra.mxu0 %v4437
    %4543 = vmatmul.f32.gmra.mxu0 %v4391
    %v4544 = vpop.f32.mrf.mxu0
    %v4545 = vadd.f32 %v4516, %v4544
    %4546 = vmatmul.f32.gmra.mxu0 %v4395
    %v4547 = vpop.f32.mrf.mxu0
    %v4548 = vadd.f32 %v4519, %v4547
    %4549 = vmatmul.f32.gmra.mxu0 %v4399
    %v4550 = vpop.f32.mrf.mxu0
    %v4551 = vadd.f32 %v4522, %v4550
    %4552 = vmatmul.f32.gmra.mxu0 %v4403
    %v4553 = vpop.f32.mrf.mxu0
    %v4554 = vadd.f32 %v4525, %v4553
    %4555 = vdwg.mxu0
    %4556 = vmatpush.msra.mxu0 %v4468
    %4557 = vmatpush.msra.mxu0 %v4467
    %4558 = vmatpush.msra.mxu0 %v4466
    %4559 = vmatpush.msra.mxu0 %v4465
    %4560 = vmatpush.msra.mxu0 %v4464
    %4561 = vmatpush.msra.mxu0 %v4463
    %4562 = vmatpush.msra.mxu0 %v4462
    %4563 = vmatpush.msra.mxu0 %v4461
    %4564 = vmatpush.msra.mxu0 %v4460
    %4565 = vmatpush.msra.mxu0 %v4459
    %4566 = vmatpush.msra.mxu0 %v4458
    %4567 = vmatpush.msra.mxu0 %v4457
    %4568 = vmatpush.msra.mxu0 %v4456
    %4569 = vmatpush.msra.mxu0 %v4455
    %4570 = vmatpush.msra.mxu0 %v4454
    %4571 = vmatpush.msra.mxu0 %v4453
    %4572 = vmatmul.f32.gmra.mxu0 %v4392
    %v4573 = vpop.f32.mrf.mxu0
    %v4574 = vadd.f32 %v4545, %v4573
    %4575 = vmatmul.f32.gmra.mxu0 %v4396
    %v4576 = vpop.f32.mrf.mxu0
    %v4577 = vadd.f32 %v4548, %v4576
    %4578 = vmatmul.f32.gmra.mxu0 %v4400
    %v4579 = vpop.f32.mrf.mxu0
    %v4580 = vadd.f32 %v4551, %v4579
    %4581 = vmatmul.f32.gmra.mxu0 %v4404
    %v4582 = vpop.f32.mrf.mxu0
    %v4583 = vadd.f32 %v4554, %v4582
    %4584 = vdwg.mxu0
    %v4585 = vld [vmem:[%s6] sm:$0x1]
    %v4586 = vld [vmem:[%s6 + $0x1] sm:$0x1]
    %v4587 = vsel %vm3678, %v4574, 0.0
    %v4588 = vsel %vm3678, %v4577, 0.0
    %v4589 = vadd.f32 %v4587, %v4588
    %v4590 = vsel %vm3678, %v4580, 0.0
    %v4591 = vadd.f32 %v4589, %v4590
    %v4592 = vsel %vm3678, %v4583, 0.0
    %v4593 = vadd.f32 %v4591, %v4592
    %v4594 = vrot.slane %v4593, 4
    %v4595 = vadd.f32 %v4593, %v4594
    %v4596 = vrot.slane %v4595, 2
    %v4597 = vadd.f32 %v4595, %v4596
    %v4598 = vrot.slane %v4597, 1
    %v4599 = vadd.f32 %v4597, %v4598
    %v4600 = vrcp.pop 32.0
    %v4601 = vmul.f32 32.0, %v4600
    %v4602 = vsub.f32 1.0, %v4601
    %v4603 = vmul.f32 %v4600, %v4602
    %v4604 = vadd.f32 %v4600, %v4603
    %vm4605 = vweird.f32 %v4600
    %v4606 = vsel %vm4605, %v4600, %v4604
    %v4607 = vmul.f32 %v4599, %v4606
    %v4608 = vsub.f32 %v4574, %v4607
    %v4609 = vsub.f32 %v4577, %v4607
    %v4610 = vsub.f32 %v4580, %v4607
    %v4611 = vsub.f32 %v4583, %v4607
    %v4612 = vmul.f32 %v4608, %v4608
    %v4613 = vmul.f32 %v4609, %v4609
    %v4614 = vmul.f32 %v4610, %v4610
    %v4615 = vmul.f32 %v4611, %v4611
    %v4616 = vsel %vm3678, %v4612, 0.0
    %v4617 = vsel %vm3678, %v4613, 0.0
    %v4618 = vadd.f32 %v4616, %v4617
    %v4619 = vsel %vm3678, %v4614, 0.0
    %v4620 = vadd.f32 %v4618, %v4619
    %v4621 = vsel %vm3678, %v4615, 0.0
    %v4622 = vadd.f32 %v4620, %v4621
    %v4623 = vrot.slane %v4622, 4
    %v4624 = vadd.f32 %v4622, %v4623
    %v4625 = vrot.slane %v4624, 2
    %v4626 = vadd.f32 %v4624, %v4625
    %v4627 = vrot.slane %v4626, 1
    %v4628 = vadd.f32 %v4626, %v4627
    %v4629 = vmul.f32 %v4628, %v4606
    %v4630 = vadd.f32 %v4629, 1e-05
    %v4631 = vrsqrt.pop %v4630
    %v4632 = vmul.f32 %v4631, %v4630
    %v4633 = vmul.f32 %v4632, %v4631
    %v4634 = vmul.f32 0.5, %v4633
    %v4635 = vsub.f32 1.5, %v4634
    %v4636 = vmul.f32 %v4631, %v4635
    %vm4637 = vweird.f32 %v4630
    %vm4638 = vweird.f32 %v4631
    %vm4639 = vmor %vm4637, %vm4638
    %v4640 = vsel %vm4639, %v4631, %v4636
    %v4641 = vmul.f32 %v4608, %v4640
    %v4642 = vmul.f32 %v4609, %v4640
    %v4643 = vmul.f32 %v4610, %v4640
    %v4644 = vmul.f32 %v4611, %v4640
    %v4645 = vperm.slane %v4585, 0
    %v4646 = vmul.f32 %v4641, %v4645
    %v4647 = vmul.f32 %v4642, %v4645
    %v4648 = vmul.f32 %v4643, %v4645
    %v4649 = vmul.f32 %v4644, %v4645
    %v4650 = vperm.slane %v4586, 0
    %v4651 = vadd.f32 %v4646, %v4650
    %v4652 = vadd.f32 %v4647, %v4650
    %v4653 = vadd.f32 %v4648, %v4650
    %v4654 = vadd.f32 %v4649, %v4650
    %v4655 = vmul.f32 %v4651, 0.2
    %v4656 = vmul.f32 %v4652, 0.2
    %v4657 = vmul.f32 %v4653, 0.2
    %v4658 = vmul.f32 %v4654, 0.2
    %v4659 = vmax.f32 %v4651, %v4655
    %v4660 = vmax.f32 %v4652, %v4656
    %v4661 = vmax.f32 %v4653, %v4657
    %v4662 = vmax.f32 %v4654, %v4658
    %v4663 = vld [vmem:[%s7] sm:$0xff]
    %v4664 = vld [vmem:[%s7 + $0x8] sm:$0xff]
    %v4665 = vld [vmem:[%s7 + $0x10] sm:$0xff]
    %v4666 = vld [vmem:[%s7 + $0x18] sm:$0xff]
    %v4667 = vld [vmem:[%s7 + $0x20] sm:$0xff]
    %v4668 = vld [vmem:[%s7 + $0x28] sm:$0xff]
    %v4669 = vld [vmem:[%s7 + $0x30] sm:$0xff]
    %v4670 = vld [vmem:[%s7 + $0x38] sm:$0xff]
    %vm4671 = vcmask 130048
    %v4673 = vsel %vm4671, %v4663, 0
    %v4676 = vsel %vm4671, %v4664, 0
    %v4679 = vsel %vm4671, %v4665, 0
    %v4682 = vsel %vm4671, %v4666, 0
    %v4685 = vsel %vm4671, %v4667, 0
    %v4688 = vsel %vm4671, %v4668, 0
    %v4691 = vsel %vm4671, %v4669, 0
    %v4694 = vsel %vm4671, %v4670, 0
    %4696 = vmatpush.msra.mxu0 0.0
    %4697 = vmatpush.msra.mxu0 0.0
    %4698 = vmatpush.msra.mxu0 0.0
    %4699 = vmatpush.msra.mxu0 0.0
    %4700 = vmatpush.msra.mxu0 0.0
    %4701 = vmatpush.msra.mxu0 0.0
    %4702 = vmatpush.msra.mxu0 0.0
    %4703 = vmatpush.msra.mxu0 0.0
    %4704 = vmatpush.msra.mxu0 0.0
    %4705 = vmatpush.msra.mxu0 0.0
    %4706 = vmatpush.msra.mxu0 0.0
    %4707 = vmatpush.msra.mxu0 0.0
    %4708 = vmatpush.msra.mxu0 0.0
    %4709 = vmatpush.msra.mxu0 0.0
    %4710 = vmatpush.msra.mxu0 %v4660
    %4711 = vmatpush.msra.mxu0 %v4659
    %4712 = vmatmul.f32.gmra.mxu0 %v4673
    %v4713 = vpop.f32.mrf.mxu0
    %v4714 = vadd.f32 0.0, %v4713
    %4715 = vmatmul.f32.gmra.mxu0 %v4676
    %v4716 = vpop.f32.mrf.mxu0
    %v4717 = vadd.f32 0.0, %v4716
    %4718 = vmatmul.f32.gmra.mxu0 %v4679
    %v4719 = vpop.f32.mrf.mxu0
    %v4720 = vadd.f32 0.0, %v4719
    %4721 = vmatmul.f32.gmra.mxu0 %v4682
    %v4722 = vpop.f32.mrf.mxu0
    %v4723 = vadd.f32 0.0, %v4722
    %4724 = vmatmul.f32.gmra.mxu0 %v4685
    %v4725 = vpop.f32.mrf.mxu0
    %v4726 = vadd.f32 0.0, %v4725
    %4727 = vmatmul.f32.gmra.mxu0 %v4688
    %v4728 = vpop.f32.mrf.mxu0
    %v4729 = vadd.f32 0.0, %v4728
    %4730 = vmatmul.f32.gmra.mxu0 %v4691
    %v4731 = vpop.f32.mrf.mxu0
    %v4732 = vadd.f32 0.0, %v4731
    %4733 = vmatmul.f32.gmra.mxu0 %v4694
    %v4734 = vpop.f32.mrf.mxu0
    %v4735 = vadd.f32 0.0, %v4734
    %4736 = vdwg.mxu0
    %vm4737 = vcmask 519168
    %4738 = vst.msk [vmem:[#allocation4] sm:$0xf] %vm4737, %v4714
    %v4740 = vrot.slane %v4714, 4
    %4741 = vrot.lane.b32.xlu0 %v4740, 64
    %v4742 = vpop.permute.xlu0 %4741
    %vm4744 = vcmask 1043968
    %4745 = vst.msk [vmem:[#allocation4] sm:$0xf] %vm4744, %v4742
    %4746 = vst.msk [vmem:[#allocation4 + $0x8] sm:$0xf] %vm4737, %v4717
    %v4748 = vrot.slane %v4717, 4
    %4749 = vrot.lane.b32.xlu0 %v4748, 64
    %v4750 = vpop.permute.xlu0 %4749
    %4752 = vst.msk [vmem:[#allocation4 + $0x8] sm:$0xf] %vm4744, %v4750
    %4753 = vst.msk [vmem:[#allocation4 + $0x10] sm:$0xf] %vm4737, %v4720
    %v4755 = vrot.slane %v4720, 4
    %4756 = vrot.lane.b32.xlu0 %v4755, 64
    %v4757 = vpop.permute.xlu0 %4756
    %4759 = vst.msk [vmem:[#allocation4 + $0x10] sm:$0xf] %vm4744, %v4757
    %4760 = vst.msk [vmem:[#allocation4 + $0x18] sm:$0xf] %vm4737, %v4723
    %v4762 = vrot.slane %v4723, 4
    %4763 = vrot.lane.b32.xlu0 %v4762, 64
    %v4764 = vpop.permute.xlu0 %4763
    %4766 = vst.msk [vmem:[#allocation4 + $0x18] sm:$0xf] %vm4744, %v4764
    %4767 = vst.msk [vmem:[#allocation4 + $0x20] sm:$0xf] %vm4737, %v4726
    %v4769 = vrot.slane %v4726, 4
    %4770 = vrot.lane.b32.xlu0 %v4769, 64
    %v4771 = vpop.permute.xlu0 %4770
    %4773 = vst.msk [vmem:[#allocation4 + $0x20] sm:$0xf] %vm4744, %v4771
    %4774 = vst.msk [vmem:[#allocation4 + $0x28] sm:$0xf] %vm4737, %v4729
    %v4776 = vrot.slane %v4729, 4
    %4777 = vrot.lane.b32.xlu0 %v4776, 64
    %v4778 = vpop.permute.xlu0 %4777
    %4780 = vst.msk [vmem:[#allocation4 + $0x28] sm:$0xf] %vm4744, %v4778
    %4781 = vst.msk [vmem:[#allocation4 + $0x30] sm:$0xf] %vm4737, %v4732
    %v4783 = vrot.slane %v4732, 4
    %4784 = vrot.lane.b32.xlu0 %v4783, 64
    %v4785 = vpop.permute.xlu0 %4784
    %4787 = vst.msk [vmem:[#allocation4 + $0x30] sm:$0xf] %vm4744, %v4785
    %4788 = vst.msk [vmem:[#allocation4 + $0x38] sm:$0xf] %vm4737, %v4735
    %v4790 = vrot.slane %v4735, 4
    %4791 = vrot.lane.b32.xlu0 %v4790, 64
    %v4792 = vpop.permute.xlu0 %4791
    %4794 = vst.msk [vmem:[#allocation4 + $0x38] sm:$0xf] %vm4744, %v4792
    %v4795 = vld [vmem:[%s7] sm:$0xff]
    %v4796 = vld [vmem:[%s7 + $0x8] sm:$0xff]
    %v4797 = vld [vmem:[%s7 + $0x10] sm:$0xff]
    %v4798 = vld [vmem:[%s7 + $0x18] sm:$0xff]
    %v4799 = vld [vmem:[%s7 + $0x20] sm:$0xff]
    %v4800 = vld [vmem:[%s7 + $0x28] sm:$0xff]
    %v4801 = vld [vmem:[%s7 + $0x30] sm:$0xff]
    %v4802 = vld [vmem:[%s7 + $0x38] sm:$0xff]
    %v4804 = vsel %vm4671, %v4795, 0
    %v4807 = vsel %vm4671, %v4796, 0
    %v4810 = vsel %vm4671, %v4797, 0
    %v4813 = vsel %vm4671, %v4798, 0
    %v4816 = vsel %vm4671, %v4799, 0
    %v4819 = vsel %vm4671, %v4800, 0
    %v4822 = vsel %vm4671, %v4801, 0
    %v4825 = vsel %vm4671, %v4802, 0
    %4827 = vmatpush.msra.mxu0 0.0
    %4828 = vmatpush.msra.mxu0 0.0
    %4829 = vmatpush.msra.mxu0 0.0
    %4830 = vmatpush.msra.mxu0 0.0
    %4831 = vmatpush.msra.mxu0 0.0
    %4832 = vmatpush.msra.mxu0 0.0
    %4833 = vmatpush.msra.mxu0 0.0
    %4834 = vmatpush.msra.mxu0 0.0
    %4835 = vmatpush.msra.mxu0 0.0
    %4836 = vmatpush.msra.mxu0 0.0
    %4837 = vmatpush.msra.mxu0 0.0
    %4838 = vmatpush.msra.mxu0 0.0
    %4839 = vmatpush.msra.mxu0 0.0
    %4840 = vmatpush.msra.mxu0 0.0
    %4841 = vmatpush.msra.mxu0 %v4662
    %4842 = vmatpush.msra.mxu0 %v4661
    %4843 = vmatmul.f32.gmra.mxu0 %v4804
    %v4844 = vpop.f32.mrf.mxu0
    %v4845 = vadd.f32 0.0, %v4844
    %4846 = vmatmul.f32.gmra.mxu0 %v4807
    %v4847 = vpop.f32.mrf.mxu0
    %v4848 = vadd.f32 0.0, %v4847
    %4849 = vmatmul.f32.gmra.mxu0 %v4810
    %v4850 = vpop.f32.mrf.mxu0
    %v4851 = vadd.f32 0.0, %v4850
    %4852 = vmatmul.f32.gmra.mxu0 %v4813
    %v4853 = vpop.f32.mrf.mxu0
    %v4854 = vadd.f32 0.0, %v4853
    %4855 = vmatmul.f32.gmra.mxu0 %v4816
    %v4856 = vpop.f32.mrf.mxu0
    %v4857 = vadd.f32 0.0, %v4856
    %4858 = vmatmul.f32.gmra.mxu0 %v4819
    %v4859 = vpop.f32.mrf.mxu0
    %v4860 = vadd.f32 0.0, %v4859
    %4861 = vmatmul.f32.gmra.mxu0 %v4822
    %v4862 = vpop.f32.mrf.mxu0
    %v4863 = vadd.f32 0.0, %v4862
    %4864 = vmatmul.f32.gmra.mxu0 %v4825
    %v4865 = vpop.f32.mrf.mxu0
    %v4866 = vadd.f32 0.0, %v4865
    %4867 = vdwg.mxu0
    %v4869 = vrot.slane %v4845, 4
    %vm4871 = vcmask 523268
    %4872 = vst.msk [vmem:[#allocation4] sm:$0xf0] %vm4871, %v4869
    %4873 = vrot.lane.b32.xlu0 %v4845, 64
    %v4874 = vpop.permute.xlu0 %4873
    %vm4876 = vcmask 1048068
    %4877 = vst.msk [vmem:[#allocation4] sm:$0xf0] %vm4876, %v4874
    %v4879 = vrot.slane %v4848, 4
    %4881 = vst.msk [vmem:[#allocation4 + $0x8] sm:$0xf0] %vm4871, %v4879
    %4882 = vrot.lane.b32.xlu0 %v4848, 64
    %v4883 = vpop.permute.xlu0 %4882
    %4885 = vst.msk [vmem:[#allocation4 + $0x8] sm:$0xf0] %vm4876, %v4883
    %v4887 = vrot.slane %v4851, 4
    %4889 = vst.msk [vmem:[#allocation4 + $0x10] sm:$0xf0] %vm4871, %v4887
    %4890 = vrot.lane.b32.xlu0 %v4851, 64
    %v4891 = vpop.permute.xlu0 %4890
    %4893 = vst.msk [vmem:[#allocation4 + $0x10] sm:$0xf0] %vm4876, %v4891
    %v4895 = vrot.slane %v4854, 4
    %4897 = vst.msk [vmem:[#allocation4 + $0x18] sm:$0xf0] %vm4871, %v4895
    %4898 = vrot.lane.b32.xlu0 %v4854, 64
    %v4899 = vpop.permute.xlu0 %4898
    %4901 = vst.msk [vmem:[#allocation4 + $0x18] sm:$0xf0] %vm4876, %v4899
    %v4903 = vrot.slane %v4857, 4
    %4905 = vst.msk [vmem:[#allocation4 + $0x20] sm:$0xf0] %vm4871, %v4903
    %4906 = vrot.lane.b32.xlu0 %v4857, 64
    %v4907 = vpop.permute.xlu0 %4906
    %4909 = vst.msk [vmem:[#allocation4 + $0x20] sm:$0xf0] %vm4876, %v4907
    %v4911 = vrot.slane %v4860, 4
    %4913 = vst.msk [vmem:[#allocation4 + $0x28] sm:$0xf0] %vm4871, %v4911
    %4914 = vrot.lane.b32.xlu0 %v4860, 64
    %v4915 = vpop.permute.xlu0 %4914
    %4917 = vst.msk [vmem:[#allocation4 + $0x28] sm:$0xf0] %vm4876, %v4915
    %v4919 = vrot.slane %v4863, 4
    %4921 = vst.msk [vmem:[#allocation4 + $0x30] sm:$0xf0] %vm4871, %v4919
    %4922 = vrot.lane.b32.xlu0 %v4863, 64
    %v4923 = vpop.permute.xlu0 %4922
    %4925 = vst.msk [vmem:[#allocation4 + $0x30] sm:$0xf0] %vm4876, %v4923
    %v4927 = vrot.slane %v4866, 4
    %4929 = vst.msk [vmem:[#allocation4 + $0x38] sm:$0xf0] %vm4871, %v4927
    %4930 = vrot.lane.b32.xlu0 %v4866, 64
    %v4931 = vpop.permute.xlu0 %4930
    %4933 = vst.msk [vmem:[#allocation4 + $0x38] sm:$0xf0] %vm4876, %v4931
    %v4934 = vld [vmem:[#allocation4] sm:$0xff]
    %v4935 = vld [vmem:[#allocation4 + $0x8] sm:$0xff]
    %v4936 = vld [vmem:[#allocation4 + $0x10] sm:$0xff]
    %v4937 = vld [vmem:[#allocation4 + $0x18] sm:$0xff]
    %v4938 = vld [vmem:[#allocation4 + $0x20] sm:$0xff]
    %v4939 = vld [vmem:[#allocation4 + $0x28] sm:$0xff]
    %v4940 = vld [vmem:[#allocation4 + $0x30] sm:$0xff]
    %v4941 = vld [vmem:[#allocation4 + $0x38] sm:$0xff]
    %v4942 = vld [vmem:[%s8] sm:$0xff]
    %v4943 = vld [vmem:[%s8 + $0x8] sm:$0xff]
    %v4944 = vld [vmem:[%s8 + $0x10] sm:$0xff]
    %v4945 = vld [vmem:[%s8 + $0x18] sm:$0xff]
    %v4946 = vld [vmem:[%s8 + $0x20] sm:$0xff]
    %v4947 = vld [vmem:[%s8 + $0x28] sm:$0xff]
    %v4948 = vld [vmem:[%s8 + $0x30] sm:$0xff]
    %v4949 = vld [vmem:[%s8 + $0x38] sm:$0xff]
    %v4950 = vld [vmem:[%s8 + $0x40] sm:$0xff]
    %v4951 = vld [vmem:[%s8 + $0x48] sm:$0xff]
    %v4952 = vld [vmem:[%s8 + $0x50] sm:$0xff]
    %v4953 = vld [vmem:[%s8 + $0x58] sm:$0xff]
    %v4954 = vld [vmem:[%s8 + $0x60] sm:$0xff]
    %v4955 = vld [vmem:[%s8 + $0x68] sm:$0xff]
    %v4956 = vld [vmem:[%s8 + $0x70] sm:$0xff]
    %v4957 = vld [vmem:[%s8 + $0x78] sm:$0xff]
    %v4958 = vld [vmem:[%s8 + $0x80] sm:$0xff]
    %v4959 = vld [vmem:[%s8 + $0x88] sm:$0xff]
    %v4960 = vld [vmem:[%s8 + $0x90] sm:$0xff]
    %v4961 = vld [vmem:[%s8 + $0x98] sm:$0xff]
    %v4962 = vld [vmem:[%s8 + $0xa0] sm:$0xff]
    %v4963 = vld [vmem:[%s8 + $0xa8] sm:$0xff]
    %v4964 = vld [vmem:[%s8 + $0xb0] sm:$0xff]
    %v4965 = vld [vmem:[%s8 + $0xb8] sm:$0xff]
    %v4966 = vld [vmem:[%s8 + $0xc0] sm:$0xff]
    %v4967 = vld [vmem:[%s8 + $0xc8] sm:$0xff]
    %v4968 = vld [vmem:[%s8 + $0xd0] sm:$0xff]
    %v4969 = vld [vmem:[%s8 + $0xd8] sm:$0xff]
    %v4970 = vld [vmem:[%s8 + $0xe0] sm:$0xff]
    %v4971 = vld [vmem:[%s8 + $0xe8] sm:$0xff]
    %v4972 = vld [vmem:[%s8 + $0xf0] sm:$0xff]
    %v4973 = vld [vmem:[%s8 + $0xf8] sm:$0xff]
    %v4974 = vld [vmem:[%s8 + $0x100] sm:$0xff]
    %v4975 = vld [vmem:[%s8 + $0x108] sm:$0xff]
    %v4976 = vld [vmem:[%s8 + $0x110] sm:$0xff]
    %v4977 = vld [vmem:[%s8 + $0x118] sm:$0xff]
    %v4978 = vld [vmem:[%s8 + $0x120] sm:$0xff]
    %v4979 = vld [vmem:[%s8 + $0x128] sm:$0xff]
    %v4980 = vld [vmem:[%s8 + $0x130] sm:$0xff]
    %v4981 = vld [vmem:[%s8 + $0x138] sm:$0xff]
    %v4982 = vld [vmem:[%s8 + $0x140] sm:$0xff]
    %v4983 = vld [vmem:[%s8 + $0x148] sm:$0xff]
    %v4984 = vld [vmem:[%s8 + $0x150] sm:$0xff]
    %v4985 = vld [vmem:[%s8 + $0x158] sm:$0xff]
    %v4986 = vld [vmem:[%s8 + $0x160] sm:$0xff]
    %v4987 = vld [vmem:[%s8 + $0x168] sm:$0xff]
    %v4988 = vld [vmem:[%s8 + $0x170] sm:$0xff]
    %v4989 = vld [vmem:[%s8 + $0x178] sm:$0xff]
    %v4990 = vld [vmem:[%s8 + $0x180] sm:$0xff]
    %v4991 = vld [vmem:[%s8 + $0x188] sm:$0xff]
    %v4992 = vld [vmem:[%s8 + $0x190] sm:$0xff]
    %v4993 = vld [vmem:[%s8 + $0x198] sm:$0xff]
    %v4994 = vld [vmem:[%s8 + $0x1a0] sm:$0xff]
    %v4995 = vld [vmem:[%s8 + $0x1a8] sm:$0xff]
    %v4996 = vld [vmem:[%s8 + $0x1b0] sm:$0xff]
    %v4997 = vld [vmem:[%s8 + $0x1b8] sm:$0xff]
    %v4998 = vld [vmem:[%s8 + $0x1c0] sm:$0xff]
    %v4999 = vld [vmem:[%s8 + $0x1c8] sm:$0xff]
    %v5000 = vld [vmem:[%s8 + $0x1d0] sm:$0xff]
    %v5001 = vld [vmem:[%s8 + $0x1d8] sm:$0xff]
    %v5002 = vld [vmem:[%s8 + $0x1e0] sm:$0xff]
    %v5003 = vld [vmem:[%s8 + $0x1e8] sm:$0xff]
    %v5004 = vld [vmem:[%s8 + $0x1f0] sm:$0xff]
    %v5005 = vld [vmem:[%s8 + $0x1f8] sm:$0xff]
    %v5006 = vld [vmem:[%s8 + $0x200] sm:$0xff]
    %v5007 = vld [vmem:[%s8 + $0x208] sm:$0xff]
    %v5008 = vld [vmem:[%s8 + $0x210] sm:$0xff]
    %v5009 = vld [vmem:[%s8 + $0x218] sm:$0xff]
    %v5010 = vld [vmem:[%s8 + $0x220] sm:$0xff]
    %v5011 = vld [vmem:[%s8 + $0x228] sm:$0xff]
    %v5012 = vld [vmem:[%s8 + $0x230] sm:$0xff]
    %v5013 = vld [vmem:[%s8 + $0x238] sm:$0xff]
    %v5014 = vld [vmem:[%s8 + $0x240] sm:$0xff]
    %v5015 = vld [vmem:[%s8 + $0x248] sm:$0xff]
    %v5016 = vld [vmem:[%s8 + $0x250] sm:$0xff]
    %v5017 = vld [vmem:[%s8 + $0x258] sm:$0xff]
    %v5018 = vld [vmem:[%s8 + $0x260] sm:$0xff]
    %v5019 = vld [vmem:[%s8 + $0x268] sm:$0xff]
    %v5020 = vld [vmem:[%s8 + $0x270] sm:$0xff]
    %v5021 = vld [vmem:[%s8 + $0x278] sm:$0xff]
    %v5022 = vld [vmem:[%s8 + $0x280] sm:$0xff]
    %v5023 = vld [vmem:[%s8 + $0x288] sm:$0xff]
    %v5024 = vld [vmem:[%s8 + $0x290] sm:$0xff]
    %v5025 = vld [vmem:[%s8 + $0x298] sm:$0xff]
    %v5026 = vld [vmem:[%s8 + $0x2a0] sm:$0xff]
    %v5027 = vld [vmem:[%s8 + $0x2a8] sm:$0xff]
    %v5028 = vld [vmem:[%s8 + $0x2b0] sm:$0xff]
    %v5029 = vld [vmem:[%s8 + $0x2b8] sm:$0xff]
    %v5030 = vld [vmem:[%s8 + $0x2c0] sm:$0xff]
    %v5031 = vld [vmem:[%s8 + $0x2c8] sm:$0xff]
    %v5032 = vld [vmem:[%s8 + $0x2d0] sm:$0xff]
    %v5033 = vld [vmem:[%s8 + $0x2d8] sm:$0xff]
    %v5034 = vld [vmem:[%s8 + $0x2e0] sm:$0xff]
    %v5035 = vld [vmem:[%s8 + $0x2e8] sm:$0xff]
    %v5036 = vld [vmem:[%s8 + $0x2f0] sm:$0xff]
    %v5037 = vld [vmem:[%s8 + $0x2f8] sm:$0xff]
    %v5038 = vld [vmem:[%s8 + $0x300] sm:$0xff]
    %v5039 = vld [vmem:[%s8 + $0x308] sm:$0xff]
    %v5040 = vld [vmem:[%s8 + $0x310] sm:$0xff]
    %v5041 = vld [vmem:[%s8 + $0x318] sm:$0xff]
    %v5042 = vld [vmem:[%s8 + $0x320] sm:$0xff]
    %v5043 = vld [vmem:[%s8 + $0x328] sm:$0xff]
    %v5044 = vld [vmem:[%s8 + $0x330] sm:$0xff]
    %v5045 = vld [vmem:[%s8 + $0x338] sm:$0xff]
    %v5046 = vld [vmem:[%s8 + $0x340] sm:$0xff]
    %v5047 = vld [vmem:[%s8 + $0x348] sm:$0xff]
    %v5048 = vld [vmem:[%s8 + $0x350] sm:$0xff]
    %v5049 = vld [vmem:[%s8 + $0x358] sm:$0xff]
    %v5050 = vld [vmem:[%s8 + $0x360] sm:$0xff]
    %v5051 = vld [vmem:[%s8 + $0x368] sm:$0xff]
    %v5052 = vld [vmem:[%s8 + $0x370] sm:$0xff]
    %v5053 = vld [vmem:[%s8 + $0x378] sm:$0xff]
    %v5054 = vld [vmem:[%s8 + $0x380] sm:$0xff]
    %v5055 = vld [vmem:[%s8 + $0x388] sm:$0xff]
    %v5056 = vld [vmem:[%s8 + $0x390] sm:$0xff]
    %v5057 = vld [vmem:[%s8 + $0x398] sm:$0xff]
    %v5058 = vld [vmem:[%s8 + $0x3a0] sm:$0xff]
    %v5059 = vld [vmem:[%s8 + $0x3a8] sm:$0xff]
    %v5060 = vld [vmem:[%s8 + $0x3b0] sm:$0xff]
    %v5061 = vld [vmem:[%s8 + $0x3b8] sm:$0xff]
    %v5062 = vld [vmem:[%s8 + $0x3c0] sm:$0xff]
    %v5063 = vld [vmem:[%s8 + $0x3c8] sm:$0xff]
    %v5064 = vld [vmem:[%s8 + $0x3d0] sm:$0xff]
    %v5065 = vld [vmem:[%s8 + $0x3d8] sm:$0xff]
    %v5066 = vld [vmem:[%s8 + $0x3e0] sm:$0xff]
    %v5067 = vld [vmem:[%s8 + $0x3e8] sm:$0xff]
    %v5068 = vld [vmem:[%s8 + $0x3f0] sm:$0xff]
    %v5069 = vld [vmem:[%s8 + $0x3f8] sm:$0xff]
    %5070 = vmatpush.msra.mxu0 %v4957
    %5071 = vmatpush.msra.mxu0 %v4956
    %5072 = vmatpush.msra.mxu0 %v4955
    %5073 = vmatpush.msra.mxu0 %v4954
    %5074 = vmatpush.msra.mxu0 %v4953
    %5075 = vmatpush.msra.mxu0 %v4952
    %5076 = vmatpush.msra.mxu0 %v4951
    %5077 = vmatpush.msra.mxu0 %v4950
    %5078 = vmatpush.msra.mxu0 %v4949
    %5079 = vmatpush.msra.mxu0 %v4948
    %5080 = vmatpush.msra.mxu0 %v4947
    %5081 = vmatpush.msra.mxu0 %v4946
    %5082 = vmatpush.msra.mxu0 %v4945
    %5083 = vmatpush.msra.mxu0 %v4944
    %5084 = vmatpush.msra.mxu0 %v4943
    %5085 = vmatpush.msra.mxu0 %v4942
    %5086 = vmatmul.f32.gmra.mxu0 %v4934
    %v5087 = vpop.f32.mrf.mxu0
    %v5088 = vadd.f32 0.0, %v5087
    %5089 = vdwg.mxu0
    %5090 = vmatpush.msra.mxu0 %v4973
    %5091 = vmatpush.msra.mxu0 %v4972
    %5092 = vmatpush.msra.mxu0 %v4971
    %5093 = vmatpush.msra.mxu0 %v4970
    %5094 = vmatpush.msra.mxu0 %v4969
    %5095 = vmatpush.msra.mxu0 %v4968
    %5096 = vmatpush.msra.mxu0 %v4967
    %5097 = vmatpush.msra.mxu0 %v4966
    %5098 = vmatpush.msra.mxu0 %v4965
    %5099 = vmatpush.msra.mxu0 %v4964
    %5100 = vmatpush.msra.mxu0 %v4963
    %5101 = vmatpush.msra.mxu0 %v4962
    %5102 = vmatpush.msra.mxu0 %v4961
    %5103 = vmatpush.msra.mxu0 %v4960
    %5104 = vmatpush.msra.mxu0 %v4959
    %5105 = vmatpush.msra.mxu0 %v4958
    %5106 = vmatmul.f32.gmra.mxu0 %v4935
    %v5107 = vpop.f32.mrf.mxu0
    %v5108 = vadd.f32 %v5088, %v5107
    %5109 = vdwg.mxu0
    %5110 = vmatpush.msra.mxu0 %v4989
    %5111 = vmatpush.msra.mxu0 %v4988
    %5112 = vmatpush.msra.mxu0 %v4987
    %5113 = vmatpush.msra.mxu0 %v4986
    %5114 = vmatpush.msra.mxu0 %v4985
    %5115 = vmatpush.msra.mxu0 %v4984
    %5116 = vmatpush.msra.mxu0 %v4983
    %5117 = vmatpush.msra.mxu0 %v4982
    %5118 = vmatpush.msra.mxu0 %v4981
    %5119 = vmatpush.msra.mxu0 %v4980
    %5120 = vmatpush.msra.mxu0 %v4979
    %5121 = vmatpush.msra.mxu0 %v4978
    %5122 = vmatpush.msra.mxu0 %v4977
    %5123 = vmatpush.msra.mxu0 %v4976
    %5124 = vmatpush.msra.mxu0 %v4975
    %5125 = vmatpush.msra.mxu0 %v4974
    %5126 = vmatmul.f32.gmra.mxu0 %v4936
    %v5127 = vpop.f32.mrf.mxu0
    %v5128 = vadd.f32 %v5108, %v5127
    %5129 = vdwg.mxu0
    %5130 = vmatpush.msra.mxu0 %v5005
    %5131 = vmatpush.msra.mxu0 %v5004
    %5132 = vmatpush.msra.mxu0 %v5003
    %5133 = vmatpush.msra.mxu0 %v5002
    %5134 = vmatpush.msra.mxu0 %v5001
    %5135 = vmatpush.msra.mxu0 %v5000
    %5136 = vmatpush.msra.mxu0 %v4999
    %5137 = vmatpush.msra.mxu0 %v4998
    %5138 = vmatpush.msra.mxu0 %v4997
    %5139 = vmatpush.msra.mxu0 %v4996
    %5140 = vmatpush.msra.mxu0 %v4995
    %5141 = vmatpush.msra.mxu0 %v4994
    %5142 = vmatpush.msra.mxu0 %v4993
    %5143 = vmatpush.msra.mxu0 %v4992
    %5144 = vmatpush.msra.mxu0 %v4991
    %5145 = vmatpush.msra.mxu0 %v4990
    %5146 = vmatmul.f32.gmra.mxu0 %v4937
    %v5147 = vpop.f32.mrf.mxu0
    %v5148 = vadd.f32 %v5128, %v5147
    %5149 = vdwg.mxu0
    %5150 = vmatpush.msra.mxu0 %v5021
    %5151 = vmatpush.msra.mxu0 %v5020
    %5152 = vmatpush.msra.mxu0 %v5019
    %5153 = vmatpush.msra.mxu0 %v5018
    %5154 = vmatpush.msra.mxu0 %v5017
    %5155 = vmatpush.msra.mxu0 %v5016
    %5156 = vmatpush.msra.mxu0 %v5015
    %5157 = vmatpush.msra.mxu0 %v5014
    %5158 = vmatpush.msra.mxu0 %v5013
    %5159 = vmatpush.msra.mxu0 %v5012
    %5160 = vmatpush.msra.mxu0 %v5011
    %5161 = vmatpush.msra.mxu0 %v5010
    %5162 = vmatpush.msra.mxu0 %v5009
    %5163 = vmatpush.msra.mxu0 %v5008
    %5164 = vmatpush.msra.mxu0 %v5007
    %5165 = vmatpush.msra.mxu0 %v5006
    %5166 = vmatmul.f32.gmra.mxu0 %v4938
    %v5167 = vpop.f32.mrf.mxu0
    %v5168 = vadd.f32 %v5148, %v5167
    %5169 = vdwg.mxu0
    %5170 = vmatpush.msra.mxu0 %v5037
    %5171 = vmatpush.msra.mxu0 %v5036
    %5172 = vmatpush.msra.mxu0 %v5035
    %5173 = vmatpush.msra.mxu0 %v5034
    %5174 = vmatpush.msra.mxu0 %v5033
    %5175 = vmatpush.msra.mxu0 %v5032
    %5176 = vmatpush.msra.mxu0 %v5031
    %5177 = vmatpush.msra.mxu0 %v5030
    %5178 = vmatpush.msra.mxu0 %v5029
    %5179 = vmatpush.msra.mxu0 %v5028
    %5180 = vmatpush.msra.mxu0 %v5027
    %5181 = vmatpush.msra.mxu0 %v5026
    %5182 = vmatpush.msra.mxu0 %v5025
    %5183 = vmatpush.msra.mxu0 %v5024
    %5184 = vmatpush.msra.mxu0 %v5023
    %5185 = vmatpush.msra.mxu0 %v5022
    %5186 = vmatmul.f32.gmra.mxu0 %v4939
    %v5187 = vpop.f32.mrf.mxu0
    %v5188 = vadd.f32 %v5168, %v5187
    %5189 = vdwg.mxu0
    %5190 = vmatpush.msra.mxu0 %v5053
    %5191 = vmatpush.msra.mxu0 %v5052
    %5192 = vmatpush.msra.mxu0 %v5051
    %5193 = vmatpush.msra.mxu0 %v5050
    %5194 = vmatpush.msra.mxu0 %v5049
    %5195 = vmatpush.msra.mxu0 %v5048
    %5196 = vmatpush.msra.mxu0 %v5047
    %5197 = vmatpush.msra.mxu0 %v5046
    %5198 = vmatpush.msra.mxu0 %v5045
    %5199 = vmatpush.msra.mxu0 %v5044
    %5200 = vmatpush.msra.mxu0 %v5043
    %5201 = vmatpush.msra.mxu0 %v5042
    %5202 = vmatpush.msra.mxu0 %v5041
    %5203 = vmatpush.msra.mxu0 %v5040
    %5204 = vmatpush.msra.mxu0 %v5039
    %5205 = vmatpush.msra.mxu0 %v5038
    %5206 = vmatmul.f32.gmra.mxu0 %v4940
    %v5207 = vpop.f32.mrf.mxu0
    %v5208 = vadd.f32 %v5188, %v5207
    %5209 = vdwg.mxu0
    %5210 = vmatpush.msra.mxu0 %v5069
    %5211 = vmatpush.msra.mxu0 %v5068
    %5212 = vmatpush.msra.mxu0 %v5067
    %5213 = vmatpush.msra.mxu0 %v5066
    %5214 = vmatpush.msra.mxu0 %v5065
    %5215 = vmatpush.msra.mxu0 %v5064
    %5216 = vmatpush.msra.mxu0 %v5063
    %5217 = vmatpush.msra.mxu0 %v5062
    %5218 = vmatpush.msra.mxu0 %v5061
    %5219 = vmatpush.msra.mxu0 %v5060
    %5220 = vmatpush.msra.mxu0 %v5059
    %5221 = vmatpush.msra.mxu0 %v5058
    %5222 = vmatpush.msra.mxu0 %v5057
    %5223 = vmatpush.msra.mxu0 %v5056
    %5224 = vmatpush.msra.mxu0 %v5055
    %5225 = vmatpush.msra.mxu0 %v5054
    %5226 = vmatmul.f32.gmra.mxu0 %v4941
    %v5227 = vpop.f32.mrf.mxu0
    %v5228 = vadd.f32 %v5208, %v5227
    %5229 = vdwg.mxu0
    %v5230 = vld [vmem:[%s9] sm:$0x1]
    %v5231 = vld [vmem:[%s9 + $0x1] sm:$0x1]
    %v5232 = vrot.slane %v5228, 4
    %v5233 = vadd.f32 %v5228, %v5232
    %v5234 = vrot.slane %v5233, 2
    %v5235 = vadd.f32 %v5233, %v5234
    %v5236 = vrot.slane %v5235, 1
    %v5237 = vadd.f32 %v5235, %v5236
    %v5238 = vrcp.pop 8.0
    %v5239 = vmul.f32 8.0, %v5238
    %v5240 = vsub.f32 1.0, %v5239
    %v5241 = vmul.f32 %v5238, %v5240
    %v5242 = vadd.f32 %v5238, %v5241
    %vm5243 = vweird.f32 %v5238
    %v5244 = vsel %vm5243, %v5238, %v5242
    %v5245 = vmul.f32 %v5237, %v5244
    %v5246 = vsub.f32 %v5228, %v5245
    %v5247 = vmul.f32 %v5246, %v5246
    %v5248 = vrot.slane %v5247, 4
    %v5249 = vadd.f32 %v5247, %v5248
    %v5250 = vrot.slane %v5249, 2
    %v5251 = vadd.f32 %v5249, %v5250
    %v5252 = vrot.slane %v5251, 1
    %v5253 = vadd.f32 %v5251, %v5252
    %v5254 = vmul.f32 %v5253, %v5244
    %v5255 = vadd.f32 %v5254, 1e-05
    %v5256 = vrsqrt.pop %v5255
    %v5257 = vmul.f32 %v5256, %v5255
    %v5258 = vmul.f32 %v5257, %v5256
    %v5259 = vmul.f32 0.5, %v5258
    %v5260 = vsub.f32 1.5, %v5259
    %v5261 = vmul.f32 %v5256, %v5260
    %vm5262 = vweird.f32 %v5255
    %vm5263 = vweird.f32 %v5256
    %vm5264 = vmor %vm5262, %vm5263
    %v5265 = vsel %vm5264, %v5256, %v5261
    %v5266 = vmul.f32 %v5246, %v5265
    %v5267 = vperm.slane %v5230, 0
    %v5268 = vmul.f32 %v5266, %v5267
    %v5269 = vperm.slane %v5231, 0
    %v5270 = vadd.f32 %v5268, %v5269
    %v5271 = vmul.f32 %v5270, 0.2
    %v5272 = vmax.f32 %v5270, %v5271
    %v5273 = vld [vmem:[%s10] sm:$0xff]
    %v5274 = vmul.f32 %v5272, %v5273
    %v5275 = vld [vmem:[%s11] sm:$0x3]
    %vm5276 = vcmask 64512
    %v5278 = vsel %vm5276, %v5275, 0
    %5280 = vmatpush.msra.mxu0 0.0
    %5281 = vmatpush.msra.mxu0 0.0
    %5282 = vmatpush.msra.mxu0 0.0
    %5283 = vmatpush.msra.mxu0 0.0
    %5284 = vmatpush.msra.mxu0 0.0
    %5285 = vmatpush.msra.mxu0 0.0
    %5286 = vmatpush.msra.mxu0 0.0
    %5287 = vmatpush.msra.mxu0 0.0
    %5288 = vmatpush.msra.mxu0 0.0
    %5289 = vmatpush.msra.mxu0 0.0
    %5290 = vmatpush.msra.mxu0 0.0
    %5291 = vmatpush.msra.mxu0 0.0
    %5292 = vmatpush.msra.mxu0 0.0
    %5293 = vmatpush.msra.mxu0 0.0
    %5294 = vmatpush.msra.mxu0 0.0
    %5295 = vmatpush.msra.mxu0 %v5274
    %5296 = vmatmul.f32.gmra.mxu0 %v5278
    %v5297 = vpop.f32.mrf.mxu0
    %v5298 = vadd.f32 0.0, %v5297
    %5299 = vdwg.mxu0
    %vm5300 = vcmask 1041408
    %v5301 = vsel %vm5300, %v5298, 0.0
    %5302 = vadd.xlane.f32.xlu0 %v5301
    %v5303 = vpop.xlane.xlu0 %5302
    %v5304 = vld [vmem:[#allocation5] sm:$0x1]
    %v5306 = vperm.slane %v5304, 0
    %v5308 = vadd.f32 %v5303, %v5306
    %vm5309 = vcmask 1024
    %5310 = vst.msk [vmem:[%s13] sm:$0x3] %vm5309, %v5308
    // Predicated region
    $region58: #{st_discriminator_forward.1} parent=1 // pred_check
      _
    $region59: #{st_discriminator_forward.1} parent=1 // pred_check_branch
      %5312 = sbr.rel (0) target = $region61
    $region60: #{st_discriminator_forward.1} parent=1 // pred_region
      _
    $region61: #{st_discriminator_forward.1} parent=1 // pred_fallthru
      _
    // Predicated region
    $region62: #{st_discriminator_forward.1} parent=1 // pred_check
      _
    $region63: #{st_discriminator_forward.1} parent=1 // pred_check_branch
      %5314 = sbr.rel (0) target = $region65
    $region64: #{st_discriminator_forward.1} parent=1 // pred_region
      _
    $region65: #{st_discriminator_forward.1} parent=1 // pred_fallthru
      _
    %5315 = vsyncpa [#allocation7], 1

</llo_original>
